<compile_context>
chip_gen: v5e
topology: v5e:2x2
jax: 0.10.0
libtpu: 0.0.40
codegen_flags: <defaults>
</compile_context>

<pallas_src>
import functools
import math

import jax
import jax.numpy as jnp
from jax.experimental import pallas as pl
from jax.experimental.pallas import tpu as pltpu


@functools.lru_cache(maxsize=None)
def _vmem_limit():
    cap = 64 * 1024 * 1024
    try:
        cap = int(getattr(pltpu.get_tpu_info(), "vmem_capacity_bytes", cap))
    except Exception:
        pass
    return max(min(cap - 16 * 1024 * 1024, 112 * 1024 * 1024), 32 * 1024 * 1024)


def _pick_tile(total, target, align):
    """Largest tile <= target that divides `total` and is a multiple of `align`;
    falls back to the full axis (always a legal BlockSpec block)."""
    if total <= target:
        return total
    t = (target // align) * align
    while t >= align:
        if total % t == 0:
            return t
        t -= align
    return total


# ----------------------------------------------------------------------------
# Projections (bf16 matmuls, fp32 accumulation), output columns tiled.
# ----------------------------------------------------------------------------

def _linear_kernel(x_ref, w_ref, b_ref, o_ref):
    acc = jnp.dot(x_ref[...], w_ref[...], preferred_element_type=jnp.float32)
    o_ref[...] = (acc + b_ref[...]).astype(o_ref.dtype)


def linear(x, w, b, *, out_dtype=jnp.bfloat16, block_rows=512, block_cols=2048):
    """x: (N, Din) bf16, w: (Din, Dout) bf16, b: (Dout,) f32 -> (N, Dout)."""
    N, Din = x.shape
    Dout = w.shape[1]
    tm = _pick_tile(N, block_rows, 16)
    tn = _pick_tile(Dout, block_cols, 128)
    return pl.pallas_call(
        _linear_kernel,
        out_shape=jax.ShapeDtypeStruct((N, Dout), out_dtype),
        grid=(N // tm, Dout // tn),
        in_specs=[
            pl.BlockSpec((tm, Din), lambda i, j: (i, 0)),
            pl.BlockSpec((Din, tn), lambda i, j: (0, j)),
            pl.BlockSpec((1, tn), lambda i, j: (0, j)),
        ],
        out_specs=pl.BlockSpec((tm, tn), lambda i, j: (i, j)),
        compiler_params=pltpu.CompilerParams(
            dimension_semantics=("parallel", "parallel"),
            vmem_limit_bytes=_vmem_limit()),
    )(x, w, b.reshape(1, Dout))


def _kv_proj_kernel(m_ref, wk_ref, bk_ref, wv_ref, bv_ref, k_ref, v_ref):
    m = m_ref[...]
    k_ref[...] = (jnp.dot(m, wk_ref[...], preferred_element_type=jnp.float32)
                  + bk_ref[...]).astype(k_ref.dtype)
    v_ref[...] = (jnp.dot(m, wv_ref[...], preferred_element_type=jnp.float32)
                  + bv_ref[...]).astype(v_ref.dtype)


def kv_proj(m, wk, bk, wv, bv, *, out_dtype=jnp.bfloat16, block_rows=512,
            block_cols=2048):
    """Single pass over memory producing K and V projections (both (N, D))."""
    N, D = m.shape
    tm = _pick_tile(N, block_rows, 16)
    tn = _pick_tile(D, block_cols, 128)
    return pl.pallas_call(
        _kv_proj_kernel,
        out_shape=(jax.ShapeDtypeStruct((N, D), out_dtype),
                   jax.ShapeDtypeStruct((N, D), out_dtype)),
        grid=(N // tm, D // tn),
        in_specs=[
            pl.BlockSpec((tm, D), lambda i, j: (i, 0)),
            pl.BlockSpec((D, tn), lambda i, j: (0, j)),
            pl.BlockSpec((1, tn), lambda i, j: (0, j)),
            pl.BlockSpec((D, tn), lambda i, j: (0, j)),
            pl.BlockSpec((1, tn), lambda i, j: (0, j)),
        ],
        out_specs=[pl.BlockSpec((tm, tn), lambda i, j: (i, j)),
                   pl.BlockSpec((tm, tn), lambda i, j: (i, j))],
        compiler_params=pltpu.CompilerParams(
            dimension_semantics=("parallel", "parallel"),
            vmem_limit_bytes=_vmem_limit()),
    )(m, wk, bk.reshape(1, D), wv, bv.reshape(1, D))


# ----------------------------------------------------------------------------
# Cross-attention: all heads per (batch, q-block), online softmax over kv blocks,
# lane-dense (tq, D) fp32 accumulator (heads = lane slices), no concatenate.
# Softmax scale is pre-folded into the q projection.
# ----------------------------------------------------------------------------

def _attn_kernel(q_ref, k_ref, v_ref, o_ref, acc_ref, m_ref, l_ref, *,
                 n_head, softmax_in_bf16):
    ki = pl.program_id(2)
    dh = q_ref.shape[-1] // n_head

    @pl.when(ki == 0)
    def _():
        m_ref[...] = jnp.full_like(m_ref, -jnp.inf)
        l_ref[...] = jnp.zeros_like(l_ref)
        acc_ref[...] = jnp.zeros_like(acc_ref)

    for h in range(n_head):
        lo, hi = h * dh, (h + 1) * dh
        qh = q_ref[:, lo:hi]                       # (tq, dh)  bf16 (scale folded in)
        kh = k_ref[:, lo:hi]                       # (tkv, dh) bf16
        vh = v_ref[:, lo:hi]                       # (tkv, dh) bf16
        s = jax.lax.dot_general(
            qh, kh, (((1,), (1,)), ((), ())),
            preferred_element_type=jnp.float32)    # (tq, tkv) f32
        m_prev = m_ref[h]                          # (tq, 1)
        m_new = jnp.maximum(m_prev, jnp.max(s, axis=-1, keepdims=True))
        alpha = jnp.exp(m_prev - m_new)
        if softmax_in_bf16:
            # bf16 sub/exp (2x packed VPU/EUP on v6e/v7x); p born bf16 for the MXU.
            p = jnp.exp(s.astype(jnp.bfloat16) - m_new.astype(jnp.bfloat16))
            psum = jnp.sum(p, axis=-1, keepdims=True, dtype=jnp.float32)
        else:
            p32 = jnp.exp(s - m_new)
            psum = jnp.sum(p32, axis=-1, keepdims=True)
            p = p32.astype(jnp.bfloat16)
        l_ref[h] = alpha * l_ref[h] + psum
        acc_ref[:, lo:hi] = alpha * acc_ref[:, lo:hi] + jax.lax.dot_general(
            p, vh, (((1,), (0,)), ((), ())), preferred_element_type=jnp.float32)
        m_ref[h] = m_new

    @pl.when(ki == pl.num_programs(2) - 1)
    def _():
        for h in range(n_head):
            lo, hi = h * dh, (h + 1) * dh
            o_ref[:, lo:hi] = (
                acc_ref[:, lo:hi] *
                pl.reciprocal(l_ref[h], approx=True)).astype(o_ref.dtype)


def cross_attention(q, k, v, n_head, *, block_q=512, block_kv=1024,
                    softmax_in_bf16=True, out_dtype=jnp.bfloat16):
    """q: (B, Sq, D), k/v: (B, Skv, D), heads contiguous along D -> (B, Sq, D)."""
    B, Sq, D = q.shape
    _, Skv, _ = k.shape
    tq = _pick_tile(Sq, block_q, 16)
    tkv = _pick_tile(Skv, block_kv, 16)
    kernel = functools.partial(_attn_kernel, n_head=n_head,
                               softmax_in_bf16=softmax_in_bf16)
    return pl.pallas_call(
        kernel,
        out_shape=jax.ShapeDtypeStruct((B, Sq, D), out_dtype),
        grid=(B, Sq // tq, Skv // tkv),
        in_specs=[
            pl.BlockSpec((None, tq, D), lambda b, qi, ki: (b, qi, 0)),
            pl.BlockSpec((None, tkv, D), lambda b, qi, ki: (b, ki, 0)),
            pl.BlockSpec((None, tkv, D), lambda b, qi, ki: (b, ki, 0)),
        ],
        out_specs=pl.BlockSpec((None, tq, D), lambda b, qi, ki: (b, qi, 0)),
        scratch_shapes=[
            pltpu.VMEM((tq, D), jnp.float32),           # lane-dense accumulator
            pltpu.VMEM((n_head, tq, 1), jnp.float32),   # running max (per head)
            pltpu.VMEM((n_head, tq, 1), jnp.float32),   # running denom (per head)
        ],
        compiler_params=pltpu.CompilerParams(
            dimension_semantics=("parallel", "parallel", "arbitrary"),
            vmem_limit_bytes=_vmem_limit()),
    )(q, k, v)


# ----------------------------------------------------------------------------
# Fused epilogues (residual + LayerNorm in fp32, centered two-pass variance).
# ----------------------------------------------------------------------------

def _layernorm_write(z, g_ref, b_ref, o_ref, eps):
    d = z.shape[-1]
    mu = jnp.sum(z, axis=-1, keepdims=True) * (1.0 / d)
    zc = z - mu
    var = jnp.sum(zc * zc, axis=-1, keepdims=True) * (1.0 / d)
    o_ref[...] = (zc * jax.lax.rsqrt(var + eps) * g_ref[...]
                  + b_ref[...]).astype(o_ref.dtype)


def _out_ln_kernel(a_ref, x_ref, wo_ref, bo_ref, g_ref, b_ref, o_ref, acc_ref,
                   *, eps):
    kk = pl.program_id(1)

    @pl.when(kk == 0)
    def _():
        acc_ref[...] = jnp.zeros_like(acc_ref)

    acc_ref[...] += jnp.dot(a_ref[...], wo_ref[...],
                            preferred_element_type=jnp.float32)

    @pl.when(kk == pl.num_programs(1) - 1)
    def _():
        z = x_ref[...] + acc_ref[...] + bo_ref[...]
        _layernorm_write(z, g_ref, b_ref, o_ref, eps)


def out_proj_ln(a, x, wo, bo, g, b, *, eps=1e-5, block_rows=512, block_k=2048):
    """LN1(x + a @ wo + bo): a (N, D) bf16, x (N, D) f32 -> (N, D) f32.
    Contraction dim tiled + accumulated so wo never has to be fully resident."""
    N, D = x.shape
    tm = _pick_tile(N, block_rows, 16)
    tk = _pick_tile(D, block_k, 128)
    kernel = functools.partial(_out_ln_kernel, eps=eps)
    return pl.pallas_call(
        kernel,
        out_shape=jax.ShapeDtypeStruct((N, D), jnp.float32),
        grid=(N // tm, D // tk),
        in_specs=[
            pl.BlockSpec((tm, tk), lambda i, k: (i, k)),
            pl.BlockSpec((tm, D), lambda i, k: (i, 0)),
            pl.BlockSpec((tk, D), lambda i, k: (k, 0)),
            pl.BlockSpec((1, D), lambda i, k: (0, 0)),
            pl.BlockSpec((1, D), lambda i, k: (0, 0)),
            pl.BlockSpec((1, D), lambda i, k: (0, 0)),
        ],
        out_specs=pl.BlockSpec((tm, D), lambda i, k: (i, 0)),
        scratch_shapes=[pltpu.VMEM((tm, D), jnp.float32)],
        compiler_params=pltpu.CompilerParams(
            dimension_semantics=("parallel", "arbitrary"),
            vmem_limit_bytes=_vmem_limit()),
    )(a, x, wo, bo.reshape(1, D), g.reshape(1, D), b.reshape(1, D))


def _mlp_ln_kernel(x_ref, w1_ref, b1_ref, w2_ref, b2_ref, g_ref, bln_ref,
                   o_ref, acc_ref, xb_ref, *, eps):
    j = pl.program_id(1)

    @pl.when(j == 0)
    def _():
        acc_ref[...] = jnp.zeros_like(acc_ref)
        # Cache the bf16 cast of the row tile once per row tile (not per hidden tile).
        xb_ref[...] = x_ref[...].astype(xb_ref.dtype)

    h = jnp.dot(xb_ref[...], w1_ref[...],
                preferred_element_type=jnp.float32) + b1_ref[...]
    h = 0.5 * h * (1.0 + jax.lax.erf(h * 0.7071067811865476))   # exact GELU (nn.GELU)
    acc_ref[...] += jnp.dot(h.astype(jnp.bfloat16), w2_ref[...],
                            preferred_element_type=jnp.float32)

    @pl.when(j == pl.num_programs(1) - 1)
    def _():
        z = x_ref[...] + acc_ref[...] + b2_ref[...]
        _layernorm_write(z, g_ref, bln_ref, o_ref, eps)


def mlp_ln(x, w1, b1, w2, b2, g, b, *, eps=1e-5, block_rows=512,
           block_hidden=1024):
    """LN2(x + fc2(GELU(fc1(x)))): x (N, D) f32, hidden dim tiled + accumulated."""
    N, D = x.shape
    H = w1.shape[1]
    tm = _pick_tile(N, block_rows, 16)
    th = _pick_tile(H, block_hidden, 128)
    kernel = functools.partial(_mlp_ln_kernel, eps=eps)
    return pl.pallas_call(
        kernel,
        out_shape=jax.ShapeDtypeStruct((N, D), jnp.float32),
        grid=(N // tm, H // th),
        in_specs=[
            pl.BlockSpec((tm, D), lambda i, j: (i, 0)),
            pl.BlockSpec((D, th), lambda i, j: (0, j)),
            pl.BlockSpec((1, th), lambda i, j: (0, j)),
            pl.BlockSpec((th, D), lambda i, j: (j, 0)),
            pl.BlockSpec((1, D), lambda i, j: (0, 0)),
            pl.BlockSpec((1, D), lambda i, j: (0, 0)),
            pl.BlockSpec((1, D), lambda i, j: (0, 0)),
        ],
        out_specs=pl.BlockSpec((tm, D), lambda i, j: (i, 0)),
        scratch_shapes=[pltpu.VMEM((tm, D), jnp.float32),
                        pltpu.VMEM((tm, D), jnp.bfloat16)],
        compiler_params=pltpu.CompilerParams(
            dimension_semantics=("parallel", "arbitrary"),
            vmem_limit_bytes=_vmem_limit()),
    )(x, w1, b1.reshape(1, H), w2, b2.reshape(1, D), g.reshape(1, D),
      b.reshape(1, D))


# ----------------------------------------------------------------------------
# Module wrapper: FlashCrossAttnLayer.forward (norm_first=False)
#   x = ln_1(x + attn(x, x_kv=memory))
#   x = ln_2(x + mlp(x))
# ----------------------------------------------------------------------------

def flash_cross_attn_layer(x, memory, params, n_head, *, block_rows=512,
                           block_cols=2048, block_q=512, block_kv=1024,
                           block_hidden=1024, block_k=2048,
                           softmax_in_bf16=True, eps=1e-5):
    B, Sq, D = x.shape
    _, Skv, _ = memory.shape
    assert D % n_head == 0
    dh = D // n_head
    scale = 1.0 / math.sqrt(dh)   # FlashMHA default softmax_scale

    bf16 = jnp.bfloat16
    x2 = x.reshape(B * Sq, D).astype(jnp.float32)       # residual stream (fp32)
    x2_bf = x2.astype(bf16)
    m2_bf = memory.reshape(B * Skv, D).astype(bf16)

    # bf16 at the kernel boundary (autocast analogue); biases / LN params stay fp32.
    # Softmax scale folded into the q projection (exact: (xWq+bq)*scale == x(Wq*s)+bq*s).
    wq = (params["wq"] * scale).astype(bf16)
    bq = params["bq"] * scale
    wk = params["wk"].astype(bf16)
    wv = params["wv"].astype(bf16)
    wo = params["wo"].astype(bf16)
    w1 = params["w1"].astype(bf16)
    w2 = params["w2"].astype(bf16)

    # --- FlashMHA projections (heads contiguous along D, no transposes needed) ---
    q = linear(x2_bf, wq, bq, block_rows=block_rows,
               block_cols=block_cols)                                   # (B*Sq, D) bf16
    k, v = kv_proj(m2_bf, wk, params["bk"], wv, params["bv"],
                   block_rows=block_rows, block_cols=block_cols)        # (B*Skv, D) bf16

    # --- flash cross-attention (online softmax over Skv, lane-dense output) ---
    ao = cross_attention(q.reshape(B, Sq, D), k.reshape(B, Skv, D),
                         v.reshape(B, Skv, D), n_head,
                         block_q=block_q, block_kv=block_kv,
                         softmax_in_bf16=softmax_in_bf16)               # (B, Sq, D) bf16

    # --- out_proj + residual + LayerNormFp32 (fused, contraction-tiled) ---
    h1 = out_proj_ln(ao.reshape(B * Sq, D), x2, wo, params["bo"],
                     params["ln1_g"], params["ln1_b"], eps=eps,
                     block_rows=block_rows, block_k=block_k)            # (B*Sq, D) f32

    # --- fc1 + GELU + fc2 + residual + LayerNormFp32 (fused, hidden-tiled) ---
    out = mlp_ln(h1, w1, params["b1"], w2, params["b2"],
                 params["ln2_g"], params["ln2_b"], eps=eps,
                 block_rows=block_rows, block_hidden=block_hidden)      # (B*Sq, D) f32
    return out.reshape(B, Sq, D)


def init_params(key, d_model, n_head, mlp_ratio=4.0):
    mlp_width = int(d_model * mlp_ratio)
    ks = jax.random.split(key, 12)
    std = 0.02

    def w(k, shape):
        return (std * jax.random.normal(k, shape)).astype(jnp.float32)

    return {
        "wq": w(ks[0], (d_model, d_model)), "bq": w(ks[1], (d_model,)),
        "wk": w(ks[2], (d_model, d_model)), "bk": w(ks[3], (d_model,)),
        "wv": w(ks[4], (d_model, d_model)), "bv": w(ks[5], (d_model,)),
        "wo": w(ks[6], (d_model, d_model)), "bo": w(ks[7], (d_model,)),
        "ln1_g": jnp.ones((d_model,), jnp.float32),
        "ln1_b": jnp.zeros((d_model,), jnp.float32),
        "ln2_g": jnp.ones((d_model,), jnp.float32),
        "ln2_b": jnp.zeros((d_model,), jnp.float32),
        "w1": w(ks[8], (d_model, mlp_width)), "b1": w(ks[9], (mlp_width,)),
        "w2": w(ks[10], (mlp_width, d_model)), "b2": w(ks[11], (d_model,)),
    }


# ----------------------------------------------------------------------------
# Pure-JAX reference (fp32) for a loose numerical check.
# ----------------------------------------------------------------------------

def _layer_norm_ref(x, g, b, eps):
    mu = jnp.mean(x, axis=-1, keepdims=True)
    var = jnp.mean((x - mu) ** 2, axis=-1, keepdims=True)
    return (x - mu) * jax.lax.rsqrt(var + eps) * g + b


def reference_forward(x, memory, params, n_head, eps=1e-5):
    B, Sq, D = x.shape
    _, Skv, _ = memory.shape
    dh = D // n_head
    scale = 1.0 / math.sqrt(dh)
    q = x @ params["wq"] + params["bq"]
    k = memory @ params["wk"] + params["bk"]
    v = memory @ params["wv"] + params["bv"]
    qh = q.reshape(B, Sq, n_head, dh)
    kh = k.reshape(B, Skv, n_head, dh)
    vh = v.reshape(B, Skv, n_head, dh)
    s = jnp.einsum("bqhd,bkhd->bhqk", qh, kh) * scale
    p = jax.nn.softmax(s, axis=-1)
    o = jnp.einsum("bhqk,bkhd->bqhd", p, vh).reshape(B, Sq, D)
    o = o @ params["wo"] + params["bo"]
    h1 = _layer_norm_ref(x + o, params["ln1_g"], params["ln1_b"], eps)
    t = jax.nn.gelu(h1 @ params["w1"] + params["b1"], approximate=False)
    m = t @ params["w2"] + params["b2"]
    return _layer_norm_ref(h1 + m, params["ln2_g"], params["ln2_b"], eps)


if __name__ == "__main__":
    B, Sq, Skv = 2, 8, 32
    d_model, n_head = 32, 4

    key = jax.random.PRNGKey(0)
    kx, km, kp = jax.random.split(key, 3)
    x = jax.random.normal(kx, (B, Sq, d_model), dtype=jnp.float32)
    memory = jax.random.normal(km, (B, Skv, d_model), dtype=jnp.float32)
    params = init_params(kp, d_model, n_head, mlp_ratio=8.0)

    # block_kv=16 -> two kv blocks (exercises the online-softmax accumulation path);
    # block_hidden=128 -> two hidden tiles (exercises MLP accumulator + cached bf16 cast).
    fwd = jax.jit(functools.partial(flash_cross_attn_layer, n_head=n_head,
                                    block_kv=16, block_hidden=128))
    out = jax.block_until_ready(fwd(x, memory, params))

    assert out.shape == (B, Sq, d_model)
    assert bool(jnp.all(jnp.isfinite(out)))

    ref = reference_forward(x, memory, params, n_head)
    err = float(jnp.max(jnp.abs(out - ref)))
    assert err < 5e-2, f"max abs err vs reference too large: {err}"

    print("KERNEL_OK")
</pallas_src>

<mosaic_0001>
module attributes {stable_mosaic.version = 11 : i64} {
  func.func @_kv_proj_kernel(%arg0: i32, %arg1: i32, %arg2: memref<64x32xbf16, #tpu.memory_space<vmem>>, %arg3: memref<32x32xbf16, #tpu.memory_space<vmem>>, %arg4: memref<1x32xf32, #tpu.memory_space<vmem>>, %arg5: memref<32x32xbf16, #tpu.memory_space<vmem>>, %arg6: memref<1x32xf32, #tpu.memory_space<vmem>>, %arg7: memref<64x32xbf16, #tpu.memory_space<vmem>>, %arg8: memref<64x32xbf16, #tpu.memory_space<vmem>>) attributes {dimension_semantics = [#tpu.dimension_semantics<parallel>, #tpu.dimension_semantics<parallel>], iteration_bounds = array<i64: 1, 1>, scalar_prefetch = 0 : i64, scratch_operands = 0 : i64, tpu.core_type = #tpu.core_type<tc>, window_params = [{transform_indices = @transform_0, window_bounds = array<i64: 64, 32>}, {transform_indices = @transform_1, window_bounds = array<i64: 32, 32>}, {transform_indices = @transform_2, window_bounds = array<i64: 1, 32>}, {transform_indices = @transform_3, window_bounds = array<i64: 32, 32>}, {transform_indices = @transform_4, window_bounds = array<i64: 1, 32>}, {transform_indices = @transform_5, window_bounds = array<i64: 64, 32>}, {transform_indices = @transform_6, window_bounds = array<i64: 64, 32>}]} {
    %c0 = arith.constant 0 : index
    %c0_0 = arith.constant 0 : index
    %0 = vector.load %arg2[%c0, %c0_0] : memref<64x32xbf16, #tpu.memory_space<vmem>>, vector<64x32xbf16>
    %c0_1 = arith.constant 0 : index
    %c0_2 = arith.constant 0 : index
    %1 = vector.load %arg3[%c0_1, %c0_2] : memref<32x32xbf16, #tpu.memory_space<vmem>>, vector<32x32xbf16>
    %cst = arith.constant dense<0.000000e+00> : vector<64x32xf32>
    %2 = tpu.matmul %0, %1, %cst {dimension_numbers = #tpu.dot_dimension_numbers<[1], [0], [0], [1], [0, 0, 1, 1], [], []>} : vector<64x32xbf16>, vector<32x32xbf16>, vector<64x32xf32> -> vector<64x32xf32>
    %c0_3 = arith.constant 0 : index
    %c0_4 = arith.constant 0 : index
    %3 = vector.load %arg4[%c0_3, %c0_4] : memref<1x32xf32, #tpu.memory_space<vmem>>, vector<1x32xf32>
    %4 = vector.broadcast %3 : vector<1x32xf32> to vector<64x32xf32>
    %5 = arith.addf %2, %4 : vector<64x32xf32>
    %6 = arith.truncf %5 : vector<64x32xf32> to vector<64x32xbf16>
    %c0_5 = arith.constant 0 : index
    %c0_6 = arith.constant 0 : index
    %7 = vector.load %arg7[%c0_5, %c0_6] : memref<64x32xbf16, #tpu.memory_space<vmem>>, vector<64x32xbf16>
    tpu.vector_store %arg7[%c0_5, %c0_6], %6 {strides = array<i32>} : memref<64x32xbf16, #tpu.memory_space<vmem>>, vector<64x32xbf16>,
    %c0_7 = arith.constant 0 : index
    %c0_8 = arith.constant 0 : index
    %8 = vector.load %arg5[%c0_7, %c0_8] : memref<32x32xbf16, #tpu.memory_space<vmem>>, vector<32x32xbf16>
    %cst_9 = arith.constant dense<0.000000e+00> : vector<64x32xf32>
    %9 = tpu.matmul %0, %8, %cst_9 {dimension_numbers = #tpu.dot_dimension_numbers<[1], [0], [0], [1], [0, 0, 1, 1], [], []>} : vector<64x32xbf16>, vector<32x32xbf16>, vector<64x32xf32> -> vector<64x32xf32>
    %c0_10 = arith.constant 0 : index
    %c0_11 = arith.constant 0 : index
    %10 = vector.load %arg6[%c0_10, %c0_11] : memref<1x32xf32, #tpu.memory_space<vmem>>, vector<1x32xf32>
    %11 = vector.broadcast %10 : vector<1x32xf32> to vector<64x32xf32>
    %12 = arith.addf %9, %11 : vector<64x32xf32>
    %13 = arith.truncf %12 : vector<64x32xf32> to vector<64x32xbf16>
    %c0_12 = arith.constant 0 : index
    %c0_13 = arith.constant 0 : index
    %14 = vector.load %arg8[%c0_12, %c0_13] : memref<64x32xbf16, #tpu.memory_space<vmem>>, vector<64x32xbf16>
    tpu.vector_store %arg8[%c0_12, %c0_13], %13 {strides = array<i32>} : memref<64x32xbf16, #tpu.memory_space<vmem>>, vector<64x32xbf16>,
    return
  }
  func.func @transform_0(%arg0: i32, %arg1: i32) -> (i32, i32) {
    %c0_i32 = arith.constant 0 : i32
    %c0_i32_0 = arith.constant 0 : i32
    return %arg0, %c0_i32 : i32, i32
  }
  func.func @transform_1(%arg0: i32, %arg1: i32) -> (i32, i32) {
    %c0_i32 = arith.constant 0 : i32
    %c0_i32_0 = arith.constant 0 : i32
    return %c0_i32, %arg1 : i32, i32
  }
  func.func @transform_2(%arg0: i32, %arg1: i32) -> (i32, i32) {
    %c0_i32 = arith.constant 0 : i32
    %c0_i32_0 = arith.constant 0 : i32
    return %c0_i32, %arg1 : i32, i32
  }
  func.func @transform_3(%arg0: i32, %arg1: i32) -> (i32, i32) {
    %c0_i32 = arith.constant 0 : i32
    %c0_i32_0 = arith.constant 0 : i32
    return %c0_i32, %arg1 : i32, i32
  }
  func.func @transform_4(%arg0: i32, %arg1: i32) -> (i32, i32) {
    %c0_i32 = arith.constant 0 : i32
    %c0_i32_0 = arith.constant 0 : i32
    return %c0_i32, %arg1 : i32, i32
  }
  func.func @transform_5(%arg0: i32, %arg1: i32) -> (i32, i32) {
    %c0_i32 = arith.constant 0 : i32
    return %arg0, %arg1 : i32, i32
  }
  func.func @transform_6(%arg0: i32, %arg1: i32) -> (i32, i32) {
    %c0_i32 = arith.constant 0 : i32
    return %arg0, %arg1 : i32, i32
  }
}

module attributes {stable_mosaic.version = 11 : i64} {
  func.func @_linear_kernel(%arg0: i32, %arg1: i32, %arg2: memref<16x32xbf16, #tpu.memory_space<vmem>>, %arg3: memref<32x32xbf16, #tpu.memory_space<vmem>>, %arg4: memref<1x32xf32, #tpu.memory_space<vmem>>, %arg5: memref<16x32xbf16, #tpu.memory_space<vmem>>) attributes {dimension_semantics = [#tpu.dimension_semantics<parallel>, #tpu.dimension_semantics<parallel>], iteration_bounds = array<i64: 1, 1>, scalar_prefetch = 0 : i64, scratch_operands = 0 : i64, tpu.core_type = #tpu.core_type<tc>, window_params = [{transform_indices = @transform_0, window_bounds = array<i64: 16, 32>}, {transform_indices = @transform_1, window_bounds = array<i64: 32, 32>}, {transform_indices = @transform_2, window_bounds = array<i64: 1, 32>}, {transform_indices = @transform_3, window_bounds = array<i64: 16, 32>}]} {
    %c0 = arith.constant 0 : index
    %c0_0 = arith.constant 0 : index
    %0 = vector.load %arg2[%c0, %c0_0] : memref<16x32xbf16, #tpu.memory_space<vmem>>, vector<16x32xbf16>
    %c0_1 = arith.constant 0 : index
    %c0_2 = arith.constant 0 : index
    %1 = vector.load %arg3[%c0_1, %c0_2] : memref<32x32xbf16, #tpu.memory_space<vmem>>, vector<32x32xbf16>
    %cst = arith.constant dense<0.000000e+00> : vector<16x32xf32>
    %2 = tpu.matmul %0, %1, %cst {dimension_numbers = #tpu.dot_dimension_numbers<[1], [0], [0], [1], [0, 0, 1, 1], [], []>} : vector<16x32xbf16>, vector<32x32xbf16>, vector<16x32xf32> -> vector<16x32xf32>
    %c0_3 = arith.constant 0 : index
    %c0_4 = arith.constant 0 : index
    %3 = vector.load %arg4[%c0_3, %c0_4] : memref<1x32xf32, #tpu.memory_space<vmem>>, vector<1x32xf32>
    %4 = vector.broadcast %3 : vector<1x32xf32> to vector<16x32xf32>
    %5 = arith.addf %2, %4 : vector<16x32xf32>
    %6 = arith.truncf %5 : vector<16x32xf32> to vector<16x32xbf16>
    %c0_5 = arith.constant 0 : index
    %c0_6 = arith.constant 0 : index
    %7 = vector.load %arg5[%c0_5, %c0_6] : memref<16x32xbf16, #tpu.memory_space<vmem>>, vector<16x32xbf16>
    tpu.vector_store %arg5[%c0_5, %c0_6], %6 {strides = array<i32>} : memref<16x32xbf16, #tpu.memory_space<vmem>>, vector<16x32xbf16>,
    return
  }
  func.func @transform_0(%arg0: i32, %arg1: i32) -> (i32, i32) {
    %c0_i32 = arith.constant 0 : i32
    %c0_i32_0 = arith.constant 0 : i32
    return %arg0, %c0_i32 : i32, i32
  }
  func.func @transform_1(%arg0: i32, %arg1: i32) -> (i32, i32) {
    %c0_i32 = arith.constant 0 : i32
    %c0_i32_0 = arith.constant 0 : i32
    return %c0_i32, %arg1 : i32, i32
  }
  func.func @transform_2(%arg0: i32, %arg1: i32) -> (i32, i32) {
    %c0_i32 = arith.constant 0 : i32
    %c0_i32_0 = arith.constant 0 : i32
    return %c0_i32, %arg1 : i32, i32
  }
  func.func @transform_3(%arg0: i32, %arg1: i32) -> (i32, i32) {
    %c0_i32 = arith.constant 0 : i32
    return %arg0, %arg1 : i32, i32
  }
}

module attributes {stable_mosaic.version = 11 : i64} {
  func.func @_attn_kernel(%arg0: i32, %arg1: i32, %arg2: i32, %arg3: memref<1x8x32xbf16, #tpu.memory_space<vmem>>, %arg4: memref<1x16x32xbf16, #tpu.memory_space<vmem>>, %arg5: memref<1x16x32xbf16, #tpu.memory_space<vmem>>, %arg6: memref<1x8x32xbf16, #tpu.memory_space<vmem>>, %arg7: memref<8x32xf32, #tpu.memory_space<vmem>>, %arg8: memref<4x8x1xf32, #tpu.memory_space<vmem>>, %arg9: memref<4x8x1xf32, #tpu.memory_space<vmem>>) attributes {dimension_semantics = [#tpu.dimension_semantics<parallel>, #tpu.dimension_semantics<parallel>, #tpu.dimension_semantics<arbitrary>], iteration_bounds = array<i64: 2, 1, 2>, scalar_prefetch = 0 : i64, scratch_operands = 3 : i64, tpu.core_type = #tpu.core_type<tc>, window_params = [{transform_indices = @transform_0, window_bounds = array<i64: 1, 8, 32>}, {transform_indices = @transform_1, window_bounds = array<i64: 1, 16, 32>}, {transform_indices = @transform_2, window_bounds = array<i64: 1, 16, 32>}, {transform_indices = @transform_3, window_bounds = array<i64: 1, 8, 32>}]} {
    %c0_i32 = arith.constant 0 : i32
    %0 = arith.cmpi eq, %arg2, %c0_i32 : i32
    %1 = arith.extui %0 : i1 to i32
    %c0_i32_0 = arith.constant 0 : i32
    %2 = arith.cmpi ne, %1, %c0_i32_0 : i32
    scf.if %2 {
      %cst_110 = arith.constant 0xFF800000 : f32
      %158 = vector.broadcast %cst_110 : f32 to vector<4x8x1xf32>
      %c0_111 = arith.constant 0 : index
      %c0_112 = arith.constant 0 : index
      %c0_113 = arith.constant 0 : index
      %159 = vector.load %arg8[%c0_111, %c0_112, %c0_113] : memref<4x8x1xf32, #tpu.memory_space<vmem>>, vector<4x8x1xf32>
      tpu.vector_store %arg8[%c0_111, %c0_112, %c0_113], %158 {strides = array<i32>} : memref<4x8x1xf32, #tpu.memory_space<vmem>>, vector<4x8x1xf32>,
      %cst_114 = arith.constant 0.000000e+00 : f32
      %160 = vector.broadcast %cst_114 : f32 to vector<4x8x1xf32>
      %c0_115 = arith.constant 0 : index
      %c0_116 = arith.constant 0 : index
      %c0_117 = arith.constant 0 : index
      %161 = vector.load %arg9[%c0_115, %c0_116, %c0_117] : memref<4x8x1xf32, #tpu.memory_space<vmem>>, vector<4x8x1xf32>
      tpu.vector_store %arg9[%c0_115, %c0_116, %c0_117], %160 {strides = array<i32>} : memref<4x8x1xf32, #tpu.memory_space<vmem>>, vector<4x8x1xf32>,
      %cst_118 = arith.constant 0.000000e+00 : f32
      %162 = vector.broadcast %cst_118 : f32 to vector<8x32xf32>
      %c0_119 = arith.constant 0 : index
      %c0_120 = arith.constant 0 : index
      %163 = vector.load %arg7[%c0_119, %c0_120] : memref<8x32xf32, #tpu.memory_space<vmem>>, vector<8x32xf32>
      tpu.vector_store %arg7[%c0_119, %c0_120], %162 {strides = array<i32>} : memref<8x32xf32, #tpu.memory_space<vmem>>, vector<8x32xf32>,
    } else {
    }
    %c0 = arith.constant 0 : index
    %c0_1 = arith.constant 0 : index
    %c0_2 = arith.constant 0 : index
    %3 = vector.load %arg3[%c0, %c0_1, %c0_2] : memref<1x8x32xbf16, #tpu.memory_space<vmem>>, vector<1x8x8xbf16>
    %4 = vector.shape_cast %3 : vector<1x8x8xbf16> to vector<8x8xbf16>
    %c0_3 = arith.constant 0 : index
    %c0_4 = arith.constant 0 : index
    %c0_5 = arith.constant 0 : index
    %5 = vector.load %arg4[%c0_3, %c0_4, %c0_5] : memref<1x16x32xbf16, #tpu.memory_space<vmem>>, vector<1x16x8xbf16>
    %6 = vector.shape_cast %5 : vector<1x16x8xbf16> to vector<16x8xbf16>
    %c0_6 = arith.constant 0 : index
    %c0_7 = arith.constant 0 : index
    %c0_8 = arith.constant 0 : index
    %7 = vector.load %arg5[%c0_6, %c0_7, %c0_8] : memref<1x16x32xbf16, #tpu.memory_space<vmem>>, vector<1x16x8xbf16>
    %8 = vector.shape_cast %7 : vector<1x16x8xbf16> to vector<16x8xbf16>
    %cst = arith.constant dense<0.000000e+00> : vector<8x16xf32>
    %9 = tpu.matmul %4, %6, %cst {dimension_numbers = #tpu.dot_dimension_numbers<[1], [1], [0], [0], [0, 0, 1, 0], [], []>} : vector<8x8xbf16>, vector<16x8xbf16>, vector<8x16xf32> -> vector<8x16xf32>
    %c0_9 = arith.constant 0 : index
    %c0_10 = arith.constant 0 : index
    %c0_11 = arith.constant 0 : index
    %10 = vector.load %arg8[%c0_9, %c0_10, %c0_11] : memref<4x8x1xf32, #tpu.memory_space<vmem>>, vector<1x8x1xf32>
    %11 = vector.shape_cast %10 : vector<1x8x1xf32> to vector<8x1xf32>
    %cst_12 = arith.constant dense<0xFF800000> : vector<8xf32>
    %12 = vector.multi_reduction <maximumf>, %9, %cst_12 [1] : vector<8x16xf32> to vector<8xf32>
    %13 = vector.shape_cast %12 : vector<8xf32> to vector<8x1xf32>
    %14 = arith.maximumf %11, %13 : vector<8x1xf32>
    %15 = arith.subf %11, %14 : vector<8x1xf32>
    %16 = math.exp %15 : vector<8x1xf32>
    %17 = arith.truncf %9 : vector<8x16xf32> to vector<8x16xbf16>
    %18 = arith.truncf %14 : vector<8x1xf32> to vector<8x1xbf16>
    %19 = vector.broadcast %18 : vector<8x1xbf16> to vector<8x16xbf16>
    %20 = arith.subf %17, %19 : vector<8x16xbf16>
    %21 = math.exp %20 : vector<8x16xbf16>
    %22 = arith.extf %21 : vector<8x16xbf16> to vector<8x16xf32>
    %cst_13 = arith.constant dense<0.000000e+00> : vector<8xf32>
    %23 = vector.multi_reduction <add>, %22, %cst_13 [1] : vector<8x16xf32> to vector<8xf32>
    %24 = vector.shape_cast %23 : vector<8xf32> to vector<8x1xf32>
    %c0_14 = arith.constant 0 : index
    %c0_15 = arith.constant 0 : index
    %c0_16 = arith.constant 0 : index
    %25 = vector.load %arg9[%c0_14, %c0_15, %c0_16] : memref<4x8x1xf32, #tpu.memory_space<vmem>>, vector<1x8x1xf32>
    %26 = vector.shape_cast %25 : vector<1x8x1xf32> to vector<8x1xf32>
    %27 = arith.mulf %16, %26 : vector<8x1xf32>
    %28 = arith.addf %27, %24 : vector<8x1xf32>
    %c0_17 = arith.constant 0 : index
    %c0_18 = arith.constant 0 : index
    %c0_19 = arith.constant 0 : index
    %29 = vector.load %arg9[%c0_17, %c0_18, %c0_19] : memref<4x8x1xf32, #tpu.memory_space<vmem>>, vector<1x8x1xf32>
    %30 = vector.shape_cast %29 : vector<1x8x1xf32> to vector<8x1xf32>
    %31 = vector.shape_cast %28 : vector<8x1xf32> to vector<1x8x1xf32>
    tpu.vector_store %arg9[%c0_17, %c0_18, %c0_19], %31 {strides = array<i32>} : memref<4x8x1xf32, #tpu.memory_space<vmem>>, vector<1x8x1xf32>,
    %c0_20 = arith.constant 0 : index
    %c0_21 = arith.constant 0 : index
    %32 = vector.load %arg7[%c0_20, %c0_21] : memref<8x32xf32, #tpu.memory_space<vmem>>, vector<8x8xf32>
    %33 = vector.broadcast %16 : vector<8x1xf32> to vector<8x8xf32>
    %34 = arith.mulf %33, %32 : vector<8x8xf32>
    %cst_22 = arith.constant dense<0.000000e+00> : vector<8x8xf32>
    %35 = tpu.matmul %21, %8, %cst_22 {dimension_numbers = #tpu.dot_dimension_numbers<[1], [0], [0], [1], [0, 0, 1, 1], [], []>} : vector<8x16xbf16>, vector<16x8xbf16>, vector<8x8xf32> -> vector<8x8xf32>
    %36 = arith.addf %34, %35 : vector<8x8xf32>
    %c0_23 = arith.constant 0 : index
    %c0_24 = arith.constant 0 : index
    %37 = vector.load %arg7[%c0_23, %c0_24] : memref<8x32xf32, #tpu.memory_space<vmem>>, vector<8x8xf32>
    tpu.vector_store %arg7[%c0_23, %c0_24], %36 {strides = array<i32>} : memref<8x32xf32, #tpu.memory_space<vmem>>, vector<8x8xf32>,
    %c0_25 = arith.constant 0 : index
    %c0_26 = arith.constant 0 : index
    %c0_27 = arith.constant 0 : index
    %38 = vector.load %arg8[%c0_25, %c0_26, %c0_27] : memref<4x8x1xf32, #tpu.memory_space<vmem>>, vector<1x8x1xf32>
    %39 = vector.shape_cast %38 : vector<1x8x1xf32> to vector<8x1xf32>
    %40 = vector.shape_cast %14 : vector<8x1xf32> to vector<1x8x1xf32>
    tpu.vector_store %arg8[%c0_25, %c0_26, %c0_27], %40 {strides = array<i32>} : memref<4x8x1xf32, #tpu.memory_space<vmem>>, vector<1x8x1xf32>,
    %c0_28 = arith.constant 0 : index
    %c0_29 = arith.constant 0 : index
    %c8 = arith.constant 8 : index
    %41 = vector.load %arg3[%c0_28, %c0_29, %c8] : memref<1x8x32xbf16, #tpu.memory_space<vmem>>, vector<1x8x8xbf16>
    %42 = vector.shape_cast %41 : vector<1x8x8xbf16> to vector<8x8xbf16>
    %c0_30 = arith.constant 0 : index
    %c0_31 = arith.constant 0 : index
    %c8_32 = arith.constant 8 : index
    %43 = vector.load %arg4[%c0_30, %c0_31, %c8_32] : memref<1x16x32xbf16, #tpu.memory_space<vmem>>, vector<1x16x8xbf16>
    %44 = vector.shape_cast %43 : vector<1x16x8xbf16> to vector<16x8xbf16>
    %c0_33 = arith.constant 0 : index
    %c0_34 = arith.constant 0 : index
    %c8_35 = arith.constant 8 : index
    %45 = vector.load %arg5[%c0_33, %c0_34, %c8_35] : memref<1x16x32xbf16, #tpu.memory_space<vmem>>, vector<1x16x8xbf16>
    %46 = vector.shape_cast %45 : vector<1x16x8xbf16> to vector<16x8xbf16>
    %cst_36 = arith.constant dense<0.000000e+00> : vector<8x16xf32>
    %47 = tpu.matmul %42, %44, %cst_36 {dimension_numbers = #tpu.dot_dimension_numbers<[1], [1], [0], [0], [0, 0, 1, 0], [], []>} : vector<8x8xbf16>, vector<16x8xbf16>, vector<8x16xf32> -> vector<8x16xf32>
    %c1 = arith.constant 1 : index
    %c0_37 = arith.constant 0 : index
    %c0_38 = arith.constant 0 : index
    %48 = vector.load %arg8[%c1, %c0_37, %c0_38] : memref<4x8x1xf32, #tpu.memory_space<vmem>>, vector<1x8x1xf32>
    %49 = vector.shape_cast %48 : vector<1x8x1xf32> to vector<8x1xf32>
    %cst_39 = arith.constant dense<0xFF800000> : vector<8xf32>
    %50 = vector.multi_reduction <maximumf>, %47, %cst_39 [1] : vector<8x16xf32> to vector<8xf32>
    %51 = vector.shape_cast %50 : vector<8xf32> to vector<8x1xf32>
    %52 = arith.maximumf %49, %51 : vector<8x1xf32>
    %53 = arith.subf %49, %52 : vector<8x1xf32>
    %54 = math.exp %53 : vector<8x1xf32>
    %55 = arith.truncf %47 : vector<8x16xf32> to vector<8x16xbf16>
    %56 = arith.truncf %52 : vector<8x1xf32> to vector<8x1xbf16>
    %57 = vector.broadcast %56 : vector<8x1xbf16> to vector<8x16xbf16>
    %58 = arith.subf %55, %57 : vector<8x16xbf16>
    %59 = math.exp %58 : vector<8x16xbf16>
    %60 = arith.extf %59 : vector<8x16xbf16> to vector<8x16xf32>
    %cst_40 = arith.constant dense<0.000000e+00> : vector<8xf32>
    %61 = vector.multi_reduction <add>, %60, %cst_40 [1] : vector<8x16xf32> to vector<8xf32>
    %62 = vector.shape_cast %61 : vector<8xf32> to vector<8x1xf32>
    %c1_41 = arith.constant 1 : index
    %c0_42 = arith.constant 0 : index
    %c0_43 = arith.constant 0 : index
    %63 = vector.load %arg9[%c1_41, %c0_42, %c0_43] : memref<4x8x1xf32, #tpu.memory_space<vmem>>, vector<1x8x1xf32>
    %64 = vector.shape_cast %63 : vector<1x8x1xf32> to vector<8x1xf32>
    %65 = arith.mulf %54, %64 : vector<8x1xf32>
    %66 = arith.addf %65, %62 : vector<8x1xf32>
    %c1_44 = arith.constant 1 : index
    %c0_45 = arith.constant 0 : index
    %c0_46 = arith.constant 0 : index
    %67 = vector.load %arg9[%c1_44, %c0_45, %c0_46] : memref<4x8x1xf32, #tpu.memory_space<vmem>>, vector<1x8x1xf32>
    %68 = vector.shape_cast %67 : vector<1x8x1xf32> to vector<8x1xf32>
    %69 = vector.shape_cast %66 : vector<8x1xf32> to vector<1x8x1xf32>
    tpu.vector_store %arg9[%c1_44, %c0_45, %c0_46], %69 {strides = array<i32>} : memref<4x8x1xf32, #tpu.memory_space<vmem>>, vector<1x8x1xf32>,
    %c0_47 = arith.constant 0 : index
    %c8_48 = arith.constant 8 : index
    %70 = vector.load %arg7[%c0_47, %c8_48] : memref<8x32xf32, #tpu.memory_space<vmem>>, vector<8x8xf32>
    %71 = vector.broadcast %54 : vector<8x1xf32> to vector<8x8xf32>
    %72 = arith.mulf %71, %70 : vector<8x8xf32>
    %cst_49 = arith.constant dense<0.000000e+00> : vector<8x8xf32>
    %73 = tpu.matmul %59, %46, %cst_49 {dimension_numbers = #tpu.dot_dimension_numbers<[1], [0], [0], [1], [0, 0, 1, 1], [], []>} : vector<8x16xbf16>, vector<16x8xbf16>, vector<8x8xf32> -> vector<8x8xf32>
    %74 = arith.addf %72, %73 : vector<8x8xf32>
    %c0_50 = arith.constant 0 : index
    %c8_51 = arith.constant 8 : index
    %75 = vector.load %arg7[%c0_50, %c8_51] : memref<8x32xf32, #tpu.memory_space<vmem>>, vector<8x8xf32>
    tpu.vector_store %arg7[%c0_50, %c8_51], %74 {strides = array<i32>} : memref<8x32xf32, #tpu.memory_space<vmem>>, vector<8x8xf32>,
    %c1_52 = arith.constant 1 : index
    %c0_53 = arith.constant 0 : index
    %c0_54 = arith.constant 0 : index
    %76 = vector.load %arg8[%c1_52, %c0_53, %c0_54] : memref<4x8x1xf32, #tpu.memory_space<vmem>>, vector<1x8x1xf32>
    %77 = vector.shape_cast %76 : vector<1x8x1xf32> to vector<8x1xf32>
    %78 = vector.shape_cast %52 : vector<8x1xf32> to vector<1x8x1xf32>
    tpu.vector_store %arg8[%c1_52, %c0_53, %c0_54], %78 {strides = array<i32>} : memref<4x8x1xf32, #tpu.memory_space<vmem>>, vector<1x8x1xf32>,
    %c0_55 = arith.constant 0 : index
    %c0_56 = arith.constant 0 : index
    %c16 = arith.constant 16 : index
    %79 = vector.load %arg3[%c0_55, %c0_56, %c16] : memref<1x8x32xbf16, #tpu.memory_space<vmem>>, vector<1x8x8xbf16>
    %80 = vector.shape_cast %79 : vector<1x8x8xbf16> to vector<8x8xbf16>
    %c0_57 = arith.constant 0 : index
    %c0_58 = arith.constant 0 : index
    %c16_59 = arith.constant 16 : index
    %81 = vector.load %arg4[%c0_57, %c0_58, %c16_59] : memref<1x16x32xbf16, #tpu.memory_space<vmem>>, vector<1x16x8xbf16>
    %82 = vector.shape_cast %81 : vector<1x16x8xbf16> to vector<16x8xbf16>
    %c0_60 = arith.constant 0 : index
    %c0_61 = arith.constant 0 : index
    %c16_62 = arith.constant 16 : index
    %83 = vector.load %arg5[%c0_60, %c0_61, %c16_62] : memref<1x16x32xbf16, #tpu.memory_space<vmem>>, vector<1x16x8xbf16>
    %84 = vector.shape_cast %83 : vector<1x16x8xbf16> to vector<16x8xbf16>
    %cst_63 = arith.constant dense<0.000000e+00> : vector<8x16xf32>
    %85 = tpu.matmul %80, %82, %cst_63 {dimension_numbers = #tpu.dot_dimension_numbers<[1], [1], [0], [0], [0, 0, 1, 0], [], []>} : vector<8x8xbf16>, vector<16x8xbf16>, vector<8x16xf32> -> vector<8x16xf32>
    %c2 = arith.constant 2 : index
    %c0_64 = arith.constant 0 : index
    %c0_65 = arith.constant 0 : index
    %86 = vector.load %arg8[%c2, %c0_64, %c0_65] : memref<4x8x1xf32, #tpu.memory_space<vmem>>, vector<1x8x1xf32>
    %87 = vector.shape_cast %86 : vector<1x8x1xf32> to vector<8x1xf32>
    %cst_66 = arith.constant dense<0xFF800000> : vector<8xf32>
    %88 = vector.multi_reduction <maximumf>, %85, %cst_66 [1] : vector<8x16xf32> to vector<8xf32>
    %89 = vector.shape_cast %88 : vector<8xf32> to vector<8x1xf32>
    %90 = arith.maximumf %87, %89 : vector<8x1xf32>
    %91 = arith.subf %87, %90 : vector<8x1xf32>
    %92 = math.exp %91 : vector<8x1xf32>
    %93 = arith.truncf %85 : vector<8x16xf32> to vector<8x16xbf16>
    %94 = arith.truncf %90 : vector<8x1xf32> to vector<8x1xbf16>
    %95 = vector.broadcast %94 : vector<8x1xbf16> to vector<8x16xbf16>
    %96 = arith.subf %93, %95 : vector<8x16xbf16>
    %97 = math.exp %96 : vector<8x16xbf16>
    %98 = arith.extf %97 : vector<8x16xbf16> to vector<8x16xf32>
    %cst_67 = arith.constant dense<0.000000e+00> : vector<8xf32>
    %99 = vector.multi_reduction <add>, %98, %cst_67 [1] : vector<8x16xf32> to vector<8xf32>
    %100 = vector.shape_cast %99 : vector<8xf32> to vector<8x1xf32>
    %c2_68 = arith.constant 2 : index
    %c0_69 = arith.constant 0 : index
    %c0_70 = arith.constant 0 : index
    %101 = vector.load %arg9[%c2_68, %c0_69, %c0_70] : memref<4x8x1xf32, #tpu.memory_space<vmem>>, vector<1x8x1xf32>
    %102 = vector.shape_cast %101 : vector<1x8x1xf32> to vector<8x1xf32>
    %103 = arith.mulf %92, %102 : vector<8x1xf32>
    %104 = arith.addf %103, %100 : vector<8x1xf32>
    %c2_71 = arith.constant 2 : index
    %c0_72 = arith.constant 0 : index
    %c0_73 = arith.constant 0 : index
    %105 = vector.load %arg9[%c2_71, %c0_72, %c0_73] : memref<4x8x1xf32, #tpu.memory_space<vmem>>, vector<1x8x1xf32>
    %106 = vector.shape_cast %105 : vector<1x8x1xf32> to vector<8x1xf32>
    %107 = vector.shape_cast %104 : vector<8x1xf32> to vector<1x8x1xf32>
    tpu.vector_store %arg9[%c2_71, %c0_72, %c0_73], %107 {strides = array<i32>} : memref<4x8x1xf32, #tpu.memory_space<vmem>>, vector<1x8x1xf32>,
    %c0_74 = arith.constant 0 : index
    %c16_75 = arith.constant 16 : index
    %108 = vector.load %arg7[%c0_74, %c16_75] : memref<8x32xf32, #tpu.memory_space<vmem>>, vector<8x8xf32>
    %109 = vector.broadcast %92 : vector<8x1xf32> to vector<8x8xf32>
    %110 = arith.mulf %109, %108 : vector<8x8xf32>
    %cst_76 = arith.constant dense<0.000000e+00> : vector<8x8xf32>
    %111 = tpu.matmul %97, %84, %cst_76 {dimension_numbers = #tpu.dot_dimension_numbers<[1], [0], [0], [1], [0, 0, 1, 1], [], []>} : vector<8x16xbf16>, vector<16x8xbf16>, vector<8x8xf32> -> vector<8x8xf32>
    %112 = arith.addf %110, %111 : vector<8x8xf32>
    %c0_77 = arith.constant 0 : index
    %c16_78 = arith.constant 16 : index
    %113 = vector.load %arg7[%c0_77, %c16_78] : memref<8x32xf32, #tpu.memory_space<vmem>>, vector<8x8xf32>
    tpu.vector_store %arg7[%c0_77, %c16_78], %112 {strides = array<i32>} : memref<8x32xf32, #tpu.memory_space<vmem>>, vector<8x8xf32>,
    %c2_79 = arith.constant 2 : index
    %c0_80 = arith.constant 0 : index
    %c0_81 = arith.constant 0 : index
    %114 = vector.load %arg8[%c2_79, %c0_80, %c0_81] : memref<4x8x1xf32, #tpu.memory_space<vmem>>, vector<1x8x1xf32>
    %115 = vector.shape_cast %114 : vector<1x8x1xf32> to vector<8x1xf32>
    %116 = vector.shape_cast %90 : vector<8x1xf32> to vector<1x8x1xf32>
    tpu.vector_store %arg8[%c2_79, %c0_80, %c0_81], %116 {strides = array<i32>} : memref<4x8x1xf32, #tpu.memory_space<vmem>>, vector<1x8x1xf32>,
    %c0_82 = arith.constant 0 : index
    %c0_83 = arith.constant 0 : index
    %c24 = arith.constant 24 : index
    %117 = vector.load %arg3[%c0_82, %c0_83, %c24] : memref<1x8x32xbf16, #tpu.memory_space<vmem>>, vector<1x8x8xbf16>
    %118 = vector.shape_cast %117 : vector<1x8x8xbf16> to vector<8x8xbf16>
    %c0_84 = arith.constant 0 : index
    %c0_85 = arith.constant 0 : index
    %c24_86 = arith.constant 24 : index
    %119 = vector.load %arg4[%c0_84, %c0_85, %c24_86] : memref<1x16x32xbf16, #tpu.memory_space<vmem>>, vector<1x16x8xbf16>
    %120 = vector.shape_cast %119 : vector<1x16x8xbf16> to vector<16x8xbf16>
    %c0_87 = arith.constant 0 : index
    %c0_88 = arith.constant 0 : index
    %c24_89 = arith.constant 24 : index
    %121 = vector.load %arg5[%c0_87, %c0_88, %c24_89] : memref<1x16x32xbf16, #tpu.memory_space<vmem>>, vector<1x16x8xbf16>
    %122 = vector.shape_cast %121 : vector<1x16x8xbf16> to vector<16x8xbf16>
    %cst_90 = arith.constant dense<0.000000e+00> : vector<8x16xf32>
    %123 = tpu.matmul %118, %120, %cst_90 {dimension_numbers = #tpu.dot_dimension_numbers<[1], [1], [0], [0], [0, 0, 1, 0], [], []>} : vector<8x8xbf16>, vector<16x8xbf16>, vector<8x16xf32> -> vector<8x16xf32>
    %c3 = arith.constant 3 : index
    %c0_91 = arith.constant 0 : index
    %c0_92 = arith.constant 0 : index
    %124 = vector.load %arg8[%c3, %c0_91, %c0_92] : memref<4x8x1xf32, #tpu.memory_space<vmem>>, vector<1x8x1xf32>
    %125 = vector.shape_cast %124 : vector<1x8x1xf32> to vector<8x1xf32>
    %cst_93 = arith.constant dense<0xFF800000> : vector<8xf32>
    %126 = vector.multi_reduction <maximumf>, %123, %cst_93 [1] : vector<8x16xf32> to vector<8xf32>
    %127 = vector.shape_cast %126 : vector<8xf32> to vector<8x1xf32>
    %128 = arith.maximumf %125, %127 : vector<8x1xf32>
    %129 = arith.subf %125, %128 : vector<8x1xf32>
    %130 = math.exp %129 : vector<8x1xf32>
    %131 = arith.truncf %123 : vector<8x16xf32> to vector<8x16xbf16>
    %132 = arith.truncf %128 : vector<8x1xf32> to vector<8x1xbf16>
    %133 = vector.broadcast %132 : vector<8x1xbf16> to vector<8x16xbf16>
    %134 = arith.subf %131, %133 : vector<8x16xbf16>
    %135 = math.exp %134 : vector<8x16xbf16>
    %136 = arith.extf %135 : vector<8x16xbf16> to vector<8x16xf32>
    %cst_94 = arith.constant dense<0.000000e+00> : vector<8xf32>
    %137 = vector.multi_reduction <add>, %136, %cst_94 [1] : vector<8x16xf32> to vector<8xf32>
    %138 = vector.shape_cast %137 : vector<8xf32> to vector<8x1xf32>
    %c3_95 = arith.constant 3 : index
    %c0_96 = arith.constant 0 : index
    %c0_97 = arith.constant 0 : index
    %139 = vector.load %arg9[%c3_95, %c0_96, %c0_97] : memref<4x8x1xf32, #tpu.memory_space<vmem>>, vector<1x8x1xf32>
    %140 = vector.shape_cast %139 : vector<1x8x1xf32> to vector<8x1xf32>
    %141 = arith.mulf %130, %140 : vector<8x1xf32>
    %142 = arith.addf %141, %138 : vector<8x1xf32>
    %c3_98 = arith.constant 3 : index
    %c0_99 = arith.constant 0 : index
    %c0_100 = arith.constant 0 : index
    %143 = vector.load %arg9[%c3_98, %c0_99, %c0_100] : memref<4x8x1xf32, #tpu.memory_space<vmem>>, vector<1x8x1xf32>
    %144 = vector.shape_cast %143 : vector<1x8x1xf32> to vector<8x1xf32>
    %145 = vector.shape_cast %142 : vector<8x1xf32> to vector<1x8x1xf32>
    tpu.vector_store %arg9[%c3_98, %c0_99, %c0_100], %145 {strides = array<i32>} : memref<4x8x1xf32, #tpu.memory_space<vmem>>, vector<1x8x1xf32>,
    %c0_101 = arith.constant 0 : index
    %c24_102 = arith.constant 24 : index
    %146 = vector.load %arg7[%c0_101, %c24_102] : memref<8x32xf32, #tpu.memory_space<vmem>>, vector<8x8xf32>
    %147 = vector.broadcast %130 : vector<8x1xf32> to vector<8x8xf32>
    %148 = arith.mulf %147, %146 : vector<8x8xf32>
    %cst_103 = arith.constant dense<0.000000e+00> : vector<8x8xf32>
    %149 = tpu.matmul %135, %122, %cst_103 {dimension_numbers = #tpu.dot_dimension_numbers<[1], [0], [0], [1], [0, 0, 1, 1], [], []>} : vector<8x16xbf16>, vector<16x8xbf16>, vector<8x8xf32> -> vector<8x8xf32>
    %150 = arith.addf %148, %149 : vector<8x8xf32>
    %c0_104 = arith.constant 0 : index
    %c24_105 = arith.constant 24 : index
    %151 = vector.load %arg7[%c0_104, %c24_105] : memref<8x32xf32, #tpu.memory_space<vmem>>, vector<8x8xf32>
    tpu.vector_store %arg7[%c0_104, %c24_105], %150 {strides = array<i32>} : memref<8x32xf32, #tpu.memory_space<vmem>>, vector<8x8xf32>,
    %c3_106 = arith.constant 3 : index
    %c0_107 = arith.constant 0 : index
    %c0_108 = arith.constant 0 : index
    %152 = vector.load %arg8[%c3_106, %c0_107, %c0_108] : memref<4x8x1xf32, #tpu.memory_space<vmem>>, vector<1x8x1xf32>
    %153 = vector.shape_cast %152 : vector<1x8x1xf32> to vector<8x1xf32>
    %154 = vector.shape_cast %128 : vector<8x1xf32> to vector<1x8x1xf32>
    tpu.vector_store %arg8[%c3_106, %c0_107, %c0_108], %154 {strides = array<i32>} : memref<4x8x1xf32, #tpu.memory_space<vmem>>, vector<1x8x1xf32>,
    %c1_i32 = arith.constant 1 : i32
    %155 = arith.cmpi eq, %arg2, %c1_i32 : i32
    %156 = arith.extui %155 : i1 to i32
    %c0_i32_109 = arith.constant 0 : i32
    %157 = arith.cmpi ne, %156, %c0_i32_109 : i32
    scf.if %157 {
      %c0_110 = arith.constant 0 : index
      %c0_111 = arith.constant 0 : index
      %158 = vector.load %arg7[%c0_110, %c0_111] : memref<8x32xf32, #tpu.memory_space<vmem>>, vector<8x8xf32>
      %c0_112 = arith.constant 0 : index
      %c0_113 = arith.constant 0 : index
      %c0_114 = arith.constant 0 : index
      %159 = vector.load %arg9[%c0_112, %c0_113, %c0_114] : memref<4x8x1xf32, #tpu.memory_space<vmem>>, vector<1x8x1xf32>
      %160 = vector.shape_cast %159 : vector<1x8x1xf32> to vector<8x1xf32>
      %161 = tpu.reciprocal %160 {approx = true} : vector<8x1xf32> -> vector<8x1xf32>
      %162 = vector.broadcast %161 : vector<8x1xf32> to vector<8x8xf32>
      %163 = arith.mulf %158, %162 : vector<8x8xf32>
      %164 = arith.truncf %163 : vector<8x8xf32> to vector<8x8xbf16>
      %c0_115 = arith.constant 0 : index
      %c0_116 = arith.constant 0 : index
      %c0_117 = arith.constant 0 : index
      %165 = vector.load %arg6[%c0_115, %c0_116, %c0_117] : memref<1x8x32xbf16, #tpu.memory_space<vmem>>, vector<1x8x8xbf16>
      %166 = vector.shape_cast %165 : vector<1x8x8xbf16> to vector<8x8xbf16>
      %167 = vector.shape_cast %164 : vector<8x8xbf16> to vector<1x8x8xbf16>
      tpu.vector_store %arg6[%c0_115, %c0_116, %c0_117], %167 {strides = array<i32>} : memref<1x8x32xbf16, #tpu.memory_space<vmem>>, vector<1x8x8xbf16>,
      %c0_118 = arith.constant 0 : index
      %c8_119 = arith.constant 8 : index
      %168 = vector.load %arg7[%c0_118, %c8_119] : memref<8x32xf32, #tpu.memory_space<vmem>>, vector<8x8xf32>
      %c1_120 = arith.constant 1 : index
      %c0_121 = arith.constant 0 : index
      %c0_122 = arith.constant 0 : index
      %169 = vector.load %arg9[%c1_120, %c0_121, %c0_122] : memref<4x8x1xf32, #tpu.memory_space<vmem>>, vector<1x8x1xf32>
      %170 = vector.shape_cast %169 : vector<1x8x1xf32> to vector<8x1xf32>
      %171 = tpu.reciprocal %170 {approx = true} : vector<8x1xf32> -> vector<8x1xf32>
      %172 = vector.broadcast %171 : vector<8x1xf32> to vector<8x8xf32>
      %173 = arith.mulf %168, %172 : vector<8x8xf32>
      %174 = arith.truncf %173 : vector<8x8xf32> to vector<8x8xbf16>
      %c0_123 = arith.constant 0 : index
      %c0_124 = arith.constant 0 : index
      %c8_125 = arith.constant 8 : index
      %175 = vector.load %arg6[%c0_123, %c0_124, %c8_125] : memref<1x8x32xbf16, #tpu.memory_space<vmem>>, vector<1x8x8xbf16>
      %176 = vector.shape_cast %175 : vector<1x8x8xbf16> to vector<8x8xbf16>
      %177 = vector.shape_cast %174 : vector<8x8xbf16> to vector<1x8x8xbf16>
      tpu.vector_store %arg6[%c0_123, %c0_124, %c8_125], %177 {strides = array<i32>} : memref<1x8x32xbf16, #tpu.memory_space<vmem>>, vector<1x8x8xbf16>,
      %c0_126 = arith.constant 0 : index
      %c16_127 = arith.constant 16 : index
      %178 = vector.load %arg7[%c0_126, %c16_127] : memref<8x32xf32, #tpu.memory_space<vmem>>, vector<8x8xf32>
      %c2_128 = arith.constant 2 : index
      %c0_129 = arith.constant 0 : index
      %c0_130 = arith.constant 0 : index
      %179 = vector.load %arg9[%c2_128, %c0_129, %c0_130] : memref<4x8x1xf32, #tpu.memory_space<vmem>>, vector<1x8x1xf32>
      %180 = vector.shape_cast %179 : vector<1x8x1xf32> to vector<8x1xf32>
      %181 = tpu.reciprocal %180 {approx = true} : vector<8x1xf32> -> vector<8x1xf32>
      %182 = vector.broadcast %181 : vector<8x1xf32> to vector<8x8xf32>
      %183 = arith.mulf %178, %182 : vector<8x8xf32>
      %184 = arith.truncf %183 : vector<8x8xf32> to vector<8x8xbf16>
      %c0_131 = arith.constant 0 : index
      %c0_132 = arith.constant 0 : index
      %c16_133 = arith.constant 16 : index
      %185 = vector.load %arg6[%c0_131, %c0_132, %c16_133] : memref<1x8x32xbf16, #tpu.memory_space<vmem>>, vector<1x8x8xbf16>
      %186 = vector.shape_cast %185 : vector<1x8x8xbf16> to vector<8x8xbf16>
      %187 = vector.shape_cast %184 : vector<8x8xbf16> to vector<1x8x8xbf16>
      tpu.vector_store %arg6[%c0_131, %c0_132, %c16_133], %187 {strides = array<i32>} : memref<1x8x32xbf16, #tpu.memory_space<vmem>>, vector<1x8x8xbf16>,
      %c0_134 = arith.constant 0 : index
      %c24_135 = arith.constant 24 : index
      %188 = vector.load %arg7[%c0_134, %c24_135] : memref<8x32xf32, #tpu.memory_space<vmem>>, vector<8x8xf32>
      %c3_136 = arith.constant 3 : index
      %c0_137 = arith.constant 0 : index
      %c0_138 = arith.constant 0 : index
      %189 = vector.load %arg9[%c3_136, %c0_137, %c0_138] : memref<4x8x1xf32, #tpu.memory_space<vmem>>, vector<1x8x1xf32>
      %190 = vector.shape_cast %189 : vector<1x8x1xf32> to vector<8x1xf32>
      %191 = tpu.reciprocal %190 {approx = true} : vector<8x1xf32> -> vector<8x1xf32>
      %192 = vector.broadcast %191 : vector<8x1xf32> to vector<8x8xf32>
      %193 = arith.mulf %188, %192 : vector<8x8xf32>
      %194 = arith.truncf %193 : vector<8x8xf32> to vector<8x8xbf16>
      %c0_139 = arith.constant 0 : index
      %c0_140 = arith.constant 0 : index
      %c24_141 = arith.constant 24 : index
      %195 = vector.load %arg6[%c0_139, %c0_140, %c24_141] : memref<1x8x32xbf16, #tpu.memory_space<vmem>>, vector<1x8x8xbf16>
      %196 = vector.shape_cast %195 : vector<1x8x8xbf16> to vector<8x8xbf16>
      %197 = vector.shape_cast %194 : vector<8x8xbf16> to vector<1x8x8xbf16>
      tpu.vector_store %arg6[%c0_139, %c0_140, %c24_141], %197 {strides = array<i32>} : memref<1x8x32xbf16, #tpu.memory_space<vmem>>, vector<1x8x8xbf16>,
    } else {
    }
    return
  }
  func.func @transform_0(%arg0: i32, %arg1: i32, %arg2: i32) -> (i32, i32, i32) {
    %c0_i32 = arith.constant 0 : i32
    %c0_i32_0 = arith.constant 0 : i32
    return %arg0, %arg1, %c0_i32 : i32, i32, i32
  }
  func.func @transform_1(%arg0: i32, %arg1: i32, %arg2: i32) -> (i32, i32, i32) {
    %c0_i32 = arith.constant 0 : i32
    %c0_i32_0 = arith.constant 0 : i32
    return %arg0, %arg2, %c0_i32 : i32, i32, i32
  }
  func.func @transform_2(%arg0: i32, %arg1: i32, %arg2: i32) -> (i32, i32, i32) {
    %c0_i32 = arith.constant 0 : i32
    %c0_i32_0 = arith.constant 0 : i32
    return %arg0, %arg2, %c0_i32 : i32, i32, i32
  }
  func.func @transform_3(%arg0: i32, %arg1: i32, %arg2: i32) -> (i32, i32, i32) {
    %c0_i32 = arith.constant 0 : i32
    %c0_i32_0 = arith.constant 0 : i32
    return %arg0, %arg1, %c0_i32 : i32, i32, i32
  }
}

module attributes {stable_mosaic.version = 11 : i64} {
  func.func @_out_ln_kernel(%arg0: i32, %arg1: i32, %arg2: memref<16x32xbf16, #tpu.memory_space<vmem>>, %arg3: memref<16x32xf32, #tpu.memory_space<vmem>>, %arg4: memref<32x32xbf16, #tpu.memory_space<vmem>>, %arg5: memref<1x32xf32, #tpu.memory_space<vmem>>, %arg6: memref<1x32xf32, #tpu.memory_space<vmem>>, %arg7: memref<1x32xf32, #tpu.memory_space<vmem>>, %arg8: memref<16x32xf32, #tpu.memory_space<vmem>>, %arg9: memref<16x32xf32, #tpu.memory_space<vmem>>) attributes {dimension_semantics = [#tpu.dimension_semantics<parallel>, #tpu.dimension_semantics<arbitrary>], iteration_bounds = array<i64: 1, 1>, scalar_prefetch = 0 : i64, scratch_operands = 1 : i64, tpu.core_type = #tpu.core_type<tc>, window_params = [{transform_indices = @transform_0, window_bounds = array<i64: 16, 32>}, {transform_indices = @transform_1, window_bounds = array<i64: 16, 32>}, {transform_indices = @transform_2, window_bounds = array<i64: 32, 32>}, {pipeline_mode = #tpu.pipeline_mode<synchronous>, transform_indices = @transform_3, window_bounds = array<i64: 1, 32>}, {pipeline_mode = #tpu.pipeline_mode<synchronous>, transform_indices = @transform_4, window_bounds = array<i64: 1, 32>}, {pipeline_mode = #tpu.pipeline_mode<synchronous>, transform_indices = @transform_5, window_bounds = array<i64: 1, 32>}, {transform_indices = @transform_6, window_bounds = array<i64: 16, 32>}]} {
    %c0_i32 = arith.constant 0 : i32
    %0 = arith.cmpi eq, %arg1, %c0_i32 : i32
    %1 = arith.extui %0 : i1 to i32
    %c0_i32_0 = arith.constant 0 : i32
    %2 = arith.cmpi ne, %1, %c0_i32_0 : i32
    scf.if %2 {
      %cst_10 = arith.constant 0.000000e+00 : f32
      %12 = vector.broadcast %cst_10 : f32 to vector<16x32xf32>
      %c0_11 = arith.constant 0 : index
      %c0_12 = arith.constant 0 : index
      %13 = vector.load %arg9[%c0_11, %c0_12] : memref<16x32xf32, #tpu.memory_space<vmem>>, vector<16x32xf32>
      tpu.vector_store %arg9[%c0_11, %c0_12], %12 {strides = array<i32>} : memref<16x32xf32, #tpu.memory_space<vmem>>, vector<16x32xf32>,
    } else {
    }
    %c0 = arith.constant 0 : index
    %c0_1 = arith.constant 0 : index
    %3 = vector.load %arg9[%c0, %c0_1] : memref<16x32xf32, #tpu.memory_space<vmem>>, vector<16x32xf32>
    %c0_2 = arith.constant 0 : index
    %c0_3 = arith.constant 0 : index
    %4 = vector.load %arg2[%c0_2, %c0_3] : memref<16x32xbf16, #tpu.memory_space<vmem>>, vector<16x32xbf16>
    %c0_4 = arith.constant 0 : index
    %c0_5 = arith.constant 0 : index
    %5 = vector.load %arg4[%c0_4, %c0_5] : memref<32x32xbf16, #tpu.memory_space<vmem>>, vector<32x32xbf16>
    %cst = arith.constant dense<0.000000e+00> : vector<16x32xf32>
    %6 = tpu.matmul %4, %5, %cst {dimension_numbers = #tpu.dot_dimension_numbers<[1], [0], [0], [1], [0, 0, 1, 1], [], []>} : vector<16x32xbf16>, vector<32x32xbf16>, vector<16x32xf32> -> vector<16x32xf32>
    %7 = arith.addf %3, %6 : vector<16x32xf32>
    %c0_6 = arith.constant 0 : index
    %c0_7 = arith.constant 0 : index
    %8 = vector.load %arg9[%c0_6, %c0_7] : memref<16x32xf32, #tpu.memory_space<vmem>>, vector<16x32xf32>
    tpu.vector_store %arg9[%c0_6, %c0_7], %7 {strides = array<i32>} : memref<16x32xf32, #tpu.memory_space<vmem>>, vector<16x32xf32>,
    %c0_i32_8 = arith.constant 0 : i32
    %9 = arith.cmpi eq, %arg1, %c0_i32_8 : i32
    %10 = arith.extui %9 : i1 to i32
    %c0_i32_9 = arith.constant 0 : i32
    %11 = arith.cmpi ne, %10, %c0_i32_9 : i32
    scf.if %11 {
      %c0_10 = arith.constant 0 : index
      %c0_11 = arith.constant 0 : index
      %12 = vector.load %arg3[%c0_10, %c0_11] : memref<16x32xf32, #tpu.memory_space<vmem>>, vector<16x32xf32>
      %c0_12 = arith.constant 0 : index
      %c0_13 = arith.constant 0 : index
      %13 = vector.load %arg9[%c0_12, %c0_13] : memref<16x32xf32, #tpu.memory_space<vmem>>, vector<16x32xf32>
      %14 = arith.addf %12, %13 : vector<16x32xf32>
      %c0_14 = arith.constant 0 : index
      %c0_15 = arith.constant 0 : index
      %15 = vector.load %arg5[%c0_14, %c0_15] : memref<1x32xf32, #tpu.memory_space<vmem>>, vector<1x32xf32>
      %16 = vector.broadcast %15 : vector<1x32xf32> to vector<16x32xf32>
      %17 = arith.addf %14, %16 : vector<16x32xf32>
      %cst_16 = arith.constant dense<0.000000e+00> : vector<16xf32>
      %18 = vector.multi_reduction <add>, %17, %cst_16 [1] : vector<16x32xf32> to vector<16xf32>
      %19 = vector.shape_cast %18 : vector<16xf32> to vector<16x1xf32>
      %cst_17 = arith.constant 3.125000e-02 : f32
      %20 = vector.broadcast %cst_17 : f32 to vector<16x1xf32>
      %21 = arith.mulf %19, %20 : vector<16x1xf32>
      %22 = vector.broadcast %21 : vector<16x1xf32> to vector<16x32xf32>
      %23 = arith.subf %17, %22 : vector<16x32xf32>
      %24 = arith.mulf %23, %23 : vector<16x32xf32>
      %cst_18 = arith.constant dense<0.000000e+00> : vector<16xf32>
      %25 = vector.multi_reduction <add>, %24, %cst_18 [1] : vector<16x32xf32> to vector<16xf32>
      %26 = vector.shape_cast %25 : vector<16xf32> to vector<16x1xf32>
      %cst_19 = arith.constant 3.125000e-02 : f32
      %27 = vector.broadcast %cst_19 : f32 to vector<16x1xf32>
      %28 = arith.mulf %26, %27 : vector<16x1xf32>
      %cst_20 = arith.constant 9.99999974E-6 : f32
      %29 = vector.broadcast %cst_20 : f32 to vector<16x1xf32>
      %30 = arith.addf %28, %29 : vector<16x1xf32>
      %31 = math.rsqrt %30 : vector<16x1xf32>
      %32 = vector.broadcast %31 : vector<16x1xf32> to vector<16x32xf32>
      %33 = arith.mulf %23, %32 : vector<16x32xf32>
      %c0_21 = arith.constant 0 : index
      %c0_22 = arith.constant 0 : index
      %34 = vector.load %arg6[%c0_21, %c0_22] : memref<1x32xf32, #tpu.memory_space<vmem>>, vector<1x32xf32>
      %35 = vector.broadcast %34 : vector<1x32xf32> to vector<16x32xf32>
      %36 = arith.mulf %33, %35 : vector<16x32xf32>
      %c0_23 = arith.constant 0 : index
      %c0_24 = arith.constant 0 : index
      %37 = vector.load %arg7[%c0_23, %c0_24] : memref<1x32xf32, #tpu.memory_space<vmem>>, vector<1x32xf32>
      %38 = vector.broadcast %37 : vector<1x32xf32> to vector<16x32xf32>
      %39 = arith.addf %36, %38 : vector<16x32xf32>
      %c0_25 = arith.constant 0 : index
      %c0_26 = arith.constant 0 : index
      %40 = vector.load %arg8[%c0_25, %c0_26] : memref<16x32xf32, #tpu.memory_space<vmem>>, vector<16x32xf32>
      tpu.vector_store %arg8[%c0_25, %c0_26], %39 {strides = array<i32>} : memref<16x32xf32, #tpu.memory_space<vmem>>, vector<16x32xf32>,
    } else {
    }
    return
  }
  func.func @transform_0(%arg0: i32, %arg1: i32) -> (i32, i32) {
    %c0_i32 = arith.constant 0 : i32
    return %arg0, %arg1 : i32, i32
  }
  func.func @transform_1(%arg0: i32, %arg1: i32) -> (i32, i32) {
    %c0_i32 = arith.constant 0 : i32
    %c0_i32_0 = arith.constant 0 : i32
    return %arg0, %c0_i32 : i32, i32
  }
  func.func @transform_2(%arg0: i32, %arg1: i32) -> (i32, i32) {
    %c0_i32 = arith.constant 0 : i32
    %c0_i32_0 = arith.constant 0 : i32
    return %arg1, %c0_i32 : i32, i32
  }
  func.func @transform_3(%arg0: i32, %arg1: i32) -> (i32, i32) {
    %c0_i32 = arith.constant 0 : i32
    %c0_i32_0 = arith.constant 0 : i32
    %c0_i32_1 = arith.constant 0 : i32
    return %c0_i32, %c0_i32_0 : i32, i32
  }
  func.func @transform_4(%arg0: i32, %arg1: i32) -> (i32, i32) {
    %c0_i32 = arith.constant 0 : i32
    %c0_i32_0 = arith.constant 0 : i32
    %c0_i32_1 = arith.constant 0 : i32
    return %c0_i32, %c0_i32_0 : i32, i32
  }
  func.func @transform_5(%arg0: i32, %arg1: i32) -> (i32, i32) {
    %c0_i32 = arith.constant 0 : i32
    %c0_i32_0 = arith.constant 0 : i32
    %c0_i32_1 = arith.constant 0 : i32
    return %c0_i32, %c0_i32_0 : i32, i32
  }
  func.func @transform_6(%arg0: i32, %arg1: i32) -> (i32, i32) {
    %c0_i32 = arith.constant 0 : i32
    %c0_i32_0 = arith.constant 0 : i32
    return %arg0, %c0_i32 : i32, i32
  }
}

module attributes {stable_mosaic.version = 11 : i64} {
  func.func @_mlp_ln_kernel(%arg0: i32, %arg1: i32, %arg2: memref<16x32xf32, #tpu.memory_space<vmem>>, %arg3: memref<32x128xbf16, #tpu.memory_space<vmem>>, %arg4: memref<1x128xf32, #tpu.memory_space<vmem>>, %arg5: memref<128x32xbf16, #tpu.memory_space<vmem>>, %arg6: memref<1x32xf32, #tpu.memory_space<vmem>>, %arg7: memref<1x32xf32, #tpu.memory_space<vmem>>, %arg8: memref<1x32xf32, #tpu.memory_space<vmem>>, %arg9: memref<16x32xf32, #tpu.memory_space<vmem>>, %arg10: memref<16x32xf32, #tpu.memory_space<vmem>>, %arg11: memref<16x32xbf16, #tpu.memory_space<vmem>>) attributes {dimension_semantics = [#tpu.dimension_semantics<parallel>, #tpu.dimension_semantics<arbitrary>], iteration_bounds = array<i64: 1, 2>, scalar_prefetch = 0 : i64, scratch_operands = 2 : i64, tpu.core_type = #tpu.core_type<tc>, window_params = [{transform_indices = @transform_0, window_bounds = array<i64: 16, 32>}, {transform_indices = @transform_1, window_bounds = array<i64: 32, 128>}, {transform_indices = @transform_2, window_bounds = array<i64: 1, 128>}, {transform_indices = @transform_3, window_bounds = array<i64: 128, 32>}, {pipeline_mode = #tpu.pipeline_mode<synchronous>, transform_indices = @transform_4, window_bounds = array<i64: 1, 32>}, {pipeline_mode = #tpu.pipeline_mode<synchronous>, transform_indices = @transform_5, window_bounds = array<i64: 1, 32>}, {pipeline_mode = #tpu.pipeline_mode<synchronous>, transform_indices = @transform_6, window_bounds = array<i64: 1, 32>}, {transform_indices = @transform_7, window_bounds = array<i64: 16, 32>}]} {
    %c0_i32 = arith.constant 0 : i32
    %0 = arith.cmpi eq, %arg1, %c0_i32 : i32
    %1 = arith.extui %0 : i1 to i32
    %c0_i32_0 = arith.constant 0 : i32
    %2 = arith.cmpi ne, %1, %c0_i32_0 : i32
    scf.if %2 {
      %cst_17 = arith.constant 0.000000e+00 : f32
      %26 = vector.broadcast %cst_17 : f32 to vector<16x32xf32>
      %c0_18 = arith.constant 0 : index
      %c0_19 = arith.constant 0 : index
      %27 = vector.load %arg10[%c0_18, %c0_19] : memref<16x32xf32, #tpu.memory_space<vmem>>, vector<16x32xf32>
      tpu.vector_store %arg10[%c0_18, %c0_19], %26 {strides = array<i32>} : memref<16x32xf32, #tpu.memory_space<vmem>>, vector<16x32xf32>,
      %c0_20 = arith.constant 0 : index
      %c0_21 = arith.constant 0 : index
      %28 = vector.load %arg2[%c0_20, %c0_21] : memref<16x32xf32, #tpu.memory_space<vmem>>, vector<16x32xf32>
      %29 = arith.truncf %28 : vector<16x32xf32> to vector<16x32xbf16>
      %c0_22 = arith.constant 0 : index
      %c0_23 = arith.constant 0 : index
      %30 = vector.load %arg11[%c0_22, %c0_23] : memref<16x32xbf16, #tpu.memory_space<vmem>>, vector<16x32xbf16>
      tpu.vector_store %arg11[%c0_22, %c0_23], %29 {strides = array<i32>} : memref<16x32xbf16, #tpu.memory_space<vmem>>, vector<16x32xbf16>,
    } else {
    }
    %c0 = arith.constant 0 : index
    %c0_1 = arith.constant 0 : index
    %3 = vector.load %arg11[%c0, %c0_1] : memref<16x32xbf16, #tpu.memory_space<vmem>>, vector<16x32xbf16>
    %c0_2 = arith.constant 0 : index
    %c0_3 = arith.constant 0 : index
    %4 = vector.load %arg3[%c0_2, %c0_3] : memref<32x128xbf16, #tpu.memory_space<vmem>>, vector<32x128xbf16>
    %cst = arith.constant dense<0.000000e+00> : vector<16x128xf32>
    %5 = tpu.matmul %3, %4, %cst {dimension_numbers = #tpu.dot_dimension_numbers<[1], [0], [0], [1], [0, 0, 1, 1], [], []>} : vector<16x32xbf16>, vector<32x128xbf16>, vector<16x128xf32> -> vector<16x128xf32>
    %c0_4 = arith.constant 0 : index
    %c0_5 = arith.constant 0 : index
    %6 = vector.load %arg4[%c0_4, %c0_5] : memref<1x128xf32, #tpu.memory_space<vmem>>, vector<1x128xf32>
    %7 = vector.broadcast %6 : vector<1x128xf32> to vector<16x128xf32>
    %8 = arith.addf %5, %7 : vector<16x128xf32>
    %cst_6 = arith.constant 5.000000e-01 : f32
    %9 = vector.broadcast %cst_6 : f32 to vector<16x128xf32>
    %10 = arith.mulf %9, %8 : vector<16x128xf32>
    %cst_7 = arith.constant 0.707106769 : f32
    %11 = vector.broadcast %cst_7 : f32 to vector<16x128xf32>
    %12 = arith.mulf %8, %11 : vector<16x128xf32>
    %13 = math.erf %12 : vector<16x128xf32>
    %cst_8 = arith.constant 1.000000e+00 : f32
    %14 = vector.broadcast %cst_8 : f32 to vector<16x128xf32>
    %15 = arith.addf %14, %13 : vector<16x128xf32>
    %16 = arith.mulf %10, %15 : vector<16x128xf32>
    %c0_9 = arith.constant 0 : index
    %c0_10 = arith.constant 0 : index
    %17 = vector.load %arg10[%c0_9, %c0_10] : memref<16x32xf32, #tpu.memory_space<vmem>>, vector<16x32xf32>
    %18 = arith.truncf %16 : vector<16x128xf32> to vector<16x128xbf16>
    %c0_11 = arith.constant 0 : index
    %c0_12 = arith.constant 0 : index
    %19 = vector.load %arg5[%c0_11, %c0_12] : memref<128x32xbf16, #tpu.memory_space<vmem>>, vector<128x32xbf16>
    %cst_13 = arith.constant dense<0.000000e+00> : vector<16x32xf32>
    %20 = tpu.matmul %18, %19, %cst_13 {dimension_numbers = #tpu.dot_dimension_numbers<[1], [0], [0], [1], [0, 0, 1, 1], [], []>} : vector<16x128xbf16>, vector<128x32xbf16>, vector<16x32xf32> -> vector<16x32xf32>
    %21 = arith.addf %17, %20 : vector<16x32xf32>
    %c0_14 = arith.constant 0 : index
    %c0_15 = arith.constant 0 : index
    %22 = vector.load %arg10[%c0_14, %c0_15] : memref<16x32xf32, #tpu.memory_space<vmem>>, vector<16x32xf32>
    tpu.vector_store %arg10[%c0_14, %c0_15], %21 {strides = array<i32>} : memref<16x32xf32, #tpu.memory_space<vmem>>, vector<16x32xf32>,
    %c1_i32 = arith.constant 1 : i32
    %23 = arith.cmpi eq, %arg1, %c1_i32 : i32
    %24 = arith.extui %23 : i1 to i32
    %c0_i32_16 = arith.constant 0 : i32
    %25 = arith.cmpi ne, %24, %c0_i32_16 : i32
    scf.if %25 {
      %c0_17 = arith.constant 0 : index
      %c0_18 = arith.constant 0 : index
      %26 = vector.load %arg2[%c0_17, %c0_18] : memref<16x32xf32, #tpu.memory_space<vmem>>, vector<16x32xf32>
      %c0_19 = arith.constant 0 : index
      %c0_20 = arith.constant 0 : index
      %27 = vector.load %arg10[%c0_19, %c0_20] : memref<16x32xf32, #tpu.memory_space<vmem>>, vector<16x32xf32>
      %28 = arith.addf %26, %27 : vector<16x32xf32>
      %c0_21 = arith.constant 0 : index
      %c0_22 = arith.constant 0 : index
      %29 = vector.load %arg6[%c0_21, %c0_22] : memref<1x32xf32, #tpu.memory_space<vmem>>, vector<1x32xf32>
      %30 = vector.broadcast %29 : vector<1x32xf32> to vector<16x32xf32>
      %31 = arith.addf %28, %30 : vector<16x32xf32>
      %cst_23 = arith.constant dense<0.000000e+00> : vector<16xf32>
      %32 = vector.multi_reduction <add>, %31, %cst_23 [1] : vector<16x32xf32> to vector<16xf32>
      %33 = vector.shape_cast %32 : vector<16xf32> to vector<16x1xf32>
      %cst_24 = arith.constant 3.125000e-02 : f32
      %34 = vector.broadcast %cst_24 : f32 to vector<16x1xf32>
      %35 = arith.mulf %33, %34 : vector<16x1xf32>
      %36 = vector.broadcast %35 : vector<16x1xf32> to vector<16x32xf32>
      %37 = arith.subf %31, %36 : vector<16x32xf32>
      %38 = arith.mulf %37, %37 : vector<16x32xf32>
      %cst_25 = arith.constant dense<0.000000e+00> : vector<16xf32>
      %39 = vector.multi_reduction <add>, %38, %cst_25 [1] : vector<16x32xf32> to vector<16xf32>
      %40 = vector.shape_cast %39 : vector<16xf32> to vector<16x1xf32>
      %cst_26 = arith.constant 3.125000e-02 : f32
      %41 = vector.broadcast %cst_26 : f32 to vector<16x1xf32>
      %42 = arith.mulf %40, %41 : vector<16x1xf32>
      %cst_27 = arith.constant 9.99999974E-6 : f32
      %43 = vector.broadcast %cst_27 : f32 to vector<16x1xf32>
      %44 = arith.addf %42, %43 : vector<16x1xf32>
      %45 = math.rsqrt %44 : vector<16x1xf32>
      %46 = vector.broadcast %45 : vector<16x1xf32> to vector<16x32xf32>
      %47 = arith.mulf %37, %46 : vector<16x32xf32>
      %c0_28 = arith.constant 0 : index
      %c0_29 = arith.constant 0 : index
      %48 = vector.load %arg7[%c0_28, %c0_29] : memref<1x32xf32, #tpu.memory_space<vmem>>, vector<1x32xf32>
      %49 = vector.broadcast %48 : vector<1x32xf32> to vector<16x32xf32>
      %50 = arith.mulf %47, %49 : vector<16x32xf32>
      %c0_30 = arith.constant 0 : index
      %c0_31 = arith.constant 0 : index
      %51 = vector.load %arg8[%c0_30, %c0_31] : memref<1x32xf32, #tpu.memory_space<vmem>>, vector<1x32xf32>
      %52 = vector.broadcast %51 : vector<1x32xf32> to vector<16x32xf32>
      %53 = arith.addf %50, %52 : vector<16x32xf32>
      %c0_32 = arith.constant 0 : index
      %c0_33 = arith.constant 0 : index
      %54 = vector.load %arg9[%c0_32, %c0_33] : memref<16x32xf32, #tpu.memory_space<vmem>>, vector<16x32xf32>
      tpu.vector_store %arg9[%c0_32, %c0_33], %53 {strides = array<i32>} : memref<16x32xf32, #tpu.memory_space<vmem>>, vector<16x32xf32>,
    } else {
    }
    return
  }
  func.func @transform_0(%arg0: i32, %arg1: i32) -> (i32, i32) {
    %c0_i32 = arith.constant 0 : i32
    %c0_i32_0 = arith.constant 0 : i32
    return %arg0, %c0_i32 : i32, i32
  }
  func.func @transform_1(%arg0: i32, %arg1: i32) -> (i32, i32) {
    %c0_i32 = arith.constant 0 : i32
    %c0_i32_0 = arith.constant 0 : i32
    return %c0_i32, %arg1 : i32, i32
  }
  func.func @transform_2(%arg0: i32, %arg1: i32) -> (i32, i32) {
    %c0_i32 = arith.constant 0 : i32
    %c0_i32_0 = arith.constant 0 : i32
    return %c0_i32, %arg1 : i32, i32
  }
  func.func @transform_3(%arg0: i32, %arg1: i32) -> (i32, i32) {
    %c0_i32 = arith.constant 0 : i32
    %c0_i32_0 = arith.constant 0 : i32
    return %arg1, %c0_i32 : i32, i32
  }
  func.func @transform_4(%arg0: i32, %arg1: i32) -> (i32, i32) {
    %c0_i32 = arith.constant 0 : i32
    %c0_i32_0 = arith.constant 0 : i32
    %c0_i32_1 = arith.constant 0 : i32
    return %c0_i32, %c0_i32_0 : i32, i32
  }
  func.func @transform_5(%arg0: i32, %arg1: i32) -> (i32, i32) {
    %c0_i32 = arith.constant 0 : i32
    %c0_i32_0 = arith.constant 0 : i32
    %c0_i32_1 = arith.constant 0 : i32
    return %c0_i32, %c0_i32_0 : i32, i32
  }
  func.func @transform_6(%arg0: i32, %arg1: i32) -> (i32, i32) {
    %c0_i32 = arith.constant 0 : i32
    %c0_i32_0 = arith.constant 0 : i32
    %c0_i32_1 = arith.constant 0 : i32
    return %c0_i32, %c0_i32_0 : i32, i32
  }
  func.func @transform_7(%arg0: i32, %arg1: i32) -> (i32, i32) {
    %c0_i32 = arith.constant 0 : i32
    %c0_i32_0 = arith.constant 0 : i32
    return %arg0, %c0_i32 : i32, i32
  }
}

</mosaic_0001>

<llo_original>
// kernel: flash_cross_attn_layer.5
$region0: #{flash_cross_attn_layer.5}
  #allocation0 [shape = 'u32[]', space=smem, size = 0x4, offset = 0x4, fixed_abs, tag = 'smem constant byte address 0x4 - core index']
  #allocation1 [shape = 'u32[72,128]{1,0:T(1,128)}', space=vmem, size = 0x9000, scoped, tag = 'internal scratch']
  %s0 = inlined_call_operand.vmem [shape: bf16[16,32], index: 0, kind: input, shape index: {}]
  %s1 = inlined_call_operand.vmem [shape: bf16[32,32], index: 1, kind: input, shape index: {}]
  %s2 = inlined_call_operand.vmem [shape: f32[1,32], index: 2, kind: input, shape index: {}]
  %s3 = inlined_call_operand.vmem [shape: bf16[16,32], index: 3, kind: output, shape index: {}]
  %s4 = sld [smem:[#allocation0]]
  $region22: #{flash_cross_attn_layer.5} parent=0
    _
  %s6 = ssub.s32 1, %s4
  %s7 = scalar_select 0, %s6, %s4
  // Predicated region
  $region2: #{flash_cross_attn_layer.5} parent=0 // pred_check
    _
  $region3: #{flash_cross_attn_layer.5} parent=0 // pred_check_branch
    %9 = sbr.rel (0) target = $region5
  $region4: #{flash_cross_attn_layer.5} parent=0 // pred_region
    _
  $region5: #{flash_cross_attn_layer.5} parent=0 // pred_fallthru
    _
  // Predicated region
  $region6: #{flash_cross_attn_layer.5} parent=0 // pred_check
    _
  $region7: #{flash_cross_attn_layer.5} parent=0 // pred_check_branch
    %11 = sbr.rel (0) target = $region9
  $region8: #{flash_cross_attn_layer.5} parent=0 // pred_region
    _
  $region9: #{flash_cross_attn_layer.5} parent=0 // pred_fallthru
    _
  // Predicated region
  $region10: #{flash_cross_attn_layer.5} parent=0 // pred_check
    _
  $region11: #{flash_cross_attn_layer.5} parent=0 // pred_check_branch
    %13 = sbr.rel (0) target = $region13
  $region12: #{flash_cross_attn_layer.5} parent=0 // pred_region
    _
  $region13: #{flash_cross_attn_layer.5} parent=0 // pred_fallthru
    _
  %v15 = vld [vmem:[%s0] sm:$0xf]
  %v16 = vld [vmem:[%s0 + $0x4] sm:$0xf]
  %v17 = vld [vmem:[%s1] sm:$0xf]
  %v18 = vld [vmem:[%s1 + $0x4] sm:$0xf]
  %v19 = vld [vmem:[%s1 + $0x8] sm:$0xf]
  %v20 = vld [vmem:[%s1 + $0xc] sm:$0xf]
  %v21 = vld [vmem:[%s2] sm:$0x1]
  %v23 = vperm.slane %v21, 0
  %v27 = vunpack.c.l.b16 %v15
  %v28 = vunpack.c.l.b16 %v16
  %v29 = vpack.c.b16 %v28, %v27
  %v34 = vunpack.c.l.b16 %v17
  %v35 = vunpack.c.l.b16 %v18
  %v36 = vunpack.c.l.b16 %v19
  %v37 = vunpack.c.l.b16 %v20
  %v38 = vpack.c.b16 %v35, %v34
  %v39 = vpack.c.b16 %v37, %v36
  %vm42 = vcmask 261120
  %v44 = vsel %vm42, %v29, 0
  %46 = vmatpush.bf16.msra.mxu0 0
  %47 = vmatpush.bf16.msra.mxu0 0
  %48 = vmatpush.bf16.msra.mxu0 0
  %49 = vmatpush.bf16.msra.mxu0 0
  %50 = vmatpush.bf16.msra.mxu0 0
  %51 = vmatpush.bf16.msra.mxu0 0
  %52 = vmatpush.bf16.msra.mxu0 %v39
  %53 = vmatpush.bf16.msra.mxu0 %v38
  %54 = vmatmul.bf16.gmra.mxu0 %v44
  %v55 = vpop.f32.mrf.mxu0
  %v56 = vadd.f32 %v23, %v55
  %v57 = vpop.f32.mrf.mxu0
  %v58 = vadd.f32 %v23, %v57
  %59 = vdwg.mxu0
  %v60 = vpack.c.bf16 %v56, %v56
  %v61 = vpack.c.bf16 %v58, %v58
  %vm62 = vcmask 257024
  %63 = vst.msk [vmem:[%s3] sm:$0xf] %vm62, %v60
  %64 = vst.msk [vmem:[%s3 + $0x4] sm:$0xf] %vm62, %v61
  // Predicated region
  $region14: #{flash_cross_attn_layer.5} parent=0 // pred_check
    _
  $region15: #{flash_cross_attn_layer.5} parent=0 // pred_check_branch
    %66 = sbr.rel (0) target = $region17
  $region16: #{flash_cross_attn_layer.5} parent=0 // pred_region
    _
  $region17: #{flash_cross_attn_layer.5} parent=0 // pred_fallthru
    _
  // Predicated region
  $region18: #{flash_cross_attn_layer.5} parent=0 // pred_check
    _
  $region19: #{flash_cross_attn_layer.5} parent=0 // pred_check_branch
    %68 = sbr.rel (0) target = $region21
  $region20: #{flash_cross_attn_layer.5} parent=0 // pred_region
    _
  $region21: #{flash_cross_attn_layer.5} parent=0 // pred_fallthru
    _

// kernel: flash_cross_attn_layer.6
$region0: #{flash_cross_attn_layer.6}
  #allocation0 [shape = 'u32[]', space=smem, size = 0x4, offset = 0x4, fixed_abs, tag = 'smem constant byte address 0x4 - core index']
  #allocation1 [shape = 'u32[72,128]{1,0:T(1,128)}', space=vmem, size = 0x9000, scoped, tag = 'internal scratch']
  %s0 = inlined_call_operand.vmem [shape: bf16[64,32], index: 0, kind: input, shape index: {}]
  %s1 = inlined_call_operand.vmem [shape: bf16[32,32], index: 1, kind: input, shape index: {}]
  %s2 = inlined_call_operand.vmem [shape: f32[1,32], index: 2, kind: input, shape index: {}]
  %s3 = inlined_call_operand.vmem [shape: bf16[32,32], index: 3, kind: input, shape index: {}]
  %s4 = inlined_call_operand.vmem [shape: f32[1,32], index: 4, kind: input, shape index: {}]
  %s5 = inlined_call_operand.vmem [shape: bf16[64,32], index: 5, kind: output, shape index: {0}]
  %s6 = inlined_call_operand.vmem [shape: bf16[64,32], index: 6, kind: output, shape index: {1}]
  %7 = xla_tuple %s5, %s6
  %s8 = sld [smem:[#allocation0]]
  $region38: #{flash_cross_attn_layer.6} parent=0
    _
  %s10 = ssub.s32 1, %s8
  %s11 = scalar_select 0, %s10, %s8
  // Predicated region
  $region2: #{flash_cross_attn_layer.6} parent=0 // pred_check
    _
  $region3: #{flash_cross_attn_layer.6} parent=0 // pred_check_branch
    %13 = sbr.rel (0) target = $region5
  $region4: #{flash_cross_attn_layer.6} parent=0 // pred_region
    _
  $region5: #{flash_cross_attn_layer.6} parent=0 // pred_fallthru
    _
  // Predicated region
  $region6: #{flash_cross_attn_layer.6} parent=0 // pred_check
    _
  $region7: #{flash_cross_attn_layer.6} parent=0 // pred_check_branch
    %15 = sbr.rel (0) target = $region9
  $region8: #{flash_cross_attn_layer.6} parent=0 // pred_region
    _
  $region9: #{flash_cross_attn_layer.6} parent=0 // pred_fallthru
    _
  // Predicated region
  $region10: #{flash_cross_attn_layer.6} parent=0 // pred_check
    _
  $region11: #{flash_cross_attn_layer.6} parent=0 // pred_check_branch
    %17 = sbr.rel (0) target = $region13
  $region12: #{flash_cross_attn_layer.6} parent=0 // pred_region
    _
  $region13: #{flash_cross_attn_layer.6} parent=0 // pred_fallthru
    _
  // Predicated region
  $region14: #{flash_cross_attn_layer.6} parent=0 // pred_check
    _
  $region15: #{flash_cross_attn_layer.6} parent=0 // pred_check_branch
    %19 = sbr.rel (0) target = $region17
  $region16: #{flash_cross_attn_layer.6} parent=0 // pred_region
    _
  $region17: #{flash_cross_attn_layer.6} parent=0 // pred_fallthru
    _
  // Predicated region
  $region18: #{flash_cross_attn_layer.6} parent=0 // pred_check
    _
  $region19: #{flash_cross_attn_layer.6} parent=0 // pred_check_branch
    %21 = sbr.rel (0) target = $region21
  $region20: #{flash_cross_attn_layer.6} parent=0 // pred_region
    _
  $region21: #{flash_cross_attn_layer.6} parent=0 // pred_fallthru
    _
  %v23 = vld [vmem:[%s0] sm:$0xf]
  %v24 = vld [vmem:[%s0 + $0x4] sm:$0xf]
  %v25 = vld [vmem:[%s0 + $0x8] sm:$0xf]
  %v26 = vld [vmem:[%s0 + $0xc] sm:$0xf]
  %v27 = vld [vmem:[%s0 + $0x10] sm:$0xf]
  %v28 = vld [vmem:[%s0 + $0x14] sm:$0xf]
  %v29 = vld [vmem:[%s0 + $0x18] sm:$0xf]
  %v30 = vld [vmem:[%s0 + $0x1c] sm:$0xf]
  %v31 = vld [vmem:[%s1] sm:$0xf]
  %v32 = vld [vmem:[%s1 + $0x4] sm:$0xf]
  %v33 = vld [vmem:[%s1 + $0x8] sm:$0xf]
  %v34 = vld [vmem:[%s1 + $0xc] sm:$0xf]
  %v35 = vld [vmem:[%s2] sm:$0x1]
  %v37 = vperm.slane %v35, 0
  %v47 = vunpack.c.l.b16 %v23
  %v48 = vunpack.c.l.b16 %v24
  %v49 = vunpack.c.l.b16 %v25
  %v50 = vunpack.c.l.b16 %v26
  %v51 = vunpack.c.l.b16 %v27
  %v52 = vunpack.c.l.b16 %v28
  %v53 = vunpack.c.l.b16 %v29
  %v54 = vunpack.c.l.b16 %v30
  %v55 = vpack.c.b16 %v48, %v47
  %v56 = vpack.c.b16 %v50, %v49
  %v57 = vpack.c.b16 %v52, %v51
  %v58 = vpack.c.b16 %v54, %v53
  %v63 = vunpack.c.l.b16 %v31
  %v64 = vunpack.c.l.b16 %v32
  %v65 = vunpack.c.l.b16 %v33
  %v66 = vunpack.c.l.b16 %v34
  %v67 = vpack.c.b16 %v64, %v63
  %v68 = vpack.c.b16 %v66, %v65
  %vm71 = vcmask 261120
  %v73 = vsel %vm71, %v55, 0
  %v76 = vsel %vm71, %v56, 0
  %v79 = vsel %vm71, %v57, 0
  %v82 = vsel %vm71, %v58, 0
  %84 = vmatpush.bf16.msra.mxu0 0
  %85 = vmatpush.bf16.msra.mxu0 0
  %86 = vmatpush.bf16.msra.mxu0 0
  %87 = vmatpush.bf16.msra.mxu0 0
  %88 = vmatpush.bf16.msra.mxu0 0
  %89 = vmatpush.bf16.msra.mxu0 0
  %90 = vmatpush.bf16.msra.mxu0 %v68
  %91 = vmatpush.bf16.msra.mxu0 %v67
  %92 = vmatmul.bf16.gmra.mxu0 %v73
  %v93 = vpop.f32.mrf.mxu0
  %v94 = vadd.f32 %v37, %v93
  %v95 = vpop.f32.mrf.mxu0
  %v96 = vadd.f32 %v37, %v95
  %97 = vmatmul.bf16.gmra.mxu0 %v76
  %v98 = vpop.f32.mrf.mxu0
  %v99 = vadd.f32 %v37, %v98
  %v100 = vpop.f32.mrf.mxu0
  %v101 = vadd.f32 %v37, %v100
  %102 = vmatmul.bf16.gmra.mxu0 %v79
  %v103 = vpop.f32.mrf.mxu0
  %v104 = vadd.f32 %v37, %v103
  %v105 = vpop.f32.mrf.mxu0
  %v106 = vadd.f32 %v37, %v105
  %107 = vmatmul.bf16.gmra.mxu0 %v82
  %v108 = vpop.f32.mrf.mxu0
  %v109 = vadd.f32 %v37, %v108
  %v110 = vpop.f32.mrf.mxu0
  %v111 = vadd.f32 %v37, %v110
  %112 = vdwg.mxu0
  %v113 = vpack.c.bf16 %v94, %v94
  %v114 = vpack.c.bf16 %v96, %v96
  %v115 = vpack.c.bf16 %v99, %v99
  %v116 = vpack.c.bf16 %v101, %v101
  %v117 = vpack.c.bf16 %v104, %v104
  %v118 = vpack.c.bf16 %v106, %v106
  %v119 = vpack.c.bf16 %v109, %v109
  %v120 = vpack.c.bf16 %v111, %v111
  %vm121 = vcmask 257024
  %122 = vst.msk [vmem:[%s5] sm:$0xf] %vm121, %v113
  %123 = vst.msk [vmem:[%s5 + $0x4] sm:$0xf] %vm121, %v114
  %124 = vst.msk [vmem:[%s5 + $0x8] sm:$0xf] %vm121, %v115
  %125 = vst.msk [vmem:[%s5 + $0xc] sm:$0xf] %vm121, %v116
  %126 = vst.msk [vmem:[%s5 + $0x10] sm:$0xf] %vm121, %v117
  %127 = vst.msk [vmem:[%s5 + $0x14] sm:$0xf] %vm121, %v118
  %128 = vst.msk [vmem:[%s5 + $0x18] sm:$0xf] %vm121, %v119
  %129 = vst.msk [vmem:[%s5 + $0x1c] sm:$0xf] %vm121, %v120
  %v130 = vld [vmem:[%s3] sm:$0xf]
  %v131 = vld [vmem:[%s3 + $0x4] sm:$0xf]
  %v132 = vld [vmem:[%s3 + $0x8] sm:$0xf]
  %v133 = vld [vmem:[%s3 + $0xc] sm:$0xf]
  %v134 = vld [vmem:[%s4] sm:$0x1]
  %v136 = vperm.slane %v134, 0
  %v142 = vunpack.c.l.b16 %v130
  %v143 = vunpack.c.l.b16 %v131
  %v144 = vunpack.c.l.b16 %v132
  %v145 = vunpack.c.l.b16 %v133
  %v146 = vpack.c.b16 %v143, %v142
  %v147 = vpack.c.b16 %v145, %v144
  %150 = vmatpush.bf16.msra.mxu0 0
  %151 = vmatpush.bf16.msra.mxu0 0
  %152 = vmatpush.bf16.msra.mxu0 0
  %153 = vmatpush.bf16.msra.mxu0 0
  %154 = vmatpush.bf16.msra.mxu0 0
  %155 = vmatpush.bf16.msra.mxu0 0
  %156 = vmatpush.bf16.msra.mxu0 %v147
  %157 = vmatpush.bf16.msra.mxu0 %v146
  %158 = vmatmul.bf16.gmra.mxu0 %v73
  %v159 = vpop.f32.mrf.mxu0
  %v160 = vadd.f32 %v136, %v159
  %v161 = vpop.f32.mrf.mxu0
  %v162 = vadd.f32 %v136, %v161
  %163 = vmatmul.bf16.gmra.mxu0 %v76
  %v164 = vpop.f32.mrf.mxu0
  %v165 = vadd.f32 %v136, %v164
  %v166 = vpop.f32.mrf.mxu0
  %v167 = vadd.f32 %v136, %v166
  %168 = vmatmul.bf16.gmra.mxu0 %v79
  %v169 = vpop.f32.mrf.mxu0
  %v170 = vadd.f32 %v136, %v169
  %v171 = vpop.f32.mrf.mxu0
  %v172 = vadd.f32 %v136, %v171
  %173 = vmatmul.bf16.gmra.mxu0 %v82
  %v174 = vpop.f32.mrf.mxu0
  %v175 = vadd.f32 %v136, %v174
  %v176 = vpop.f32.mrf.mxu0
  %v177 = vadd.f32 %v136, %v176
  %178 = vdwg.mxu0
  %v179 = vpack.c.bf16 %v160, %v160
  %v180 = vpack.c.bf16 %v162, %v162
  %v181 = vpack.c.bf16 %v165, %v165
  %v182 = vpack.c.bf16 %v167, %v167
  %v183 = vpack.c.bf16 %v170, %v170
  %v184 = vpack.c.bf16 %v172, %v172
  %v185 = vpack.c.bf16 %v175, %v175
  %v186 = vpack.c.bf16 %v177, %v177
  %187 = vst.msk [vmem:[%s6] sm:$0xf] %vm121, %v179
  %188 = vst.msk [vmem:[%s6 + $0x4] sm:$0xf] %vm121, %v180
  %189 = vst.msk [vmem:[%s6 + $0x8] sm:$0xf] %vm121, %v181
  %190 = vst.msk [vmem:[%s6 + $0xc] sm:$0xf] %vm121, %v182
  %191 = vst.msk [vmem:[%s6 + $0x10] sm:$0xf] %vm121, %v183
  %192 = vst.msk [vmem:[%s6 + $0x14] sm:$0xf] %vm121, %v184
  %193 = vst.msk [vmem:[%s6 + $0x18] sm:$0xf] %vm121, %v185
  %194 = vst.msk [vmem:[%s6 + $0x1c] sm:$0xf] %vm121, %v186
  // Predicated region
  $region22: #{flash_cross_attn_layer.6} parent=0 // pred_check
    _
  $region23: #{flash_cross_attn_layer.6} parent=0 // pred_check_branch
    %196 = sbr.rel (0) target = $region25
  $region24: #{flash_cross_attn_layer.6} parent=0 // pred_region
    _
  $region25: #{flash_cross_attn_layer.6} parent=0 // pred_fallthru
    _
  // Predicated region
  $region26: #{flash_cross_attn_layer.6} parent=0 // pred_check
    _
  $region27: #{flash_cross_attn_layer.6} parent=0 // pred_check_branch
    %198 = sbr.rel (0) target = $region29
  $region28: #{flash_cross_attn_layer.6} parent=0 // pred_region
    _
  $region29: #{flash_cross_attn_layer.6} parent=0 // pred_fallthru
    _
  // Predicated region
  $region30: #{flash_cross_attn_layer.6} parent=0 // pred_check
    _
  $region31: #{flash_cross_attn_layer.6} parent=0 // pred_check_branch
    %200 = sbr.rel (0) target = $region33
  $region32: #{flash_cross_attn_layer.6} parent=0 // pred_region
    _
  $region33: #{flash_cross_attn_layer.6} parent=0 // pred_fallthru
    _
  // Predicated region
  $region34: #{flash_cross_attn_layer.6} parent=0 // pred_check
    _
  $region35: #{flash_cross_attn_layer.6} parent=0 // pred_check_branch
    %202 = sbr.rel (0) target = $region37
  $region36: #{flash_cross_attn_layer.6} parent=0 // pred_region
    _
  $region37: #{flash_cross_attn_layer.6} parent=0 // pred_fallthru
    _

// kernel: flash_cross_attn_layer.8
$region0: #{flash_cross_attn_layer.8}
  #allocation0 [shape = 'u32[]', space=smem, size = 0x4, offset = 0x4, fixed_abs, tag = 'smem constant byte address 0x4 - core index']
  #allocation1 [shape = 'u32[72,128]{1,0:T(1,128)}', space=vmem, size = 0x9000, scoped, tag = 'internal scratch']
  #allocation2 [shape = 'f32[16,32]{1,0:T(8,128)}', space=vmem, size = 0x2000, scoped, tag = 'scratch operand']
  %s0 = inlined_call_operand.vmem [shape: bf16[16,32], index: 0, kind: input, shape index: {}]
  %s1 = inlined_call_operand.vmem [shape: f32[16,32], index: 1, kind: input, shape index: {}]
  %s2 = inlined_call_operand.vmem [shape: bf16[32,32], index: 2, kind: input, shape index: {}]
  %s3 = inlined_call_operand.vmem [shape: f32[1,32], index: 3, kind: input, shape index: {}]
  %s4 = inlined_call_operand.vmem [shape: f32[1,32], index: 4, kind: input, shape index: {}]
  %s5 = inlined_call_operand.vmem [shape: f32[1,32], index: 5, kind: input, shape index: {}]
  %s6 = inlined_call_operand.vmem [shape: f32[16,32], index: 6, kind: output, shape index: {}]
  %s7 = sld [smem:[#allocation0]]
  $region42: #{flash_cross_attn_layer.8} parent=0
    _
  %s9 = ssub.s32 1, %s7
  %s10 = scalar_select 0, %s9, %s7
  // Predicated region
  $region2: #{flash_cross_attn_layer.8} parent=0 // pred_check
    _
  $region3: #{flash_cross_attn_layer.8} parent=0 // pred_check_branch
    %12 = sbr.rel (0) target = $region5
  $region4: #{flash_cross_attn_layer.8} parent=0 // pred_region
    _
  $region5: #{flash_cross_attn_layer.8} parent=0 // pred_fallthru
    _
  // Predicated region
  $region6: #{flash_cross_attn_layer.8} parent=0 // pred_check
    _
  $region7: #{flash_cross_attn_layer.8} parent=0 // pred_check_branch
    %14 = sbr.rel (0) target = $region9
  $region8: #{flash_cross_attn_layer.8} parent=0 // pred_region
    _
  $region9: #{flash_cross_attn_layer.8} parent=0 // pred_fallthru
    _
  // Predicated region
  $region10: #{flash_cross_attn_layer.8} parent=0 // pred_check
    _
  $region11: #{flash_cross_attn_layer.8} parent=0 // pred_check_branch
    %16 = sbr.rel (0) target = $region13
  $region12: #{flash_cross_attn_layer.8} parent=0 // pred_region
    _
  $region13: #{flash_cross_attn_layer.8} parent=0 // pred_fallthru
    _
  // Predicated region
  $region14: #{flash_cross_attn_layer.8} parent=0 // pred_check
    _
  $region15: #{flash_cross_attn_layer.8} parent=0 // pred_check_branch
    %18 = sbr.rel (0) target = $region17
  $region16: #{flash_cross_attn_layer.8} parent=0 // pred_region
    _
  $region17: #{flash_cross_attn_layer.8} parent=0 // pred_fallthru
    _
  // Predicated region
  $region18: #{flash_cross_attn_layer.8} parent=0 // pred_check
    _
  $region19: #{flash_cross_attn_layer.8} parent=0 // pred_check_branch
    %20 = sbr.rel (0) target = $region21
  $region20: #{flash_cross_attn_layer.8} parent=0 // pred_region
    _
  $region21: #{flash_cross_attn_layer.8} parent=0 // pred_fallthru
    _
  // Predicated region
  $region22: #{flash_cross_attn_layer.8} parent=0 // pred_check
    _
  $region23: #{flash_cross_attn_layer.8} parent=0 // pred_check_branch
    %22 = sbr.rel (0) target = $region25
  $region24: #{flash_cross_attn_layer.8} parent=0 // pred_region
    _
  $region25: #{flash_cross_attn_layer.8} parent=0 // pred_fallthru
    _
  %p24 = scmp.eq.s32.totalorder 0, 0
  // Predicated region
  $region26: #{flash_cross_attn_layer.8} parent=0 // pred_check
    %p25 = pneg %p24
  $region27: #{flash_cross_attn_layer.8} parent=0 // pred_check_branch
    %27 = sbr.rel (%p25) target = $region29
  $region28: #{flash_cross_attn_layer.8} parent=0 // pred_region
    %vm28 = vcmask 261120
    %29 = vst.msk [vmem:[#allocation2] sm:$0xff] %vm28, 0.0
    %30 = vst.msk [vmem:[#allocation2 + $0x8] sm:$0xff] %vm28, 0.0
  $region29: #{flash_cross_attn_layer.8} parent=0 // pred_fallthru
    _
  %v31 = vld [vmem:[#allocation2] sm:$0xff]
  %v32 = vld [vmem:[#allocation2 + $0x8] sm:$0xff]
  %v33 = vld [vmem:[%s0] sm:$0xf]
  %v34 = vld [vmem:[%s0 + $0x4] sm:$0xf]
  %v35 = vld [vmem:[%s2] sm:$0xf]
  %v36 = vld [vmem:[%s2 + $0x4] sm:$0xf]
  %v37 = vld [vmem:[%s2 + $0x8] sm:$0xf]
  %v38 = vld [vmem:[%s2 + $0xc] sm:$0xf]
  %v41 = vunpack.c.l.b16 %v33
  %v42 = vunpack.c.l.b16 %v34
  %v43 = vpack.c.b16 %v42, %v41
  %v48 = vunpack.c.l.b16 %v35
  %v49 = vunpack.c.l.b16 %v36
  %v50 = vunpack.c.l.b16 %v37
  %v51 = vunpack.c.l.b16 %v38
  %v52 = vpack.c.b16 %v49, %v48
  %v53 = vpack.c.b16 %v51, %v50
  %vm56 = vcmask 261120
  %v58 = vsel %vm56, %v43, 0
  %60 = vmatpush.bf16.msra.mxu0 0
  %61 = vmatpush.bf16.msra.mxu0 0
  %62 = vmatpush.bf16.msra.mxu0 0
  %63 = vmatpush.bf16.msra.mxu0 0
  %64 = vmatpush.bf16.msra.mxu0 0
  %65 = vmatpush.bf16.msra.mxu0 0
  %66 = vmatpush.bf16.msra.mxu0 %v53
  %67 = vmatpush.bf16.msra.mxu0 %v52
  %68 = vmatmul.bf16.gmra.mxu0 %v58
  %v69 = vpop.f32.mrf.mxu0
  %v70 = vadd.f32 0.0, %v69
  %v71 = vpop.f32.mrf.mxu0
  %v72 = vadd.f32 0.0, %v71
  %73 = vdwg.mxu0
  %v74 = vadd.f32 %v31, %v70
  %v75 = vadd.f32 %v32, %v72
  %76 = vst.msk [vmem:[#allocation2] sm:$0xff] %vm56, %v74
  %77 = vst.msk [vmem:[#allocation2 + $0x8] sm:$0xff] %vm56, %v75
  // Predicated region
  $region30: #{flash_cross_attn_layer.8} parent=0 // pred_check
    %p78 = pneg %p24
  $region31: #{flash_cross_attn_layer.8} parent=0 // pred_check_branch
    %80 = sbr.rel (%p78) target = $region33
  $region32: #{flash_cross_attn_layer.8} parent=0 // pred_region
    %v81 = vld [vmem:[%s1] sm:$0xff]
    %v82 = vld [vmem:[%s1 + $0x8] sm:$0xff]
    %v83 = vld [vmem:[#allocation2] sm:$0xff]
    %v84 = vld [vmem:[#allocation2 + $0x8] sm:$0xff]
    %v85 = vadd.f32 %v81, %v83
    %v86 = vadd.f32 %v82, %v84
    %v87 = vld [vmem:[%s3] sm:$0x1]
    %v89 = vperm.slane %v87, 0
    %v91 = vadd.f32 %v85, %v89
    %v92 = vadd.f32 %v86, %v89
    %v93 = vsel %vm56, %v91, 0.0
    %94 = vadd.xlane.f32.xlu0 %v93
    %v95 = vpop.xlane.xlu0 %94
    %v96 = vsel %vm56, %v92, 0.0
    %97 = vadd.xlane.f32.xlu0 %v96
    %v98 = vpop.xlane.xlu0 %97
    %v99 = vmul.f32 %v95, 0.03125
    %v100 = vmul.f32 %v98, 0.03125
    %v101 = vsub.f32 %v91, %v99
    %v102 = vsub.f32 %v92, %v100
    %v103 = vmul.f32 %v101, %v101
    %v104 = vmul.f32 %v102, %v102
    %v105 = vsel %vm56, %v103, 0.0
    %106 = vadd.xlane.f32.xlu0 %v105
    %v107 = vpop.xlane.xlu0 %106
    %v108 = vsel %vm56, %v104, 0.0
    %109 = vadd.xlane.f32.xlu0 %v108
    %v110 = vpop.xlane.xlu0 %109
    %v111 = vmul.f32 %v107, 0.03125
    %v112 = vmul.f32 %v110, 0.03125
    %v113 = vadd.f32 %v111, 1e-05
    %v114 = vadd.f32 %v112, 1e-05
    %v115 = vrsqrt.pop %v113
    %v116 = vmul.f32 %v115, %v113
    %v117 = vmul.f32 %v116, %v115
    %v118 = vmul.f32 0.5, %v117
    %v119 = vsub.f32 1.5, %v118
    %v120 = vmul.f32 %v115, %v119
    %vm121 = vweird.f32 %v113
    %vm122 = vweird.f32 %v115
    %vm123 = vmor %vm121, %vm122
    %v124 = vsel %vm123, %v115, %v120
    %v125 = vrsqrt.pop %v114
    %v126 = vmul.f32 %v125, %v114
    %v127 = vmul.f32 %v126, %v125
    %v128 = vmul.f32 0.5, %v127
    %v129 = vsub.f32 1.5, %v128
    %v130 = vmul.f32 %v125, %v129
    %vm131 = vweird.f32 %v114
    %vm132 = vweird.f32 %v125
    %vm133 = vmor %vm131, %vm132
    %v134 = vsel %vm133, %v125, %v130
    %v135 = vmul.f32 %v101, %v124
    %v136 = vmul.f32 %v102, %v134
    %v137 = vld [vmem:[%s4] sm:$0x1]
    %v139 = vperm.slane %v137, 0
    %v141 = vmul.f32 %v135, %v139
    %v142 = vmul.f32 %v136, %v139
    %v143 = vld [vmem:[%s5] sm:$0x1]
    %v145 = vperm.slane %v143, 0
    %v147 = vadd.f32 %v141, %v145
    %v148 = vadd.f32 %v142, %v145
    %149 = vst.msk [vmem:[%s6] sm:$0xff] %vm56, %v147
    %150 = vst.msk [vmem:[%s6 + $0x8] sm:$0xff] %vm56, %v148
  $region33: #{flash_cross_attn_layer.8} parent=0 // pred_fallthru
    _
  // Predicated region
  $region34: #{flash_cross_attn_layer.8} parent=0 // pred_check
    _
  $region35: #{flash_cross_attn_layer.8} parent=0 // pred_check_branch
    %152 = sbr.rel (0) target = $region37
  $region36: #{flash_cross_attn_layer.8} parent=0 // pred_region
    _
  $region37: #{flash_cross_attn_layer.8} parent=0 // pred_fallthru
    _
  // Predicated region
  $region38: #{flash_cross_attn_layer.8} parent=0 // pred_check
    _
  $region39: #{flash_cross_attn_layer.8} parent=0 // pred_check_branch
    %154 = sbr.rel (0) target = $region41
  $region40: #{flash_cross_attn_layer.8} parent=0 // pred_region
    _
  $region41: #{flash_cross_attn_layer.8} parent=0 // pred_fallthru
    _

// kernel: flash_cross_attn_layer.7
$region0: #{flash_cross_attn_layer.7}
  #allocation0 [shape = 'u32[]', space=smem, size = 0x4, offset = 0x4, fixed_abs, tag = 'smem constant byte address 0x4 - core index']
  #allocation1 [shape = 'u32[72,128]{1,0:T(1,128)}', space=vmem, size = 0x9000, scoped, tag = 'internal scratch']
  #allocation2 [shape = 'f32[8,32]{1,0:T(8,128)}', space=vmem, size = 0x1000, scoped, tag = 'scratch operand']
  #allocation3 [shape = 'f32[4,8,1]{2,1,0:T(8,128)}', space=vmem, size = 0x4000, scoped, tag = 'scratch operand']
  #allocation4 [shape = 'f32[4,8,1]{2,1,0:T(8,128)}', space=vmem, size = 0x4000, scoped, tag = 'scratch operand']
  %s0 = inlined_call_operand.vmem [shape: bf16[2,8,32], index: 0, kind: input, shape index: {}]
  %s1 = inlined_call_operand.vmem [shape: bf16[2,32,32], index: 1, kind: input, shape index: {}]
  %s2 = inlined_call_operand.vmem [shape: bf16[2,32,32], index: 2, kind: input, shape index: {}]
  %s3 = inlined_call_operand.vmem [shape: bf16[2,8,32], index: 3, kind: output, shape index: {}]
  %s4 = sld [smem:[#allocation0]]
  $region53: #{flash_cross_attn_layer.7} parent=0
    _
  %s6 = ssub.s32 1, %s4
  %s7 = scalar_select 0, %s6, %s4
  loop: start=0, step=1, limit=6
  $region2: #{flash_cross_attn_layer.7} parent=0 // loop_pre_header
    _
  $region3: #{flash_cross_attn_layer.7} parent=0 // loop_header
    %s9 = sphi 0, %s13
    %p10 = scmp.ge.s32.totalorder %s9, 6
    %s16 = sphi 0, %s35
    %s17 = sphi 0, %s31
    %s18 = sphi 0, %s27
    %s19 = sphi 0, %s16
    %s20 = sphi 0, %s17
    %s21 = sphi 0, %s18
    %s22 = sphi 0, %s19
    %s23 = sphi 0, %s20
    %s24 = sphi 0, %s21
    %s40 = sphi 0, %s42
    %s43 = sphi 0, %s40
    %s44 = sphi 0, %s43
    %s60 = sphi 0, %s44
    %s68 = sphi 0, %s70
    %s71 = sphi 0, %s68
    %s72 = sphi 0, %s71
    %s88 = sphi 0, %s72
    %s96 = sphi 0, %s98
    %s99 = sphi 0, %s96
    %s100 = sphi 0, %s99
    %s116 = sphi 0, %s100
    %s124 = sphi 0, %s126
    %s127 = sphi 0, %s124
    %s128 = sphi 0, %s127
    %s144 = sphi 0, %s128
  $region4: #{flash_cross_attn_layer.7} parent=0 // loop_header_branch
    %12 = sbr.rel (%p10) target = $region8
  $region5: #{flash_cross_attn_layer.7} parent=0 // loop_body
    %s14 = ssub.s32 %s9, 1
    %s15 = ssub.s32 %s9, 2
    %s25 = sadd.s32 1, %s18
    %p26 = scmp.ge.s32.totalorder %s25, 2
    %s27 = scalar_select %p26, 0, %s25
    %s28 = sadd.s32 1, %s17
    %s29 = scalar_select %p26, %s28, %s17
    %p30 = scmp.ge.s32.totalorder %s29, 1
    %s31 = scalar_select %p30, 0, %s29
    %s32 = sadd.s32 1, %s16
    %s33 = scalar_select %p30, %s32, %s16
    %p34 = scmp.ge.s32.totalorder %s33, 2
    %s35 = scalar_select %p34, 0, %s33
    %s36 = ssub.s32 %s16, %s35
    %s37 = ssub.s32 %s17, %s31
    %s38 = sor.u32 %s36, %s37
    %p39 = scmp.eq.s32.totalorder %s38, 0
    %s41 = sadd.s32 %s40, 1
    %s42 = scalar_select %p39, %s40, %s41
    %p45 = pneg %p39
    %p46 = scmp.eq.s32.totalorder %s9, 3
    %p47 = por %p45, %p46
    %p48 = scmp.ne.s32.totalorder %s40, %s43
    %p49 = scmp.eq.s32.totalorder %s9, 0
    %p50 = por %p48, %p49
    %p51 = scmp.ne.s32.totalorder %s40, %s43
    %p52 = scmp.eq.s32.totalorder %s14, 3
    %p53 = por %p51, %p52
    %p54 = scmp.ne.s32.totalorder %s43, %s44
    %p55 = scmp.eq.s32.totalorder %s14, 0
    %p56 = por %p54, %p55
    %p57 = scmp.ne.s32.totalorder %s43, %s44
    %p58 = scmp.eq.s32.totalorder %s15, 3
    %p59 = por %p57, %p58
    %p61 = scmp.ne.s32.totalorder %s44, %s60
    %p62 = scmp.eq.s32.totalorder %s15, 0
    %p63 = por %p61, %p62
    %s64 = ssub.s32 %s16, %s35
    %s65 = ssub.s32 %s18, %s27
    %s66 = sor.u32 %s64, %s65
    %p67 = scmp.eq.s32.totalorder %s66, 0
    %s69 = sadd.s32 %s68, 1
    %s70 = scalar_select %p67, %s68, %s69
    %p73 = pneg %p67
    %p74 = scmp.eq.s32.totalorder %s9, 3
    %p75 = por %p73, %p74
    %p76 = scmp.ne.s32.totalorder %s68, %s71
    %p77 = scmp.eq.s32.totalorder %s9, 0
    %p78 = por %p76, %p77
    %p79 = scmp.ne.s32.totalorder %s68, %s71
    %p80 = scmp.eq.s32.totalorder %s14, 3
    %p81 = por %p79, %p80
    %p82 = scmp.ne.s32.totalorder %s71, %s72
    %p83 = scmp.eq.s32.totalorder %s14, 0
    %p84 = por %p82, %p83
    %p85 = scmp.ne.s32.totalorder %s71, %s72
    %p86 = scmp.eq.s32.totalorder %s15, 3
    %p87 = por %p85, %p86
    %p89 = scmp.ne.s32.totalorder %s72, %s88
    %p90 = scmp.eq.s32.totalorder %s15, 0
    %p91 = por %p89, %p90
    %s92 = ssub.s32 %s16, %s35
    %s93 = ssub.s32 %s18, %s27
    %s94 = sor.u32 %s92, %s93
    %p95 = scmp.eq.s32.totalorder %s94, 0
    %s97 = sadd.s32 %s96, 1
    %s98 = scalar_select %p95, %s96, %s97
    %p101 = pneg %p95
    %p102 = scmp.eq.s32.totalorder %s9, 3
    %p103 = por %p101, %p102
    %p104 = scmp.ne.s32.totalorder %s96, %s99
    %p105 = scmp.eq.s32.totalorder %s9, 0
    %p106 = por %p104, %p105
    %p107 = scmp.ne.s32.totalorder %s96, %s99
    %p108 = scmp.eq.s32.totalorder %s14, 3
    %p109 = por %p107, %p108
    %p110 = scmp.ne.s32.totalorder %s99, %s100
    %p111 = scmp.eq.s32.totalorder %s14, 0
    %p112 = por %p110, %p111
    %p113 = scmp.ne.s32.totalorder %s99, %s100
    %p114 = scmp.eq.s32.totalorder %s15, 3
    %p115 = por %p113, %p114
    %p117 = scmp.ne.s32.totalorder %s100, %s116
    %p118 = scmp.eq.s32.totalorder %s15, 0
    %p119 = por %p117, %p118
    %s120 = ssub.s32 %s16, %s35
    %s121 = ssub.s32 %s17, %s31
    %s122 = sor.u32 %s120, %s121
    %p123 = scmp.eq.s32.totalorder %s122, 0
    %s125 = sadd.s32 %s124, 1
    %s126 = scalar_select %p123, %s124, %s125
    %p129 = pneg %p123
    %p130 = scmp.eq.s32.totalorder %s9, 3
    %p131 = por %p129, %p130
    %p132 = scmp.ne.s32.totalorder %s124, %s127
    %p133 = scmp.eq.s32.totalorder %s9, 0
    %p134 = por %p132, %p133
    %p135 = scmp.ne.s32.totalorder %s124, %s127
    %p136 = scmp.eq.s32.totalorder %s14, 3
    %p137 = por %p135, %p136
    %p138 = scmp.ne.s32.totalorder %s127, %s128
    %p139 = scmp.eq.s32.totalorder %s14, 0
    %p140 = por %p138, %p139
    %p141 = scmp.ne.s32.totalorder %s127, %s128
    %p142 = scmp.eq.s32.totalorder %s15, 3
    %p143 = por %p141, %p142
    %p145 = scmp.ne.s32.totalorder %s128, %s144
    %p146 = scmp.eq.s32.totalorder %s15, 0
    %p147 = por %p145, %p146
    %p148 = scmp.le.s32.totalorder 1, %s9
    %p149 = scmp.lt.s32.totalorder %s9, 5
    %p150 = pnand %p148, %p149
    %p151 = pneg %p150
    // Predicated region
    $region9: #{flash_cross_attn_layer.7} parent=5 // pred_check
      _
    $region10: #{flash_cross_attn_layer.7} parent=5 // pred_check_branch
      %153 = sbr.rel (%p150) target = $region12
    $region11: #{flash_cross_attn_layer.7} parent=5 // pred_region
      %s154 = ssub.s32 %s9, 1
    $region12: #{flash_cross_attn_layer.7} parent=5 // pred_fallthru
      _
    %p155 = scmp.lt.s32.totalorder %s9, 4
    // Predicated region
    $region13: #{flash_cross_attn_layer.7} parent=5 // pred_check
      %p156 = pneg %p155
    $region14: #{flash_cross_attn_layer.7} parent=5 // pred_check_branch
      %158 = sbr.rel (%p156) target = $region16
    $region15: #{flash_cross_attn_layer.7} parent=5 // pred_region
      // Predicated region
      $region17: #{flash_cross_attn_layer.7} parent=15 // pred_check
        %p159 = pneg %p50
      $region18: #{flash_cross_attn_layer.7} parent=15 // pred_check_branch
        %161 = sbr.rel (%p159) target = $region20
      $region19: #{flash_cross_attn_layer.7} parent=15 // pred_region
        %p162 = scmp.lt.s32.totalorder %s16, 1
        %s163 = scalar_select %p162, %s16, 1
        %p164 = scmp.lt.s32.totalorder %s17, 0
        %s165 = scalar_select %p164, %s17, 0
        %s166 = sadd.s32 %s165, %s163
        %s167 = smul.addr %s166, 4
        %s168 = scalar_lea.vmem %s0, %s167
      $region20: #{flash_cross_attn_layer.7} parent=15 // pred_fallthru
        _
      // Predicated region
      $region21: #{flash_cross_attn_layer.7} parent=15 // pred_check
        %p169 = pneg %p78
      $region22: #{flash_cross_attn_layer.7} parent=15 // pred_check_branch
        %171 = sbr.rel (%p169) target = $region24
      $region23: #{flash_cross_attn_layer.7} parent=15 // pred_region
        %s172 = smul.u32 2, %s18
        %p173 = scmp.lt.s32.totalorder %s16, 1
        %s174 = scalar_select %p173, %s16, 1
        %p175 = scmp.lt.s32.totalorder %s172, 3
        %s176 = scalar_select %p175, %s172, 3
        %s177 = smul.addr %s174, 4
        %s178 = sadd.s32 %s176, %s177
        %s179 = smul.addr %s178, 4
        %s180 = scalar_lea.vmem %s1, %s179
        %s181 = smul.u32 2, %s18
      $region24: #{flash_cross_attn_layer.7} parent=15 // pred_fallthru
        _
      // Predicated region
      $region25: #{flash_cross_attn_layer.7} parent=15 // pred_check
        %p182 = pneg %p106
      $region26: #{flash_cross_attn_layer.7} parent=15 // pred_check_branch
        %184 = sbr.rel (%p182) target = $region28
      $region27: #{flash_cross_attn_layer.7} parent=15 // pred_region
        %s185 = smul.u32 2, %s18
        %p186 = scmp.lt.s32.totalorder %s16, 1
        %s187 = scalar_select %p186, %s16, 1
        %p188 = scmp.lt.s32.totalorder %s185, 3
        %s189 = scalar_select %p188, %s185, 3
        %s190 = smul.addr %s187, 4
        %s191 = sadd.s32 %s189, %s190
        %s192 = smul.addr %s191, 4
        %s193 = scalar_lea.vmem %s2, %s192
        %s194 = smul.u32 2, %s18
      $region28: #{flash_cross_attn_layer.7} parent=15 // pred_fallthru
        _
    $region16: #{flash_cross_attn_layer.7} parent=5 // pred_fallthru
      _
    %p195 = scmp.le.s32.totalorder 1, %s9
    %p196 = scmp.lt.s32.totalorder %s9, 5
    %p197 = pnand %p195, %p196
    %p198 = pneg %p197
    // Predicated region
    $region29: #{flash_cross_attn_layer.7} parent=5 // pred_check
      _
    $region30: #{flash_cross_attn_layer.7} parent=5 // pred_check_branch
      %200 = sbr.rel (%p197) target = $region32
    $region31: #{flash_cross_attn_layer.7} parent=5 // pred_region
      %s201 = ssub.s32 %s9, 1
      %p202 = scmp.lt.s32.totalorder %s19, 1
      %s203 = scalar_select %p202, %s19, 1
      %p204 = scmp.lt.s32.totalorder %s20, 0
      %s205 = scalar_select %p204, %s20, 0
      %s206 = sadd.s32 %s205, %s203
      %s207 = smul.addr %s206, 4
      %s208 = scalar_lea.vmem %s0, %s207
      %p209 = pneg %p56
      %p210 = pneg %p53
      %s211 = smul.u32 2, %s21
      %p212 = scmp.lt.s32.totalorder %s19, 1
      %s213 = scalar_select %p212, %s19, 1
      %p214 = scmp.lt.s32.totalorder %s211, 3
      %s215 = scalar_select %p214, %s211, 3
      %s216 = smul.addr %s213, 4
      %s217 = sadd.s32 %s215, %s216
      %s218 = smul.addr %s217, 4
      %s219 = scalar_lea.vmem %s1, %s218
      %p220 = pneg %p84
      %p221 = pneg %p81
      %s222 = smul.u32 2, %s21
      %p223 = scmp.lt.s32.totalorder %s19, 1
      %s224 = scalar_select %p223, %s19, 1
      %p225 = scmp.lt.s32.totalorder %s222, 3
      %s226 = scalar_select %p225, %s222, 3
      %s227 = smul.addr %s224, 4
      %s228 = sadd.s32 %s226, %s227
      %s229 = smul.addr %s228, 4
      %s230 = scalar_lea.vmem %s2, %s229
      %p231 = pneg %p112
      %p232 = pneg %p109
      %p233 = pneg %p140
      %p234 = pneg %p137
      %p235 = scmp.lt.s32.totalorder %s19, 1
      %s236 = scalar_select %p235, %s19, 1
      %p237 = scmp.lt.s32.totalorder %s20, 0
      %s238 = scalar_select %p237, %s20, 0
      %s239 = sadd.s32 %s238, %s236
      %s240 = smul.addr %s239, 4
      %s241 = scalar_lea.vmem %s3, %s240
      %p242 = scmp.lt.s32.totalorder %s19, 1
      %s243 = scalar_select %p242, %s19, 1
      %p244 = scmp.lt.s32.totalorder %s20, 0
      %s245 = scalar_select %p244, %s20, 0
      %s246 = sadd.s32 %s245, %s243
      %s247 = smul.addr %s246, 4
      %s248 = scalar_lea.vmem %s0, %s247
      %s249 = smul.u32 2, %s21
      %p250 = scmp.lt.s32.totalorder %s19, 1
      %s251 = scalar_select %p250, %s19, 1
      %p252 = scmp.lt.s32.totalorder %s249, 3
      %s253 = scalar_select %p252, %s249, 3
      %s254 = smul.addr %s251, 4
      %s255 = sadd.s32 %s253, %s254
      %s256 = smul.addr %s255, 4
      %s257 = scalar_lea.vmem %s1, %s256
      %s258 = smul.u32 2, %s21
      %s259 = smul.u32 2, %s21
      %p260 = scmp.lt.s32.totalorder %s19, 1
      %s261 = scalar_select %p260, %s19, 1
      %p262 = scmp.lt.s32.totalorder %s259, 3
      %s263 = scalar_select %p262, %s259, 3
      %s264 = smul.addr %s261, 4
      %s265 = sadd.s32 %s263, %s264
      %s266 = smul.addr %s265, 4
      %s267 = scalar_lea.vmem %s2, %s266
      %s268 = smul.u32 2, %s21
      %p269 = scmp.lt.s32.totalorder %s19, 1
      %s270 = scalar_select %p269, %s19, 1
      %p271 = scmp.lt.s32.totalorder %s20, 0
      %s272 = scalar_select %p271, %s20, 0
      %s273 = sadd.s32 %s272, %s270
      %s274 = smul.addr %s273, 4
      %s275 = scalar_lea.vmem %s3, %s274
      %p277 = scmp.eq.s32.totalorder %s21, 0
      // Predicated region
      $region33: #{flash_cross_attn_layer.7} parent=31 // pred_check
        %p278 = pneg %p277
      $region34: #{flash_cross_attn_layer.7} parent=31 // pred_check_branch
        %280 = sbr.rel (%p278) target = $region36
      $region35: #{flash_cross_attn_layer.7} parent=31 // pred_region
        %vm281 = vcmask 7168
        %282 = vst.msk [vmem:[#allocation3] sm:$0xff] %vm281, -inf
        %283 = vst.msk [vmem:[#allocation3 + $0x8] sm:$0xff] %vm281, -inf
        %284 = vst.msk [vmem:[#allocation3 + $0x10] sm:$0xff] %vm281, -inf
        %285 = vst.msk [vmem:[#allocation3 + $0x18] sm:$0xff] %vm281, -inf
        %286 = vst.msk [vmem:[#allocation4] sm:$0xff] %vm281, 0.0
        %287 = vst.msk [vmem:[#allocation4 + $0x8] sm:$0xff] %vm281, 0.0
        %288 = vst.msk [vmem:[#allocation4 + $0x10] sm:$0xff] %vm281, 0.0
        %289 = vst.msk [vmem:[#allocation4 + $0x18] sm:$0xff] %vm281, 0.0
        %vm290 = vcmask 261120
        %291 = vst.msk [vmem:[#allocation2] sm:$0xff] %vm290, 0.0
      $region36: #{flash_cross_attn_layer.7} parent=31 // pred_fallthru
        _
      %v292 = vld [vmem:[%s248] sm:$0xf]
      %v293 = vld [vmem:[%s257] sm:$0xf]
      %v294 = vld [vmem:[%s257 + $0x4] sm:$0xf]
      %v295 = vld [vmem:[%s267] sm:$0xf]
      %v296 = vld [vmem:[%s267 + $0x4] sm:$0xf]
      %v299 = vunpack.c.l.b16 %v293
      %v300 = vunpack.c.l.b16 %v294
      %v301 = vpack.c.b16 %v300, %v299
      %vm302 = vcmask 64512
      %v304 = vsel %vm302, %v292, 0
      %v307 = vsel %vm302, %v301, 0
      %309 = vmatpush.bf16.xpose.msra.mxu0 0
      %310 = vmatpush.bf16.xpose.msra.mxu0 0
      %311 = vmatpush.bf16.xpose.msra.mxu0 0
      %312 = vmatpush.bf16.xpose.msra.mxu0 0
      %313 = vmatpush.bf16.xpose.msra.mxu0 0
      %314 = vmatpush.bf16.xpose.msra.mxu0 0
      %315 = vmatpush.bf16.xpose.msra.mxu0 0
      %316 = vmatpush.bf16.xpose.msra.mxu0 %v307
      %317 = vmatmul.bf16.gmra.mxu0 %v304
      %v318 = vpop.f32.mrf.mxu0
      %v319 = vadd.f32 0.0, %v318
      %v320 = vpop.f32.mrf.mxu0
      %321 = vdwg.mxu0
      %v322 = vld [vmem:[#allocation3] sm:$0xff]
      %vm323 = vcmask 130048
      %v324 = vsel %vm323, %v319, -inf
      %325 = vmax.xlane.f32.xlu0 %v324
      %v326 = vpop.xlane.xlu0 %325
      %v327 = vmax.f32 %v322, %v326
      %v328 = vsub.f32 %v322, %v327
      %v329 = vmul.f32 %v328, 1.442695
      %v330 = vpow.pop %v329
      %v331 = vpack.c.bf16 %v319, %v319
      %v332 = vpack.c.bf16 %v327, %v327
      %334 = vset.pattern.permute.xlu0 0
      %335 = vperm.xlu0 %334, %v332
      %v336 = vpop.permute.xlu0 %335
      %v339 = vunpack.c.l.s4 839922192
      %v340 = vunpack.c.0.s8 %v339
      %v341 = vperm.slane %v336, %v340
      %v342 = vunpack.c.l.bf16 %v331
      %v343 = vunpack.c.l.bf16 %v341
      %v344 = vsub.f32 %v342, %v343
      %v345 = vpack.c.bf16 %v344, %v344
      %v346 = vunpack.c.l.bf16 %v345
      %v347 = vmul.f32 %v346, 1.442695
      %v348 = vpow.pop %v347
      %v349 = vpack.c.bf16 %v348, %v348
      %v350 = vunpack.c.l.bf16 %v349
      %v351 = vsel %vm323, %v350, 0.0
      %352 = vadd.xlane.f32.xlu0 %v351
      %v353 = vpop.xlane.xlu0 %352
      %v354 = vld [vmem:[#allocation4] sm:$0xff]
      %v355 = vmul.f32 %v330, %v354
      %v356 = vadd.f32 %v355, %v353
      %vm357 = vcmask 7168
      %358 = vst.msk [vmem:[#allocation4] sm:$0xff] %vm357, %v356
      %v359 = vld [vmem:[#allocation2] sm:$0xff]
      %361 = vset.pattern.permute.xlu0 0
      %362 = vperm.xlu0 %361, %v330
      %v363 = vpop.permute.xlu0 %362
      %v365 = vmul.f32 %v363, %v359
      %v368 = vunpack.c.l.b16 %v295
      %v369 = vunpack.c.l.b16 %v296
      %v370 = vpack.c.b16 %v369, %v368
      %v373 = vsel %vm323, %v349, 0
      %375 = vmatpush.bf16.msra.mxu0 0
      %376 = vmatpush.bf16.msra.mxu0 0
      %377 = vmatpush.bf16.msra.mxu0 0
      %378 = vmatpush.bf16.msra.mxu0 0
      %379 = vmatpush.bf16.msra.mxu0 0
      %380 = vmatpush.bf16.msra.mxu0 0
      %381 = vmatpush.bf16.msra.mxu0 0
      %382 = vmatpush.bf16.msra.mxu0 %v370
      %383 = vmatmul.bf16.gmra.mxu0 %v373
      %v384 = vpop.f32.mrf.mxu0
      %v385 = vadd.f32 0.0, %v384
      %v386 = vpop.f32.mrf.mxu0
      %387 = vdwg.mxu0
      %v388 = vadd.f32 %v365, %v385
      %389 = vst.msk [vmem:[#allocation2] sm:$0xff] %vm302, %v388
      %390 = vst.msk [vmem:[#allocation3] sm:$0xff] %vm357, %v327
      %v391 = vld [vmem:[%s248] sm:$0xf]
      %v392 = vld [vmem:[%s257] sm:$0xf]
      %v393 = vld [vmem:[%s257 + $0x4] sm:$0xf]
      %v394 = vld [vmem:[%s267] sm:$0xf]
      %v395 = vld [vmem:[%s267 + $0x4] sm:$0xf]
      %v397 = vunpack.c.l.b16 %v391
      %v398 = vpack.c.b16 %v397, %v397
      %399 = vrot.lane.b32.xlu0 %v398, 120
      %v400 = vpop.permute.xlu0 %399
      %v403 = vunpack.c.l.b16 %v392
      %v404 = vunpack.c.l.b16 %v393
      %v405 = vpack.c.b16 %v404, %v403
      %406 = vrot.lane.b32.xlu0 %v405, 120
      %v407 = vpop.permute.xlu0 %406
      %v409 = vsel %vm302, %v400, 0
      %v412 = vsel %vm302, %v407, 0
      %414 = vmatpush.bf16.xpose.msra.mxu0 0
      %415 = vmatpush.bf16.xpose.msra.mxu0 0
      %416 = vmatpush.bf16.xpose.msra.mxu0 0
      %417 = vmatpush.bf16.xpose.msra.mxu0 0
      %418 = vmatpush.bf16.xpose.msra.mxu0 0
      %419 = vmatpush.bf16.xpose.msra.mxu0 0
      %420 = vmatpush.bf16.xpose.msra.mxu0 0
      %421 = vmatpush.bf16.xpose.msra.mxu0 %v412
      %422 = vmatmul.bf16.gmra.mxu0 %v409
      %v423 = vpop.f32.mrf.mxu0
      %v424 = vadd.f32 0.0, %v423
      %v425 = vpop.f32.mrf.mxu0
      %426 = vdwg.mxu0
      %s427 = scalar_lea.vmem [#allocation3], 8
      %v428 = vld [vmem:[%s427] sm:$0xff]
      %v429 = vsel %vm323, %v424, -inf
      %430 = vmax.xlane.f32.xlu0 %v429
      %v431 = vpop.xlane.xlu0 %430
      %v432 = vmax.f32 %v428, %v431
      %v433 = vsub.f32 %v428, %v432
      %v434 = vmul.f32 %v433, 1.442695
      %v435 = vpow.pop %v434
      %v436 = vpack.c.bf16 %v424, %v424
      %v437 = vpack.c.bf16 %v432, %v432
      %439 = vset.pattern.permute.xlu0 0
      %440 = vperm.xlu0 %439, %v437
      %v441 = vpop.permute.xlu0 %440
      %v444 = vunpack.c.l.s4 839922192
      %v445 = vunpack.c.0.s8 %v444
      %v446 = vperm.slane %v441, %v445
      %v447 = vunpack.c.l.bf16 %v436
      %v448 = vunpack.c.l.bf16 %v446
      %v449 = vsub.f32 %v447, %v448
      %v450 = vpack.c.bf16 %v449, %v449
      %v451 = vunpack.c.l.bf16 %v450
      %v452 = vmul.f32 %v451, 1.442695
      %v453 = vpow.pop %v452
      %v454 = vpack.c.bf16 %v453, %v453
      %v455 = vunpack.c.l.bf16 %v454
      %v456 = vsel %vm323, %v455, 0.0
      %457 = vadd.xlane.f32.xlu0 %v456
      %v458 = vpop.xlane.xlu0 %457
      %s459 = scalar_lea.vmem [#allocation4], 8
      %v460 = vld [vmem:[%s459] sm:$0xff]
      %v461 = vmul.f32 %v435, %v460
      %v462 = vadd.f32 %v461, %v458
      %463 = vst.msk [vmem:[%s459] sm:$0xff] %vm357, %v462
      %v464 = vld [vmem:[#allocation2] sm:$0xff]
      %466 = vset.pattern.permute.xlu0 0
      %467 = vperm.xlu0 %466, %v435
      %v468 = vpop.permute.xlu0 %467
      %v470 = vmul.f32 %v468, %v464
      %v473 = vunpack.c.l.b16 %v394
      %v474 = vunpack.c.l.b16 %v395
      %v475 = vpack.c.b16 %v474, %v473
      %476 = vrot.lane.b32.xlu0 %v475, 120
      %v477 = vpop.permute.xlu0 %476
      %v480 = vsel %vm323, %v454, 0
      %482 = vmatpush.bf16.msra.mxu0 0
      %483 = vmatpush.bf16.msra.mxu0 0
      %484 = vmatpush.bf16.msra.mxu0 0
      %485 = vmatpush.bf16.msra.mxu0 0
      %486 = vmatpush.bf16.msra.mxu0 0
      %487 = vmatpush.bf16.msra.mxu0 0
      %488 = vmatpush.bf16.msra.mxu0 0
      %489 = vmatpush.bf16.msra.mxu0 %v477
      %490 = vmatmul.bf16.gmra.mxu0 %v480
      %v491 = vpop.f32.mrf.mxu0
      %v492 = vadd.f32 0.0, %v491
      %v493 = vpop.f32.mrf.mxu0
      %494 = vdwg.mxu0
      %496 = vrot.lane.b32.xlu0 %v492, 8
      %v497 = vpop.permute.xlu0 %496
      %v499 = vadd.f32 %v470, %v497
      %vm500 = vcmask 130112
      %501 = vst.msk [vmem:[#allocation2] sm:$0xff] %vm500, %v499
      %502 = vst.msk [vmem:[%s427] sm:$0xff] %vm357, %v432
      %v503 = vld [vmem:[%s248] sm:$0xf]
      %v504 = vld [vmem:[%s257] sm:$0xf]
      %v505 = vld [vmem:[%s257 + $0x4] sm:$0xf]
      %v506 = vld [vmem:[%s267] sm:$0xf]
      %v507 = vld [vmem:[%s267 + $0x4] sm:$0xf]
      %v509 = vunpack.c.l.b16 %v503
      %v510 = vpack.c.b16 %v509, %v509
      %511 = vrot.lane.b32.xlu0 %v510, 112
      %v512 = vpop.permute.xlu0 %511
      %v515 = vunpack.c.l.b16 %v504
      %v516 = vunpack.c.l.b16 %v505
      %v517 = vpack.c.b16 %v516, %v515
      %518 = vrot.lane.b32.xlu0 %v517, 112
      %v519 = vpop.permute.xlu0 %518
      %v521 = vsel %vm302, %v512, 0
      %v524 = vsel %vm302, %v519, 0
      %526 = vmatpush.bf16.xpose.msra.mxu0 0
      %527 = vmatpush.bf16.xpose.msra.mxu0 0
      %528 = vmatpush.bf16.xpose.msra.mxu0 0
      %529 = vmatpush.bf16.xpose.msra.mxu0 0
      %530 = vmatpush.bf16.xpose.msra.mxu0 0
      %531 = vmatpush.bf16.xpose.msra.mxu0 0
      %532 = vmatpush.bf16.xpose.msra.mxu0 0
      %533 = vmatpush.bf16.xpose.msra.mxu0 %v524
      %534 = vmatmul.bf16.gmra.mxu0 %v521
      %v535 = vpop.f32.mrf.mxu0
      %v536 = vadd.f32 0.0, %v535
      %v537 = vpop.f32.mrf.mxu0
      %538 = vdwg.mxu0
      %s539 = scalar_lea.vmem [#allocation3], 16
      %v540 = vld [vmem:[%s539] sm:$0xff]
      %v541 = vsel %vm323, %v536, -inf
      %542 = vmax.xlane.f32.xlu0 %v541
      %v543 = vpop.xlane.xlu0 %542
      %v544 = vmax.f32 %v540, %v543
      %v545 = vsub.f32 %v540, %v544
      %v546 = vmul.f32 %v545, 1.442695
      %v547 = vpow.pop %v546
      %v548 = vpack.c.bf16 %v536, %v536
      %v549 = vpack.c.bf16 %v544, %v544
      %551 = vset.pattern.permute.xlu0 0
      %552 = vperm.xlu0 %551, %v549
      %v553 = vpop.permute.xlu0 %552
      %v556 = vunpack.c.l.s4 839922192
      %v557 = vunpack.c.0.s8 %v556
      %v558 = vperm.slane %v553, %v557
      %v559 = vunpack.c.l.bf16 %v548
      %v560 = vunpack.c.l.bf16 %v558
      %v561 = vsub.f32 %v559, %v560
      %v562 = vpack.c.bf16 %v561, %v561
      %v563 = vunpack.c.l.bf16 %v562
      %v564 = vmul.f32 %v563, 1.442695
      %v565 = vpow.pop %v564
      %v566 = vpack.c.bf16 %v565, %v565
      %v567 = vunpack.c.l.bf16 %v566
      %v568 = vsel %vm323, %v567, 0.0
      %569 = vadd.xlane.f32.xlu0 %v568
      %v570 = vpop.xlane.xlu0 %569
      %s571 = scalar_lea.vmem [#allocation4], 16
      %v572 = vld [vmem:[%s571] sm:$0xff]
      %v573 = vmul.f32 %v547, %v572
      %v574 = vadd.f32 %v573, %v570
      %575 = vst.msk [vmem:[%s571] sm:$0xff] %vm357, %v574
      %v576 = vld [vmem:[#allocation2] sm:$0xff]
      %578 = vset.pattern.permute.xlu0 0
      %579 = vperm.xlu0 %578, %v547
      %v580 = vpop.permute.xlu0 %579
      %v582 = vmul.f32 %v580, %v576
      %v585 = vunpack.c.l.b16 %v506
      %v586 = vunpack.c.l.b16 %v507
      %v587 = vpack.c.b16 %v586, %v585
      %588 = vrot.lane.b32.xlu0 %v587, 112
      %v589 = vpop.permute.xlu0 %588
      %v592 = vsel %vm323, %v566, 0
      %594 = vmatpush.bf16.msra.mxu0 0
      %595 = vmatpush.bf16.msra.mxu0 0
      %596 = vmatpush.bf16.msra.mxu0 0
      %597 = vmatpush.bf16.msra.mxu0 0
      %598 = vmatpush.bf16.msra.mxu0 0
      %599 = vmatpush.bf16.msra.mxu0 0
      %600 = vmatpush.bf16.msra.mxu0 0
      %601 = vmatpush.bf16.msra.mxu0 %v589
      %602 = vmatmul.bf16.gmra.mxu0 %v592
      %v603 = vpop.f32.mrf.mxu0
      %v604 = vadd.f32 0.0, %v603
      %v605 = vpop.f32.mrf.mxu0
      %606 = vdwg.mxu0
      %608 = vrot.lane.b32.xlu0 %v604, 16
      %v609 = vpop.permute.xlu0 %608
      %v611 = vadd.f32 %v582, %v609
      %vm612 = vcmask 195712
      %613 = vst.msk [vmem:[#allocation2] sm:$0xff] %vm612, %v611
      %614 = vst.msk [vmem:[%s539] sm:$0xff] %vm357, %v544
      %v615 = vld [vmem:[%s248] sm:$0xf]
      %v616 = vld [vmem:[%s257] sm:$0xf]
      %v617 = vld [vmem:[%s257 + $0x4] sm:$0xf]
      %v618 = vld [vmem:[%s267] sm:$0xf]
      %v619 = vld [vmem:[%s267 + $0x4] sm:$0xf]
      %v621 = vunpack.c.l.b16 %v615
      %v622 = vpack.c.b16 %v621, %v621
      %623 = vrot.lane.b32.xlu0 %v622, 104
      %v624 = vpop.permute.xlu0 %623
      %v627 = vunpack.c.l.b16 %v616
      %v628 = vunpack.c.l.b16 %v617
      %v629 = vpack.c.b16 %v628, %v627
      %630 = vrot.lane.b32.xlu0 %v629, 104
      %v631 = vpop.permute.xlu0 %630
      %v633 = vsel %vm302, %v624, 0
      %v636 = vsel %vm302, %v631, 0
      %638 = vmatpush.bf16.xpose.msra.mxu0 0
      %639 = vmatpush.bf16.xpose.msra.mxu0 0
      %640 = vmatpush.bf16.xpose.msra.mxu0 0
      %641 = vmatpush.bf16.xpose.msra.mxu0 0
      %642 = vmatpush.bf16.xpose.msra.mxu0 0
      %643 = vmatpush.bf16.xpose.msra.mxu0 0
      %644 = vmatpush.bf16.xpose.msra.mxu0 0
      %645 = vmatpush.bf16.xpose.msra.mxu0 %v636
      %646 = vmatmul.bf16.gmra.mxu0 %v633
      %v647 = vpop.f32.mrf.mxu0
      %v648 = vadd.f32 0.0, %v647
      %v649 = vpop.f32.mrf.mxu0
      %650 = vdwg.mxu0
      %s651 = scalar_lea.vmem [#allocation3], 24
      %v652 = vld [vmem:[%s651] sm:$0xff]
      %v653 = vsel %vm323, %v648, -inf
      %654 = vmax.xlane.f32.xlu0 %v653
      %v655 = vpop.xlane.xlu0 %654
      %v656 = vmax.f32 %v652, %v655
      %v657 = vsub.f32 %v652, %v656
      %v658 = vmul.f32 %v657, 1.442695
      %v659 = vpow.pop %v658
      %v660 = vpack.c.bf16 %v648, %v648
      %v661 = vpack.c.bf16 %v656, %v656
      %663 = vset.pattern.permute.xlu0 0
      %664 = vperm.xlu0 %663, %v661
      %v665 = vpop.permute.xlu0 %664
      %v668 = vunpack.c.l.s4 839922192
      %v669 = vunpack.c.0.s8 %v668
      %v670 = vperm.slane %v665, %v669
      %v671 = vunpack.c.l.bf16 %v660
      %v672 = vunpack.c.l.bf16 %v670
      %v673 = vsub.f32 %v671, %v672
      %v674 = vpack.c.bf16 %v673, %v673
      %v675 = vunpack.c.l.bf16 %v674
      %v676 = vmul.f32 %v675, 1.442695
      %v677 = vpow.pop %v676
      %v678 = vpack.c.bf16 %v677, %v677
      %v679 = vunpack.c.l.bf16 %v678
      %v680 = vsel %vm323, %v679, 0.0
      %681 = vadd.xlane.f32.xlu0 %v680
      %v682 = vpop.xlane.xlu0 %681
      %s683 = scalar_lea.vmem [#allocation4], 24
      %v684 = vld [vmem:[%s683] sm:$0xff]
      %v685 = vmul.f32 %v659, %v684
      %v686 = vadd.f32 %v685, %v682
      %687 = vst.msk [vmem:[%s683] sm:$0xff] %vm357, %v686
      %v688 = vld [vmem:[#allocation2] sm:$0xff]
      %690 = vset.pattern.permute.xlu0 0
      %691 = vperm.xlu0 %690, %v659
      %v692 = vpop.permute.xlu0 %691
      %v694 = vmul.f32 %v692, %v688
      %v697 = vunpack.c.l.b16 %v618
      %v698 = vunpack.c.l.b16 %v619
      %v699 = vpack.c.b16 %v698, %v697
      %700 = vrot.lane.b32.xlu0 %v699, 104
      %v701 = vpop.permute.xlu0 %700
      %v704 = vsel %vm323, %v678, 0
      %706 = vmatpush.bf16.msra.mxu0 0
      %707 = vmatpush.bf16.msra.mxu0 0
      %708 = vmatpush.bf16.msra.mxu0 0
      %709 = vmatpush.bf16.msra.mxu0 0
      %710 = vmatpush.bf16.msra.mxu0 0
      %711 = vmatpush.bf16.msra.mxu0 0
      %712 = vmatpush.bf16.msra.mxu0 0
      %713 = vmatpush.bf16.msra.mxu0 %v701
      %714 = vmatmul.bf16.gmra.mxu0 %v704
      %v715 = vpop.f32.mrf.mxu0
      %v716 = vadd.f32 0.0, %v715
      %v717 = vpop.f32.mrf.mxu0
      %718 = vdwg.mxu0
      %720 = vrot.lane.b32.xlu0 %v716, 24
      %v721 = vpop.permute.xlu0 %720
      %v723 = vadd.f32 %v694, %v721
      %vm724 = vcmask 261312
      %725 = vst.msk [vmem:[#allocation2] sm:$0xff] %vm724, %v723
      %726 = vst.msk [vmem:[%s651] sm:$0xff] %vm357, %v656
      %p727 = scmp.eq.s32.totalorder %s21, 1
      // Predicated region
      $region37: #{flash_cross_attn_layer.7} parent=31 // pred_check
        %p728 = pneg %p727
      $region38: #{flash_cross_attn_layer.7} parent=31 // pred_check_branch
        %730 = sbr.rel (%p728) target = $region40
      $region39: #{flash_cross_attn_layer.7} parent=31 // pred_region
        %v731 = vld [vmem:[#allocation2] sm:$0xff]
        %v732 = vld [vmem:[#allocation4] sm:$0xff]
        %v733 = vrcp.pop %v732
        %735 = vset.pattern.permute.xlu0 0
        %736 = vperm.xlu0 %735, %v733
        %v737 = vpop.permute.xlu0 %736
        %v739 = vmul.f32 %v731, %v737
        %v740 = vpack.c.bf16 %v739, %v739
        %vm741 = vcmask 60416
        %742 = vst.msk [vmem:[%s275] sm:$0xf] %vm741, %v740
        %v743 = vld [vmem:[#allocation2] sm:$0xff]
        %v744 = vld [vmem:[%s459] sm:$0xff]
        %v745 = vrcp.pop %v744
        %747 = vset.pattern.permute.xlu0 0
        %748 = vperm.xlu0 %747, %v745
        %v749 = vpop.permute.xlu0 %748
        %v751 = vmul.f32 %v743, %v749
        %v752 = vpack.c.bf16 %v751, %v751
        %vm753 = vcmask 126016
        %754 = vst.msk [vmem:[%s275] sm:$0xf] %vm753, %v752
        %v755 = vld [vmem:[#allocation2] sm:$0xff]
        %v756 = vld [vmem:[%s571] sm:$0xff]
        %v757 = vrcp.pop %v756
        %759 = vset.pattern.permute.xlu0 0
        %760 = vperm.xlu0 %759, %v757
        %v761 = vpop.permute.xlu0 %760
        %v763 = vmul.f32 %v755, %v761
        %v764 = vpack.c.bf16 %v763, %v763
        %vm765 = vcmask 191616
        %766 = vst.msk [vmem:[%s275] sm:$0xf] %vm765, %v764
        %v767 = vld [vmem:[#allocation2] sm:$0xff]
        %v768 = vld [vmem:[%s683] sm:$0xff]
        %v769 = vrcp.pop %v768
        %771 = vset.pattern.permute.xlu0 0
        %772 = vperm.xlu0 %771, %v769
        %v773 = vpop.permute.xlu0 %772
        %v775 = vmul.f32 %v767, %v773
        %v776 = vpack.c.bf16 %v775, %v775
        %vm777 = vcmask 257216
        %778 = vst.msk [vmem:[%s275] sm:$0xf] %vm777, %v776
      $region40: #{flash_cross_attn_layer.7} parent=31 // pred_fallthru
        _
      %p779 = scmp.lt.s32.totalorder %s19, 1
      %s780 = scalar_select %p779, %s19, 1
      %p781 = scmp.lt.s32.totalorder %s20, 0
      %s782 = scalar_select %p781, %s20, 0
      %s783 = sadd.s32 %s782, %s780
      %s784 = smul.addr %s783, 4
      %s785 = scalar_lea.vmem %s3, %s784
      // Predicated region
      $region41: #{flash_cross_attn_layer.7} parent=31 // pred_check
        %p786 = pneg %p137
      $region42: #{flash_cross_attn_layer.7} parent=31 // pred_check_branch
        %788 = sbr.rel (%p786) target = $region44
      $region43: #{flash_cross_attn_layer.7} parent=31 // pred_region
        _
      $region44: #{flash_cross_attn_layer.7} parent=31 // pred_fallthru
        _
    $region32: #{flash_cross_attn_layer.7} parent=5 // pred_fallthru
      _
    %p789 = scmp.le.s32.totalorder 2, %s9
    // Predicated region
    $region45: #{flash_cross_attn_layer.7} parent=5 // pred_check
      %p790 = pneg %p789
    $region46: #{flash_cross_attn_layer.7} parent=5 // pred_check_branch
      %792 = sbr.rel (%p790) target = $region48
    $region47: #{flash_cross_attn_layer.7} parent=5 // pred_region
      %s793 = ssub.s32 %s9, 2
      // Predicated region
      $region49: #{flash_cross_attn_layer.7} parent=47 // pred_check
        %p794 = pneg %p143
      $region50: #{flash_cross_attn_layer.7} parent=47 // pred_check_branch
        %796 = sbr.rel (%p794) target = $region52
      $region51: #{flash_cross_attn_layer.7} parent=47 // pred_region
        %p797 = scmp.lt.s32.totalorder %s22, 1
        %s798 = scalar_select %p797, %s22, 1
        %p799 = scmp.lt.s32.totalorder %s23, 0
        %s800 = scalar_select %p799, %s23, 0
        %s801 = sadd.s32 %s800, %s798
        %s802 = smul.addr %s801, 4
        %s803 = scalar_lea.vmem %s3, %s802
      $region52: #{flash_cross_attn_layer.7} parent=47 // pred_fallthru
        _
    $region48: #{flash_cross_attn_layer.7} parent=5 // pred_fallthru
      _
  $region6: #{flash_cross_attn_layer.7} parent=0 // loop_footer
    %s13 = sadd.s32 1, %s9
  $region7: #{flash_cross_attn_layer.7} parent=0 // loop_footer_branch
    %8 = sbr.rel target = $region3
  $region8: #{flash_cross_attn_layer.7} parent=0 // loop_exit
    _

// kernel: flash_cross_attn_layer.9
$region0: #{flash_cross_attn_layer.9}
  #allocation0 [shape = 'u32[]', space=smem, size = 0x4, offset = 0x4, fixed_abs, tag = 'smem constant byte address 0x4 - core index']
  #allocation1 [shape = 'u32[72,128]{1,0:T(1,128)}', space=vmem, size = 0x9000, scoped, tag = 'internal scratch']
  #allocation2 [shape = 'f32[16,32]{1,0:T(8,128)}', space=vmem, size = 0x2000, scoped, tag = 'scratch operand']
  #allocation3 [shape = 'bf16[16,32]{1,0:T(8,128)(2,1)}', space=vmem, size = 0x1000, scoped, tag = 'scratch operand']
  %s0 = inlined_call_operand.vmem [shape: f32[16,32], index: 0, kind: input, shape index: {}]
  %s1 = inlined_call_operand.vmem [shape: bf16[32,256], index: 1, kind: input, shape index: {}]
  %s2 = inlined_call_operand.vmem [shape: f32[1,256], index: 2, kind: input, shape index: {}]
  %s3 = inlined_call_operand.vmem [shape: bf16[256,32], index: 3, kind: input, shape index: {}]
  %s4 = inlined_call_operand.vmem [shape: f32[1,32], index: 4, kind: input, shape index: {}]
  %s5 = inlined_call_operand.vmem [shape: f32[1,32], index: 5, kind: input, shape index: {}]
  %s6 = inlined_call_operand.vmem [shape: f32[1,32], index: 6, kind: input, shape index: {}]
  %s7 = inlined_call_operand.hbm [shape: f32[16,32], index: 7, kind: output, shape index: {}]
  %s8 = sld [smem:[#allocation0]]
  $region110: #{flash_cross_attn_layer.9} parent=0
    _
  %s10 = ssub.s32 1, %s8
  %s11 = scalar_select 0, %s10, %s8
  $region1: #{flash_cross_attn_layer.9} parent=0
    #allocation4 [shape = 'u8[16384]{0}', space=vmem, size = 0x4000, scoped, tag = 'input window, operand 1']
    #allocation5 [shape = 'u8[8192]{0}', space=vmem, size = 0x2000, scoped, tag = 'output window, operand 0, single buffered']
    #allocation6 [shape = 's32[2]{0}', space=sflag, size = 0x8, scoped, tag = 'scoped memory for flash_cross_attn_layer.9']
    %12 = vsyncpa [#allocation6], 0
    loop: start=0, step=1, limit=4
    $region2: #{flash_cross_attn_layer.9} parent=1 // loop_pre_header
      _
    $region3: #{flash_cross_attn_layer.9} parent=1 // loop_header
      %s14 = sphi 0, %s18
      %p15 = scmp.ge.s32.totalorder %s14, 4
      %s21 = sphi 0, %s33
      %s22 = sphi 0, %s29
      %s23 = sphi 0, %s21
      %s24 = sphi 0, %s22
      %s25 = sphi 0, %s23
      %s26 = sphi 0, %s24
      %s36 = sphi 0, %s38
      %s39 = sphi 0, %s36
      %s40 = sphi 0, %s39
      %s56 = sphi 0, %s40
      %s62 = sphi 0, %s64
      %s65 = sphi 0, %s62
      %s66 = sphi 0, %s65
      %s82 = sphi 0, %s66
      %s88 = sphi 0, %s90
      %s91 = sphi 0, %s88
      %s92 = sphi 0, %s91
      %s108 = sphi 0, %s92
      %s114 = sphi 0, %s116
      %s117 = sphi 0, %s114
      %s118 = sphi 0, %s117
      %s134 = sphi 0, %s118
      %s138 = sphi 0, %s138
      %s140 = sphi 0, %s138
      %s141 = sphi 0, %s140
      %s155 = sphi 0, %s141
      %s159 = sphi 0, %s159
      %s161 = sphi 0, %s159
      %s162 = sphi 0, %s161
      %s176 = sphi 0, %s162
      %s180 = sphi 0, %s180
      %s182 = sphi 0, %s180
      %s183 = sphi 0, %s182
      %s197 = sphi 0, %s183
      %s203 = sphi 0, %s205
      %s206 = sphi 0, %s203
      %s207 = sphi 0, %s206
      %s223 = sphi 0, %s207
    $region4: #{flash_cross_attn_layer.9} parent=1 // loop_header_branch
      %17 = sbr.rel (%p15) target = $region8
    $region5: #{flash_cross_attn_layer.9} parent=1 // loop_body
      %s19 = ssub.s32 %s14, 1
      %s20 = ssub.s32 %s14, 2
      %s27 = sadd.s32 1, %s22
      %p28 = scmp.ge.s32.totalorder %s27, 2
      %s29 = scalar_select %p28, 0, %s27
      %s30 = sadd.s32 1, %s21
      %s31 = scalar_select %p28, %s30, %s21
      %p32 = scmp.ge.s32.totalorder %s31, 1
      %s33 = scalar_select %p32, 0, %s31
      %s34 = ssub.s32 %s21, %s33
      %p35 = scmp.eq.s32.totalorder %s34, 0
      %s37 = sadd.s32 %s36, 1
      %s38 = scalar_select %p35, %s36, %s37
      %p41 = pneg %p35
      %p42 = scmp.eq.s32.totalorder %s14, 1
      %p43 = por %p41, %p42
      %p44 = scmp.ne.s32.totalorder %s36, %s39
      %p45 = scmp.eq.s32.totalorder %s14, 0
      %p46 = por %p44, %p45
      %p47 = scmp.ne.s32.totalorder %s36, %s39
      %p48 = scmp.eq.s32.totalorder %s19, 1
      %p49 = por %p47, %p48
      %p50 = scmp.ne.s32.totalorder %s39, %s40
      %p51 = scmp.eq.s32.totalorder %s19, 0
      %p52 = por %p50, %p51
      %p53 = scmp.ne.s32.totalorder %s39, %s40
      %p54 = scmp.eq.s32.totalorder %s20, 1
      %p55 = por %p53, %p54
      %p57 = scmp.ne.s32.totalorder %s40, %s56
      %p58 = scmp.eq.s32.totalorder %s20, 0
      %p59 = por %p57, %p58
      %s60 = ssub.s32 %s22, %s29
      %p61 = scmp.eq.s32.totalorder %s60, 0
      %s63 = sadd.s32 %s62, 1
      %s64 = scalar_select %p61, %s62, %s63
      %p67 = pneg %p61
      %p68 = scmp.eq.s32.totalorder %s14, 1
      %p69 = por %p67, %p68
      %p70 = scmp.ne.s32.totalorder %s62, %s65
      %p71 = scmp.eq.s32.totalorder %s14, 0
      %p72 = por %p70, %p71
      %p73 = scmp.ne.s32.totalorder %s62, %s65
      %p74 = scmp.eq.s32.totalorder %s19, 1
      %p75 = por %p73, %p74
      %p76 = scmp.ne.s32.totalorder %s65, %s66
      %p77 = scmp.eq.s32.totalorder %s19, 0
      %p78 = por %p76, %p77
      %p79 = scmp.ne.s32.totalorder %s65, %s66
      %p80 = scmp.eq.s32.totalorder %s20, 1
      %p81 = por %p79, %p80
      %p83 = scmp.ne.s32.totalorder %s66, %s82
      %p84 = scmp.eq.s32.totalorder %s20, 0
      %p85 = por %p83, %p84
      %s86 = ssub.s32 %s22, %s29
      %p87 = scmp.eq.s32.totalorder %s86, 0
      %s89 = sadd.s32 %s88, 1
      %s90 = scalar_select %p87, %s88, %s89
      %p93 = pneg %p87
      %p94 = scmp.eq.s32.totalorder %s14, 1
      %p95 = por %p93, %p94
      %p96 = scmp.ne.s32.totalorder %s88, %s91
      %p97 = scmp.eq.s32.totalorder %s14, 0
      %p98 = por %p96, %p97
      %p99 = scmp.ne.s32.totalorder %s88, %s91
      %p100 = scmp.eq.s32.totalorder %s19, 1
      %p101 = por %p99, %p100
      %p102 = scmp.ne.s32.totalorder %s91, %s92
      %p103 = scmp.eq.s32.totalorder %s19, 0
      %p104 = por %p102, %p103
      %p105 = scmp.ne.s32.totalorder %s91, %s92
      %p106 = scmp.eq.s32.totalorder %s20, 1
      %p107 = por %p105, %p106
      %p109 = scmp.ne.s32.totalorder %s92, %s108
      %p110 = scmp.eq.s32.totalorder %s20, 0
      %p111 = por %p109, %p110
      %s112 = ssub.s32 %s22, %s29
      %p113 = scmp.eq.s32.totalorder %s112, 0
      %s115 = sadd.s32 %s114, 1
      %s116 = scalar_select %p113, %s114, %s115
      %p119 = pneg %p113
      %p120 = scmp.eq.s32.totalorder %s14, 1
      %p121 = por %p119, %p120
      %p122 = scmp.ne.s32.totalorder %s114, %s117
      %p123 = scmp.eq.s32.totalorder %s14, 0
      %p124 = por %p122, %p123
      %p125 = scmp.ne.s32.totalorder %s114, %s117
      %p126 = scmp.eq.s32.totalorder %s19, 1
      %p127 = por %p125, %p126
      %p128 = scmp.ne.s32.totalorder %s117, %s118
      %p129 = scmp.eq.s32.totalorder %s19, 0
      %p130 = por %p128, %p129
      %p131 = scmp.ne.s32.totalorder %s117, %s118
      %p132 = scmp.eq.s32.totalorder %s20, 1
      %p133 = por %p131, %p132
      %p135 = scmp.ne.s32.totalorder %s118, %s134
      %p136 = scmp.eq.s32.totalorder %s20, 0
      %p137 = por %p135, %p136
      %s139 = sadd.s32 %s138, 1
      %p142 = scmp.eq.s32.totalorder %s14, 1
      %p143 = scmp.ne.s32.totalorder %s138, %s140
      %p144 = scmp.eq.s32.totalorder %s14, 0
      %p145 = por %p143, %p144
      %p146 = scmp.ne.s32.totalorder %s138, %s140
      %p147 = scmp.eq.s32.totalorder %s19, 1
      %p148 = por %p146, %p147
      %p149 = scmp.ne.s32.totalorder %s140, %s141
      %p150 = scmp.eq.s32.totalorder %s19, 0
      %p151 = por %p149, %p150
      %p152 = scmp.ne.s32.totalorder %s140, %s141
      %p153 = scmp.eq.s32.totalorder %s20, 1
      %p154 = por %p152, %p153
      %p156 = scmp.ne.s32.totalorder %s141, %s155
      %p157 = scmp.eq.s32.totalorder %s20, 0
      %p158 = por %p156, %p157
      %s160 = sadd.s32 %s159, 1
      %p163 = scmp.eq.s32.totalorder %s14, 1
      %p164 = scmp.ne.s32.totalorder %s159, %s161
      %p165 = scmp.eq.s32.totalorder %s14, 0
      %p166 = por %p164, %p165
      %p167 = scmp.ne.s32.totalorder %s159, %s161
      %p168 = scmp.eq.s32.totalorder %s19, 1
      %p169 = por %p167, %p168
      %p170 = scmp.ne.s32.totalorder %s161, %s162
      %p171 = scmp.eq.s32.totalorder %s19, 0
      %p172 = por %p170, %p171
      %p173 = scmp.ne.s32.totalorder %s161, %s162
      %p174 = scmp.eq.s32.totalorder %s20, 1
      %p175 = por %p173, %p174
      %p177 = scmp.ne.s32.totalorder %s162, %s176
      %p178 = scmp.eq.s32.totalorder %s20, 0
      %p179 = por %p177, %p178
      %s181 = sadd.s32 %s180, 1
      %p184 = scmp.eq.s32.totalorder %s14, 1
      %p185 = scmp.ne.s32.totalorder %s180, %s182
      %p186 = scmp.eq.s32.totalorder %s14, 0
      %p187 = por %p185, %p186
      %p188 = scmp.ne.s32.totalorder %s180, %s182
      %p189 = scmp.eq.s32.totalorder %s19, 1
      %p190 = por %p188, %p189
      %p191 = scmp.ne.s32.totalorder %s182, %s183
      %p192 = scmp.eq.s32.totalorder %s19, 0
      %p193 = por %p191, %p192
      %p194 = scmp.ne.s32.totalorder %s182, %s183
      %p195 = scmp.eq.s32.totalorder %s20, 1
      %p196 = por %p194, %p195
      %p198 = scmp.ne.s32.totalorder %s183, %s197
      %p199 = scmp.eq.s32.totalorder %s20, 0
      %p200 = por %p198, %p199
      %s201 = ssub.s32 %s21, %s33
      %p202 = scmp.eq.s32.totalorder %s201, 0
      %s204 = sadd.s32 %s203, 1
      %s205 = scalar_select %p202, %s203, %s204
      %p208 = pneg %p202
      %p209 = scmp.eq.s32.totalorder %s14, 1
      %p210 = por %p208, %p209
      %p211 = scmp.ne.s32.totalorder %s203, %s206
      %p212 = scmp.eq.s32.totalorder %s14, 0
      %p213 = por %p211, %p212
      %p214 = scmp.ne.s32.totalorder %s203, %s206
      %p215 = scmp.eq.s32.totalorder %s19, 1
      %p216 = por %p214, %p215
      %p217 = scmp.ne.s32.totalorder %s206, %s207
      %p218 = scmp.eq.s32.totalorder %s19, 0
      %p219 = por %p217, %p218
      %p220 = scmp.ne.s32.totalorder %s206, %s207
      %p221 = scmp.eq.s32.totalorder %s20, 1
      %p222 = por %p220, %p221
      %p224 = scmp.ne.s32.totalorder %s207, %s223
      %p225 = scmp.eq.s32.totalorder %s20, 0
      %p226 = por %p224, %p225
      %p227 = scmp.le.s32.totalorder 1, %s14
      %p228 = scmp.lt.s32.totalorder %s14, 3
      %p229 = pnand %p227, %p228
      %p230 = pneg %p229
      // Predicated region
      $region9: #{flash_cross_attn_layer.9} parent=5 // pred_check
        _
      $region10: #{flash_cross_attn_layer.9} parent=5 // pred_check_branch
        %232 = sbr.rel (%p229) target = $region12
      $region11: #{flash_cross_attn_layer.9} parent=5 // pred_region
        %s233 = ssub.s32 %s14, 1
        // Predicated region
        $region13: #{flash_cross_attn_layer.9} parent=11 // pred_check
          %p234 = pneg %p52
        $region14: #{flash_cross_attn_layer.9} parent=11 // pred_check_branch
          %236 = sbr.rel (%p234) target = $region16
        $region15: #{flash_cross_attn_layer.9} parent=11 // pred_region
          %s237 = smul.u32 2, %s23
          %p238 = scmp.lt.s32.totalorder %s237, 1
          %s239 = scalar_select %p238, %s237, 1
          %s240 = smul.addr %s239, 8
          %s241 = scalar_lea.vmem %s0, %s240
          %s242 = smul.u32 2, %s23
        $region16: #{flash_cross_attn_layer.9} parent=11 // pred_fallthru
          _
        // Predicated region
        $region17: #{flash_cross_attn_layer.9} parent=11 // pred_check
          %p243 = pneg %p151
        $region18: #{flash_cross_attn_layer.9} parent=11 // pred_check_branch
          %245 = sbr.rel (%p243) target = $region20
        $region19: #{flash_cross_attn_layer.9} parent=11 // pred_region
          _
        $region20: #{flash_cross_attn_layer.9} parent=11 // pred_fallthru
          _
        // Predicated region
        $region21: #{flash_cross_attn_layer.9} parent=11 // pred_check
          %p246 = pneg %p172
        $region22: #{flash_cross_attn_layer.9} parent=11 // pred_check_branch
          %248 = sbr.rel (%p246) target = $region24
        $region23: #{flash_cross_attn_layer.9} parent=11 // pred_region
          _
        $region24: #{flash_cross_attn_layer.9} parent=11 // pred_fallthru
          _
        // Predicated region
        $region25: #{flash_cross_attn_layer.9} parent=11 // pred_check
          %p249 = pneg %p193
        $region26: #{flash_cross_attn_layer.9} parent=11 // pred_check_branch
          %251 = sbr.rel (%p249) target = $region28
        $region27: #{flash_cross_attn_layer.9} parent=11 // pred_region
          _
        $region28: #{flash_cross_attn_layer.9} parent=11 // pred_fallthru
          _
      $region12: #{flash_cross_attn_layer.9} parent=5 // pred_fallthru
        _
      %p252 = scmp.lt.s32.totalorder %s14, 2
      // Predicated region
      $region29: #{flash_cross_attn_layer.9} parent=5 // pred_check
        %p253 = pneg %p252
      $region30: #{flash_cross_attn_layer.9} parent=5 // pred_check_branch
        %255 = sbr.rel (%p253) target = $region32
      $region31: #{flash_cross_attn_layer.9} parent=5 // pred_region
        // Predicated region
        $region33: #{flash_cross_attn_layer.9} parent=31 // pred_check
          %p256 = pneg %p72
        $region34: #{flash_cross_attn_layer.9} parent=31 // pred_check_branch
          %258 = sbr.rel (%p256) target = $region36
        $region35: #{flash_cross_attn_layer.9} parent=31 // pred_region
          %s259 = sand.u32 %s62, 1
          %s260 = sand.u32 %s62, 1
          %s261 = smul.addr %s260, 16
          %s262 = scalar_lea.vmem [#allocation4], %s261
          %s263 = smul.addr %s22, 4
          %s264 = scalar_lea.vmem %s1, %s263
          // Predicated region
          $region37: #{flash_cross_attn_layer.9} parent=35 // pred_check
            _
          $region38: #{flash_cross_attn_layer.9} parent=35 // pred_check_branch
            %266 = sbr.rel (0) target = $region40
          $region39: #{flash_cross_attn_layer.9} parent=35 // pred_region
            // Predicated region
            $region41: #{flash_cross_attn_layer.9} parent=39 // pred_check
              _
            $region42: #{flash_cross_attn_layer.9} parent=39 // pred_check_branch
              %268 = sbr.rel target = $region44
            $region43: #{flash_cross_attn_layer.9} parent=39 // pred_region
              // Predicated region
              $region56: #{flash_cross_attn_layer.9} parent=43 // pred_check
                _
              $region57: #{flash_cross_attn_layer.9} parent=43 // pred_check_branch
                %290 = sbr.rel (0) target = $region59
              $region58: #{flash_cross_attn_layer.9} parent=43 // pred_region
                loop: start=0, step=1, limit=1
                $region60: #{flash_cross_attn_layer.9} parent=58 // loop_pre_header
                  _
                $region61: #{flash_cross_attn_layer.9} parent=58 // loop_header
                  %s292 = sphi 0, %s296
                  %p293 = scmp.ge.s32.totalorder %s292, 1
                  %s297 = sphi %s264, %s264
                  %s298 = sphi %s262, %s262
                $region62: #{flash_cross_attn_layer.9} parent=58 // loop_header_branch
                  %295 = sbr.rel (%p293) target = $region66
                $region63: #{flash_cross_attn_layer.9} parent=58 // loop_body
                  _
                $region64: #{flash_cross_attn_layer.9} parent=58 // loop_footer
                  %s296 = sadd.s32 1, %s292
                $region65: #{flash_cross_attn_layer.9} parent=58 // loop_footer_branch
                  %291 = sbr.rel target = $region61
                $region66: #{flash_cross_attn_layer.9} parent=58 // loop_exit
                  _
                %s300 = ssub.s32 16, 1
                loop: start=0, step=1, limit=1
                $region67: #{flash_cross_attn_layer.9} parent=58 // loop_pre_header
                  _
                $region68: #{flash_cross_attn_layer.9} parent=58 // loop_header
                  %s302 = sphi 0, %s306
                  %p303 = scmp.ge.s32.totalorder %s302, 1
                  %s307 = sphi %s264, %s264
                  %s308 = sphi %s262, %s262
                $region69: #{flash_cross_attn_layer.9} parent=58 // loop_header_branch
                  %305 = sbr.rel (%p303) target = $region73
                $region70: #{flash_cross_attn_layer.9} parent=58 // loop_body
                  %v309 = vld [vmem:[%s307] sm:%s300]
                  %310 = vst [vmem:[%s308] sm:%s300] %v309
                  %v311 = vld [vmem:[%s307 + $0x8] sm:%s300]
                  %312 = vst [vmem:[%s308 + $0x4] sm:%s300] %v311
                  %v313 = vld [vmem:[%s307 + $0x10] sm:%s300]
                  %314 = vst [vmem:[%s308 + $0x8] sm:%s300] %v313
                  %v315 = vld [vmem:[%s307 + $0x18] sm:%s300]
                  %316 = vst [vmem:[%s308 + $0xc] sm:%s300] %v315
                $region71: #{flash_cross_attn_layer.9} parent=58 // loop_footer
                  %s306 = sadd.s32 1, %s302
                $region72: #{flash_cross_attn_layer.9} parent=58 // loop_footer_branch
                  %301 = sbr.rel target = $region68
                $region73: #{flash_cross_attn_layer.9} parent=58 // loop_exit
                  _
              $region59: #{flash_cross_attn_layer.9} parent=43 // pred_fallthru
                _
            $region44: #{flash_cross_attn_layer.9} parent=39 // pred_fallthru
              _
            // Predicated region
            $region45: #{flash_cross_attn_layer.9} parent=39 // pred_check
              _
            $region46: #{flash_cross_attn_layer.9} parent=39 // pred_check_branch
              %270 = sbr.rel (0) target = $region48
            $region47: #{flash_cross_attn_layer.9} parent=39 // pred_region
              %s272 = ssub.s32 16, 1
              loop: start=0, step=1, limit=1
              $region49: #{flash_cross_attn_layer.9} parent=47 // loop_pre_header
                _
              $region50: #{flash_cross_attn_layer.9} parent=47 // loop_header
                %s274 = sphi 0, %s278
                %p275 = scmp.ge.s32.totalorder %s274, 1
                %s279 = sphi %s264, %s264
                %s280 = sphi %s262, %s262
              $region51: #{flash_cross_attn_layer.9} parent=47 // loop_header_branch
                %277 = sbr.rel (%p275) target = $region55
              $region52: #{flash_cross_attn_layer.9} parent=47 // loop_body
                %v281 = vld [vmem:[%s279] sm:%s272]
                %282 = vst [vmem:[%s280] sm:%s272] %v281
                %v283 = vld [vmem:[%s279 + $0x8] sm:%s272]
                %284 = vst [vmem:[%s280 + $0x4] sm:%s272] %v283
                %v285 = vld [vmem:[%s279 + $0x10] sm:%s272]
                %286 = vst [vmem:[%s280 + $0x8] sm:%s272] %v285
                %v287 = vld [vmem:[%s279 + $0x18] sm:%s272]
                %288 = vst [vmem:[%s280 + $0xc] sm:%s272] %v287
              $region53: #{flash_cross_attn_layer.9} parent=47 // loop_footer
                %s278 = sadd.s32 1, %s274
              $region54: #{flash_cross_attn_layer.9} parent=47 // loop_footer_branch
                %273 = sbr.rel target = $region50
              $region55: #{flash_cross_attn_layer.9} parent=47 // loop_exit
                _
            $region48: #{flash_cross_attn_layer.9} parent=39 // pred_fallthru
              _
          $region40: #{flash_cross_attn_layer.9} parent=35 // pred_fallthru
            _
          %317 = vnop
        $region36: #{flash_cross_attn_layer.9} parent=31 // pred_fallthru
          _
        // Predicated region
        $region74: #{flash_cross_attn_layer.9} parent=31 // pred_check
          %p318 = pneg %p98
        $region75: #{flash_cross_attn_layer.9} parent=31 // pred_check_branch
          %320 = sbr.rel (%p318) target = $region77
        $region76: #{flash_cross_attn_layer.9} parent=31 // pred_region
          %p321 = scmp.lt.s32.totalorder %s22, 1
          %s322 = scalar_select %p321, %s22, 1
          %s323 = scalar_lea.vmem %s2, %s322
        $region77: #{flash_cross_attn_layer.9} parent=31 // pred_fallthru
          _
        // Predicated region
        $region78: #{flash_cross_attn_layer.9} parent=31 // pred_check
          %p324 = pneg %p124
        $region79: #{flash_cross_attn_layer.9} parent=31 // pred_check_branch
          %326 = sbr.rel (%p324) target = $region81
        $region80: #{flash_cross_attn_layer.9} parent=31 // pred_region
          %s327 = smul.u32 16, %s22
          %p328 = scmp.lt.s32.totalorder %s327, 31
          %s329 = scalar_select %p328, %s327, 31
          %s330 = smul.addr %s329, 4
          %s331 = scalar_lea.vmem %s3, %s330
          %s332 = smul.u32 16, %s22
        $region81: #{flash_cross_attn_layer.9} parent=31 // pred_fallthru
          _
      $region32: #{flash_cross_attn_layer.9} parent=5 // pred_fallthru
        _
      %p333 = scmp.le.s32.totalorder 1, %s14
      %p334 = scmp.lt.s32.totalorder %s14, 3
      %p335 = pnand %p333, %p334
      %p336 = pneg %p335
      // Predicated region
      $region82: #{flash_cross_attn_layer.9} parent=5 // pred_check
        _
      $region83: #{flash_cross_attn_layer.9} parent=5 // pred_check_branch
        %338 = sbr.rel (%p335) target = $region85
      $region84: #{flash_cross_attn_layer.9} parent=5 // pred_region
        %s339 = ssub.s32 %s14, 1
        %s340 = sand.u32 %s65, 1
        %s341 = sand.u32 %s65, 1
        %s342 = smul.addr %s341, 16
        %s343 = scalar_lea.vmem [#allocation4], %s342
        // Predicated region
        $region86: #{flash_cross_attn_layer.9} parent=84 // pred_check
          %p344 = pneg %p78
        $region87: #{flash_cross_attn_layer.9} parent=84 // pred_check_branch
          %346 = sbr.rel (%p344) target = $region89
        $region88: #{flash_cross_attn_layer.9} parent=84 // pred_region
          _
        $region89: #{flash_cross_attn_layer.9} parent=84 // pred_fallthru
          _
        %s347 = smul.u32 2, %s23
        %p348 = scmp.lt.s32.totalorder %s347, 1
        %s349 = scalar_select %p348, %s347, 1
        %s350 = smul.addr %s349, 8
        %s351 = scalar_lea.vmem %s0, %s350
        %p352 = pneg %p52
        %p353 = pneg %p49
        %s354 = sand.u32 %s65, 1
        %s355 = sand.u32 %s65, 1
        %s356 = smul.addr %s355, 16
        %s357 = scalar_lea.vmem [#allocation4], %s356
        %p358 = pneg %p78
        %p359 = pneg %p75
        %p360 = scmp.lt.s32.totalorder %s24, 1
        %s361 = scalar_select %p360, %s24, 1
        %s362 = scalar_lea.vmem %s2, %s361
        %p363 = pneg %p104
        %p364 = pneg %p101
        %s365 = smul.u32 16, %s24
        %p366 = scmp.lt.s32.totalorder %s365, 31
        %s367 = scalar_select %p366, %s365, 31
        %s368 = smul.addr %s367, 4
        %s369 = scalar_lea.vmem %s3, %s368
        %p370 = pneg %p130
        %p371 = pneg %p127
        %p372 = pneg %p151
        %p373 = pneg %p148
        %p374 = pneg %p172
        %p375 = pneg %p169
        %p376 = pneg %p193
        %p377 = pneg %p190
        %p378 = pneg %p219
        %p379 = pneg %p216
        %s380 = smul.u32 2, %s23
        %p381 = scmp.lt.s32.totalorder %s380, 1
        %s382 = scalar_select %p381, %s380, 1
        %s383 = smul.addr %s382, 8
        %s384 = scalar_lea.vmem %s0, %s383
        %s385 = smul.u32 2, %s23
        %p386 = scmp.lt.s32.totalorder %s24, 1
        %s387 = scalar_select %p386, %s24, 1
        %s388 = scalar_lea.vmem %s2, %s387
        %s389 = smul.u32 16, %s24
        %p390 = scmp.lt.s32.totalorder %s389, 31
        %s391 = scalar_select %p390, %s389, 31
        %s392 = smul.addr %s391, 4
        %s393 = scalar_lea.vmem %s3, %s392
        %s394 = smul.u32 16, %s24
        %s395 = smul.u32 2, %s23
        %p397 = scmp.eq.s32.totalorder %s24, 0
        // Predicated region
        $region90: #{flash_cross_attn_layer.9} parent=84 // pred_check
          %p398 = pneg %p397
        $region91: #{flash_cross_attn_layer.9} parent=84 // pred_check_branch
          %400 = sbr.rel (%p398) target = $region93
        $region92: #{flash_cross_attn_layer.9} parent=84 // pred_region
          %vm401 = vcmask 261120
          %402 = vst.msk [vmem:[#allocation2] sm:$0xff] %vm401, 0.0
          %403 = vst.msk [vmem:[#allocation2 + $0x8] sm:$0xff] %vm401, 0.0
          %v404 = vld [vmem:[%s384] sm:$0xff]
          %v405 = vld [vmem:[%s384 + $0x8] sm:$0xff]
          %v406 = vpack.c.bf16 %v404, %v404
          %v407 = vpack.c.bf16 %v405, %v405
          %vm408 = vcmask 257024
          %409 = vst.msk [vmem:[#allocation3] sm:$0xf] %vm408, %v406
          %410 = vst.msk [vmem:[#allocation3 + $0x4] sm:$0xf] %vm408, %v407
        $region93: #{flash_cross_attn_layer.9} parent=84 // pred_fallthru
          _
        %v411 = vld [vmem:[#allocation3] sm:$0xf]
        %v412 = vld [vmem:[#allocation3 + $0x4] sm:$0xf]
        %v413 = vld [vmem:[%s343] sm:$0xf]
        %v414 = vld [vmem:[%s343 + $0x4] sm:$0xf]
        %v415 = vld [vmem:[%s343 + $0x8] sm:$0xf]
        %v416 = vld [vmem:[%s343 + $0xc] sm:$0xf]
        %v417 = vld [vmem:[%s388] sm:$0x1]
        %v419 = vperm.slane %v417, 0
        %v423 = vunpack.c.l.b16 %v411
        %v424 = vunpack.c.l.b16 %v412
        %v425 = vpack.c.b16 %v424, %v423
        %v430 = vunpack.c.l.b16 %v413
        %v431 = vunpack.c.l.b16 %v414
        %v432 = vunpack.c.l.b16 %v415
        %v433 = vunpack.c.l.b16 %v416
        %v434 = vpack.c.b16 %v431, %v430
        %v435 = vpack.c.b16 %v433, %v432
        %vm438 = vcmask 261120
        %v440 = vsel %vm438, %v425, 0
        %442 = vmatpush.bf16.msra.mxu0 0
        %443 = vmatpush.bf16.msra.mxu0 0
        %444 = vmatpush.bf16.msra.mxu0 0
        %445 = vmatpush.bf16.msra.mxu0 0
        %446 = vmatpush.bf16.msra.mxu0 0
        %447 = vmatpush.bf16.msra.mxu0 0
        %448 = vmatpush.bf16.msra.mxu0 %v435
        %449 = vmatpush.bf16.msra.mxu0 %v434
        %450 = vmatmul.bf16.gmra.mxu0 %v440
        %v451 = vpop.f32.mrf.mxu0
        %v452 = vadd.f32 %v419, %v451
        %v453 = vpop.f32.mrf.mxu0
        %v454 = vadd.f32 %v419, %v453
        %455 = vdwg.mxu0
        %v456 = vmul.f32 %v452, 0.5
        %v457 = vmul.f32 %v454, 0.5
        %v458 = vmul.f32 %v452, 0.70710677
        %v459 = vmul.f32 %v454, 0.70710677
        %v460 = vmul.f32 %v458, %v458
        %v461 = vmin.f32 16.0, %v460
        %v462 = vmul.f32 %v461, 2.1237322e-06
        %v463 = vadd.f32 %v462, 0.00028619796
        %v464 = vmul.f32 %v461, %v463
        %v465 = vadd.f32 %v464, 0.0036580483
        %v466 = vmul.f32 %v461, %v465
        %v467 = vadd.f32 %v466, 0.05243302
        %v468 = vmul.f32 %v461, %v467
        %v469 = vadd.f32 %v468, 0.18741608
        %v470 = vmul.f32 %v461, %v469
        %v471 = vadd.f32 %v470, 1.1283791
        %v472 = vmul.f32 %v458, %v471
        %v473 = vmul.f32 %v461, 3.8918573e-05
        %v474 = vadd.f32 %v473, 0.001143296
        %v475 = vmul.f32 %v461, %v474
        %v476 = vadd.f32 %v475, 0.014752088
        %v477 = vmul.f32 %v461, %v476
        %v478 = vadd.f32 %v477, 0.112945676
        %v479 = vmul.f32 %v461, %v478
        %v480 = vadd.f32 %v479, 0.4994258
        %v481 = vmul.f32 %v461, %v480
        %v482 = vadd.f32 %v481, 1.0
        %v483 = vrcp.pop %v482
        %v484 = vmul.f32 %v482, %v483
        %v485 = vsub.f32 1.0, %v484
        %v486 = vmul.f32 %v483, %v485
        %v487 = vadd.f32 %v483, %v486
        %vm488 = vweird.f32 %v482
        %vm489 = vweird.f32 %v483
        %vm490 = vmor %vm488, %vm489
        %v491 = vsel %vm490, %v483, %v487
        %v492 = vand.u32 2147483647, %v482
        %vm493 = vcmp.eq.f32.partialorder %v492, 8.507059e+37
        %v494 = vand.u32 %v482, 2147483648
        %v495 = vor.u32 1.1754944e-38, %v494
        %v496 = vsel %vm493, %v495, %v491
        %v497 = vmul.f32 %v472, %v496
        %v498 = vmin.f32 %v497, 1.0
        %v499 = vmax.f32 %v498, -1.0
        %v500 = vmul.f32 %v459, %v459
        %v501 = vmin.f32 16.0, %v500
        %v502 = vmul.f32 %v501, 2.1237322e-06
        %v503 = vadd.f32 %v502, 0.00028619796
        %v504 = vmul.f32 %v501, %v503
        %v505 = vadd.f32 %v504, 0.0036580483
        %v506 = vmul.f32 %v501, %v505
        %v507 = vadd.f32 %v506, 0.05243302
        %v508 = vmul.f32 %v501, %v507
        %v509 = vadd.f32 %v508, 0.18741608
        %v510 = vmul.f32 %v501, %v509
        %v511 = vadd.f32 %v510, 1.1283791
        %v512 = vmul.f32 %v459, %v511
        %v513 = vmul.f32 %v501, 3.8918573e-05
        %v514 = vadd.f32 %v513, 0.001143296
        %v515 = vmul.f32 %v501, %v514
        %v516 = vadd.f32 %v515, 0.014752088
        %v517 = vmul.f32 %v501, %v516
        %v518 = vadd.f32 %v517, 0.112945676
        %v519 = vmul.f32 %v501, %v518
        %v520 = vadd.f32 %v519, 0.4994258
        %v521 = vmul.f32 %v501, %v520
        %v522 = vadd.f32 %v521, 1.0
        %v523 = vrcp.pop %v522
        %v524 = vmul.f32 %v522, %v523
        %v525 = vsub.f32 1.0, %v524
        %v526 = vmul.f32 %v523, %v525
        %v527 = vadd.f32 %v523, %v526
        %vm528 = vweird.f32 %v522
        %vm529 = vweird.f32 %v523
        %vm530 = vmor %vm528, %vm529
        %v531 = vsel %vm530, %v523, %v527
        %v532 = vand.u32 2147483647, %v522
        %vm533 = vcmp.eq.f32.partialorder %v532, 8.507059e+37
        %v534 = vand.u32 %v522, 2147483648
        %v535 = vor.u32 1.1754944e-38, %v534
        %v536 = vsel %vm533, %v535, %v531
        %v537 = vmul.f32 %v512, %v536
        %v538 = vmin.f32 %v537, 1.0
        %v539 = vmax.f32 %v538, -1.0
        %v540 = vadd.f32 %v499, 1.0
        %v541 = vadd.f32 %v539, 1.0
        %v542 = vmul.f32 %v456, %v540
        %v543 = vmul.f32 %v457, %v541
        %v544 = vld [vmem:[#allocation2] sm:$0xff]
        %v545 = vld [vmem:[#allocation2 + $0x8] sm:$0xff]
        %v546 = vpack.c.bf16 %v543, %v542
        %v547 = vld [vmem:[%s393] sm:$0xf]
        %v548 = vld [vmem:[%s393 + $0x4] sm:$0xf]
        %v549 = vld [vmem:[%s393 + $0x8] sm:$0xf]
        %v550 = vld [vmem:[%s393 + $0xc] sm:$0xf]
        %v551 = vld [vmem:[%s393 + $0x10] sm:$0xf]
        %v552 = vld [vmem:[%s393 + $0x14] sm:$0xf]
        %v553 = vld [vmem:[%s393 + $0x18] sm:$0xf]
        %v554 = vld [vmem:[%s393 + $0x1c] sm:$0xf]
        %v555 = vld [vmem:[%s393 + $0x20] sm:$0xf]
        %v556 = vld [vmem:[%s393 + $0x24] sm:$0xf]
        %v557 = vld [vmem:[%s393 + $0x28] sm:$0xf]
        %v558 = vld [vmem:[%s393 + $0x2c] sm:$0xf]
        %v559 = vld [vmem:[%s393 + $0x30] sm:$0xf]
        %v560 = vld [vmem:[%s393 + $0x34] sm:$0xf]
        %v561 = vld [vmem:[%s393 + $0x38] sm:$0xf]
        %v562 = vld [vmem:[%s393 + $0x3c] sm:$0xf]
        %v579 = vunpack.c.l.b16 %v547
        %v580 = vunpack.c.l.b16 %v548
        %v581 = vunpack.c.l.b16 %v549
        %v582 = vunpack.c.l.b16 %v550
        %v583 = vunpack.c.l.b16 %v551
        %v584 = vunpack.c.l.b16 %v552
        %v585 = vunpack.c.l.b16 %v553
        %v586 = vunpack.c.l.b16 %v554
        %v587 = vunpack.c.l.b16 %v555
        %v588 = vunpack.c.l.b16 %v556
        %v589 = vunpack.c.l.b16 %v557
        %v590 = vunpack.c.l.b16 %v558
        %v591 = vunpack.c.l.b16 %v559
        %v592 = vunpack.c.l.b16 %v560
        %v593 = vunpack.c.l.b16 %v561
        %v594 = vunpack.c.l.b16 %v562
        %v595 = vpack.c.b16 %v580, %v579
        %v596 = vpack.c.b16 %v582, %v581
        %v597 = vpack.c.b16 %v584, %v583
        %v598 = vpack.c.b16 %v586, %v585
        %v599 = vpack.c.b16 %v588, %v587
        %v600 = vpack.c.b16 %v590, %v589
        %v601 = vpack.c.b16 %v592, %v591
        %v602 = vpack.c.b16 %v594, %v593
        %611 = vmatpush.bf16.msra.mxu0 %v602
        %612 = vmatpush.bf16.msra.mxu0 %v601
        %613 = vmatpush.bf16.msra.mxu0 %v600
        %614 = vmatpush.bf16.msra.mxu0 %v599
        %615 = vmatpush.bf16.msra.mxu0 %v598
        %616 = vmatpush.bf16.msra.mxu0 %v597
        %617 = vmatpush.bf16.msra.mxu0 %v596
        %618 = vmatpush.bf16.msra.mxu0 %v595
        %619 = vmatmul.bf16.gmra.mxu0 %v546
        %v620 = vpop.f32.mrf.mxu0
        %v621 = vadd.f32 0.0, %v620
        %v622 = vpop.f32.mrf.mxu0
        %v623 = vadd.f32 0.0, %v622
        %624 = vdwg.mxu0
        %v625 = vadd.f32 %v544, %v621
        %v626 = vadd.f32 %v545, %v623
        %627 = vst.msk [vmem:[#allocation2] sm:$0xff] %vm438, %v625
        %628 = vst.msk [vmem:[#allocation2 + $0x8] sm:$0xff] %vm438, %v626
        %p629 = scmp.eq.s32.totalorder %s24, 1
        // Predicated region
        $region94: #{flash_cross_attn_layer.9} parent=84 // pred_check
          %p630 = pneg %p629
        $region95: #{flash_cross_attn_layer.9} parent=84 // pred_check_branch
          %632 = sbr.rel (%p630) target = $region97
        $region96: #{flash_cross_attn_layer.9} parent=84 // pred_region
          %v633 = vld [vmem:[%s384] sm:$0xff]
          %v634 = vld [vmem:[%s384 + $0x8] sm:$0xff]
          %v635 = vld [vmem:[#allocation2] sm:$0xff]
          %v636 = vld [vmem:[#allocation2 + $0x8] sm:$0xff]
          %v637 = vadd.f32 %v633, %v635
          %v638 = vadd.f32 %v634, %v636
          %v639 = vld [vmem:[%s4] sm:$0x1]
          %v641 = vperm.slane %v639, 0
          %v643 = vadd.f32 %v637, %v641
          %v644 = vadd.f32 %v638, %v641
          %v645 = vsel %vm438, %v643, 0.0
          %646 = vadd.xlane.f32.xlu0 %v645
          %v647 = vpop.xlane.xlu0 %646
          %v648 = vsel %vm438, %v644, 0.0
          %649 = vadd.xlane.f32.xlu0 %v648
          %v650 = vpop.xlane.xlu0 %649
          %v651 = vmul.f32 %v647, 0.03125
          %v652 = vmul.f32 %v650, 0.03125
          %v653 = vsub.f32 %v643, %v651
          %v654 = vsub.f32 %v644, %v652
          %v655 = vmul.f32 %v653, %v653
          %v656 = vmul.f32 %v654, %v654
          %v657 = vsel %vm438, %v655, 0.0
          %658 = vadd.xlane.f32.xlu0 %v657
          %v659 = vpop.xlane.xlu0 %658
          %v660 = vsel %vm438, %v656, 0.0
          %661 = vadd.xlane.f32.xlu0 %v660
          %v662 = vpop.xlane.xlu0 %661
          %v663 = vmul.f32 %v659, 0.03125
          %v664 = vmul.f32 %v662, 0.03125
          %v665 = vadd.f32 %v663, 1e-05
          %v666 = vadd.f32 %v664, 1e-05
          %v667 = vrsqrt.pop %v665
          %v668 = vmul.f32 %v667, %v665
          %v669 = vmul.f32 %v668, %v667
          %v670 = vmul.f32 0.5, %v669
          %v671 = vsub.f32 1.5, %v670
          %v672 = vmul.f32 %v667, %v671
          %vm673 = vweird.f32 %v665
          %vm674 = vweird.f32 %v667
          %vm675 = vmor %vm673, %vm674
          %v676 = vsel %vm675, %v667, %v672
          %v677 = vrsqrt.pop %v666
          %v678 = vmul.f32 %v677, %v666
          %v679 = vmul.f32 %v678, %v677
          %v680 = vmul.f32 0.5, %v679
          %v681 = vsub.f32 1.5, %v680
          %v682 = vmul.f32 %v677, %v681
          %vm683 = vweird.f32 %v666
          %vm684 = vweird.f32 %v677
          %vm685 = vmor %vm683, %vm684
          %v686 = vsel %vm685, %v677, %v682
          %v687 = vmul.f32 %v653, %v676
          %v688 = vmul.f32 %v654, %v686
          %v689 = vld [vmem:[%s5] sm:$0x1]
          %v691 = vperm.slane %v689, 0
          %v693 = vmul.f32 %v687, %v691
          %v694 = vmul.f32 %v688, %v691
          %v695 = vld [vmem:[%s6] sm:$0x1]
          %v697 = vperm.slane %v695, 0
          %v699 = vadd.f32 %v693, %v697
          %v700 = vadd.f32 %v694, %v697
          %701 = vst.msk [vmem:[#allocation5] sm:$0xff] %vm438, %v699
          %702 = vst.msk [vmem:[#allocation5 + $0x8] sm:$0xff] %vm438, %v700
        $region97: #{flash_cross_attn_layer.9} parent=84 // pred_fallthru
          _
        // Predicated region
        $region98: #{flash_cross_attn_layer.9} parent=84 // pred_check
          %p703 = pneg %p216
        $region99: #{flash_cross_attn_layer.9} parent=84 // pred_check_branch
          %705 = sbr.rel (%p703) target = $region101
        $region100: #{flash_cross_attn_layer.9} parent=84 // pred_region
          %s706 = smul.u32 2, %s23
          %708 = vsyncadd [#allocation6], 0
          %s709 = smul.addr %s706, 8
          %s710 = scalar_lea.hbm %s7, %s709
          %s711 = sshll.u32 [#allocation5], 4
          %s712 = int_to_ptr.vmem [resolvable:$true] %s711
          %s713 = sshll.u32 %s710, 4
          %s714 = int_to_ptr.hbm [resolvable:$true] %s713
          %719 = dma.vmem_to_hbm [thread:$0]  %s712, 256, %s714, [#allocation6], 128, 128, 8
        $region101: #{flash_cross_attn_layer.9} parent=84 // pred_fallthru
          _
        // Predicated region
        $region102: #{flash_cross_attn_layer.9} parent=84 // pred_check
          %p720 = pneg %p216
        $region103: #{flash_cross_attn_layer.9} parent=84 // pred_check_branch
          %722 = sbr.rel (%p720) target = $region105
        $region104: #{flash_cross_attn_layer.9} parent=84 // pred_region
          %724 = dma.done [#allocation6], 256
        $region105: #{flash_cross_attn_layer.9} parent=84 // pred_fallthru
          _
      $region85: #{flash_cross_attn_layer.9} parent=5 // pred_fallthru
        _
      %p725 = scmp.le.s32.totalorder 2, %s14
      // Predicated region
      $region106: #{flash_cross_attn_layer.9} parent=5 // pred_check
        %p726 = pneg %p725
      $region107: #{flash_cross_attn_layer.9} parent=5 // pred_check_branch
        %728 = sbr.rel (%p726) target = $region109
      $region108: #{flash_cross_attn_layer.9} parent=5 // pred_region
        %s729 = ssub.s32 %s14, 2
      $region109: #{flash_cross_attn_layer.9} parent=5 // pred_fallthru
        _
    $region6: #{flash_cross_attn_layer.9} parent=1 // loop_footer
      %s18 = sadd.s32 1, %s14
    $region7: #{flash_cross_attn_layer.9} parent=1 // loop_footer_branch
      %13 = sbr.rel target = $region3
    $region8: #{flash_cross_attn_layer.9} parent=1 // loop_exit
      _
    %730 = vsyncpa [#allocation6], 1
    %s731 = scalar_lea.sflag [#allocation6], 1
    %732 = vsyncpa %s731, 1

</llo_original>
